<compile_context>
chip_gen: v5e
topology: v5e:2x2
jax: 0.10.0
libtpu: 0.0.40
codegen_flags: <defaults>
</compile_context>

<pallas_src>
import functools

import jax
import jax.numpy as jnp
from jax.experimental import pallas as pl
from jax.experimental.pallas import tpu as pltpu

# ----------------------------------------------------------------------------
# configuration (small synthetic shapes)
# ----------------------------------------------------------------------------
N_BATCH = 2
IMG_RES = 16          # appearance image resolution
PLANE_RES = 16        # triplane spatial resolution
C_FEAT = 32           # feature / triplane channels
MOT_DIMS = 32
W_DIM = 32
NRR = 8               # neural_rendering_resolution
DEPTH_RES = 12        # samples per ray
DEC_HIDDEN = 64       # OSGDecoder hidden dim
DEC_OUT = 3           # decoder_output_dim (has_superresolution=False)

RENDERING_KWARGS = dict(ray_start=2.25, ray_end=3.3, box_warp=1.0,
                        depth_resolution=DEPTH_RES, clamp_mode="softplus")

TR = 128                     # rays per tile (lane axis) for fused decode+render
BLOCK_ROWS = 1024            # row tile for the pointwise-conv matmul kernels
VMEM_LIMIT = 32 * 1024 * 1024   # explicit scoped-VMEM budget (safe on v5e/v6e/v7x)


def _round_up(x, m):
    return ((x + m - 1) // m) * m


def _softplus(x):
    # numerically safe softplus that lowers cleanly in Mosaic
    return jnp.where(x > 20.0, x, jnp.log1p(jnp.exp(jnp.minimum(x, 20.0))))


def _sigmoid(x):
    # exact & numerically stable sigmoid via a single tanh EUP push
    return 0.5 * jnp.tanh(0.5 * x) + 0.5


# ----------------------------------------------------------------------------
# Pallas kernel 1: fused global+detail encoder pointwise conv.
#   grid = (batch, row_tile).  Detail features go to HBM; the global feature
#   mean over h*w is accumulated in a resident (1,1,C) output block so the
#   global branch never writes n*h*w*C floats to HBM.
# ----------------------------------------------------------------------------
def _encoder_kernel(x_ref, wg_ref, bg_ref, wd_ref, bd_ref, det_ref, glob_ref,
                    *, inv_rows):
    i = pl.program_id(1)
    x = x_ref[0]                                                    # (bm, Cin)
    fg = jnp.maximum(
        jnp.dot(x, wg_ref[...], preferred_element_type=jnp.float32) + bg_ref[...], 0.0)
    fd = jnp.maximum(
        jnp.dot(x, wd_ref[...], preferred_element_type=jnp.float32) + bd_ref[...], 0.0)
    det_ref[0] = fd.astype(det_ref.dtype)

    @pl.when(i == 0)
    def _():
        glob_ref[...] = jnp.zeros_like(glob_ref)

    # pre-scaled partial sum => mean is complete after the last row tile
    glob_ref[...] += (inv_rows * jnp.sum(fg, axis=0, keepdims=True))[None]


def encoder_global_detail(p, imgs):
    # TODO(synk): real EncoderGlobal / EncoderDetail are external StyleGAN-style
    # backbones; approximated here by one fused pointwise conv + spatial mean.
    n, cin, h, w = imgs.shape
    rows = h * w
    x = jnp.transpose(imgs, (0, 2, 3, 1)).reshape(n, rows, cin)
    bm = min(BLOCK_ROWS, rows)
    if rows % bm != 0:           # typical power-of-two resolutions divide evenly
        bm = rows
    n_tiles = rows // bm

    det, glob = pl.pallas_call(
        functools.partial(_encoder_kernel, inv_rows=1.0 / rows),
        out_shape=(jax.ShapeDtypeStruct((n, rows, C_FEAT), jnp.float32),
                   jax.ShapeDtypeStruct((n, 1, C_FEAT), jnp.float32)),
        grid=(n, n_tiles),
        in_specs=[pl.BlockSpec((1, bm, cin), lambda b, i: (b, i, 0)),
                  pl.BlockSpec((cin, C_FEAT), lambda b, i: (0, 0)),
                  pl.BlockSpec((1, C_FEAT), lambda b, i: (0, 0)),
                  pl.BlockSpec((cin, C_FEAT), lambda b, i: (0, 0)),
                  pl.BlockSpec((1, C_FEAT), lambda b, i: (0, 0))],
        out_specs=(pl.BlockSpec((1, bm, C_FEAT), lambda b, i: (b, i, 0)),
                   pl.BlockSpec((1, 1, C_FEAT), lambda b, i: (b, 0, 0))),
        compiler_params=pltpu.CompilerParams(
            dimension_semantics=("parallel", "arbitrary"),
            vmem_limit_bytes=VMEM_LIMIT),
    )(x, p["enc_g_w"], p["enc_g_b"], p["enc_d_w"], p["enc_d_b"])

    feat_global = glob[:, 0, :]                       # (N, C)
    feat_detail = det.reshape(n, h, w, C_FEAT)        # (N, H, W, C)
    return feat_global, feat_detail


# ----------------------------------------------------------------------------
# Pallas kernel 2: generic row-tiled linear  y = act(x @ w + b)
# ----------------------------------------------------------------------------
def _linear_kernel(x_ref, w_ref, b_ref, o_ref, *, act):
    y = jnp.dot(x_ref[...], w_ref[...], preferred_element_type=jnp.float32)
    y = y + b_ref[...]
    if act == "relu":
        y = jnp.maximum(y, 0.0)
    o_ref[...] = y.astype(o_ref.dtype)


def pallas_linear(x, w, b, act="none", block_rows=BLOCK_ROWS):
    M, K = x.shape
    Nout = w.shape[1]
    bm = min(block_rows, _round_up(M, 8))
    Mp = _round_up(M, bm)
    if Mp != M:
        x = jnp.pad(x, ((0, Mp - M), (0, 0)))
    out = pl.pallas_call(
        functools.partial(_linear_kernel, act=act),
        out_shape=jax.ShapeDtypeStruct((Mp, Nout), jnp.float32),
        grid=(Mp // bm,),
        in_specs=[pl.BlockSpec((bm, K), lambda i: (i, 0)),
                  pl.BlockSpec((K, Nout), lambda i: (0, 0)),
                  pl.BlockSpec((1, Nout), lambda i: (0, 0))],
        out_specs=pl.BlockSpec((bm, Nout), lambda i: (i, 0)),
        compiler_params=pltpu.CompilerParams(
            dimension_semantics=("parallel",),
            vmem_limit_bytes=VMEM_LIMIT),
    )(x, w, b.reshape(1, Nout))
    return out[:M]


# ----------------------------------------------------------------------------
# Pallas kernel 3: fused OSGDecoder MLP + midpoint volume rendering.
#   grid iterates over ray tiles of TR=128 rays (lane axis); depth on sublanes.
#   inputs : depths (D, 1), feats (C, D, Rays), decoder weights (transposed)
#   output : one lane-dense slab (DEC_OUT + 1 + 1 + (D-1), Rays)
#            rows [0:3]  accumulated rgb/feature
#            row  [3]    accumulated depth
#            row  [4]    background transmittance T_bg
#            rows [5:]   per-interval weights (D-1 of them)
# ----------------------------------------------------------------------------
def _decode_render_kernel(dep_ref, feats_ref, w1_ref, b1_ref, w2_ref, b2_ref,
                          out_ref, *, n_depth, dec_out):
    D = n_depth
    C, _, tr = feats_ref.shape

    # ---- decoder MLP batched over the whole depth extent of the tile -------
    feats = feats_ref[...].reshape(C, D * tr)      # lane-preserving (tr == 128)
    h = jnp.dot(w1_ref[...], feats, preferred_element_type=jnp.float32)
    h = _softplus(h + b1_ref[...])                                 # (H, D*tr)
    y = jnp.dot(w2_ref[...], h, preferred_element_type=jnp.float32)
    y = (y + b2_ref[...]).reshape(1 + dec_out, D, tr)              # lane-preserving

    sig = y[0]                                                     # (D, tr)
    rgb = _sigmoid(y[1:]) * (1.0 + 2.0 * 0.001) - 0.001            # (dec_out, D, tr)

    # ---- midpoint volume rendering, vectorized over depth ------------------
    dep = dep_ref[...]                                             # (D, 1)
    delta = dep[1:] - dep[:-1]                                     # (D-1, 1)
    dep_mid = 0.5 * (dep[:-1] + dep[1:])                           # (D-1, 1)
    sig_mid = 0.5 * (sig[:-1] + sig[1:])                           # (D-1, tr)
    rgb_mid = 0.5 * (rgb[:, :-1] + rgb[:, 1:])                     # (dec_out, D-1, tr)

    density = _softplus(sig_mid - 1.0)              # clamp_mode == 'softplus'
    alpha = 1.0 - jnp.exp(-density * delta)                        # (D-1, tr)

    # transmittance: short running-product scan (only per-depth work left)
    T = jnp.ones((1, tr), jnp.float32)
    w_rows = []
    for i in range(D - 1):
        a_i = alpha[i:i + 1]
        w_rows.append(a_i * T)
        T = T * (1.0 - a_i + 1e-10)
    weights = jnp.concatenate(w_rows, axis=0)                      # (D-1, tr)

    acc_rgb = jnp.sum(rgb_mid * weights[None], axis=1)             # (dec_out, tr)
    acc_dep = jnp.sum(weights * dep_mid, axis=0, keepdims=True)    # (1, tr)

    # single contiguous lane-dense slab store
    out_ref[...] = jnp.concatenate([acc_rgb, acc_dep, T, weights], axis=0)


def pallas_decode_and_render(p, feats_cdr, depths_col):
    C, D, Rtot = feats_cdr.shape
    H = p["dec_w1"].shape[1]
    O = p["dec_w2"].shape[1]                        # 1 + DEC_OUT
    out_rows = DEC_OUT + 2 + (D - 1)

    Rp = _round_up(Rtot, TR)
    if Rp != Rtot:
        feats_cdr = jnp.pad(feats_cdr, ((0, 0), (0, 0), (0, Rp - Rtot)))

    w1t = jnp.transpose(p["dec_w1"])                # (H, C)
    w2t = jnp.transpose(p["dec_w2"])                # (O, H)
    b1 = p["dec_b1"].reshape(H, 1)
    b2 = p["dec_b2"].reshape(O, 1)

    out = pl.pallas_call(
        functools.partial(_decode_render_kernel, n_depth=D, dec_out=DEC_OUT),
        out_shape=jax.ShapeDtypeStruct((out_rows, Rp), jnp.float32),
        grid=(Rp // TR,),
        in_specs=[pl.BlockSpec((D, 1), lambda i: (0, 0)),
                  pl.BlockSpec((C, D, TR), lambda i: (0, 0, i)),
                  pl.BlockSpec((H, C), lambda i: (0, 0)),
                  pl.BlockSpec((H, 1), lambda i: (0, 0)),
                  pl.BlockSpec((O, H), lambda i: (0, 0)),
                  pl.BlockSpec((O, 1), lambda i: (0, 0))],
        out_specs=pl.BlockSpec((out_rows, TR), lambda i: (0, i)),
        compiler_params=pltpu.CompilerParams(
            dimension_semantics=("parallel",),
            vmem_limit_bytes=VMEM_LIMIT),
    )(depths_col, feats_cdr, w1t, b1, w2t, b2)
    return out[:, :Rtot]


# ----------------------------------------------------------------------------
# parameter init (deterministic, synthetic)
# ----------------------------------------------------------------------------
def init_params(key):
    ks = jax.random.split(key, 9)

    def w(k, shape):
        return jax.random.normal(k, shape, jnp.float32) / jnp.sqrt(shape[0])

    p = {}
    # global / detail encoder pointwise conv weights (no lane padding)
    p["enc_g_w"] = w(ks[0], (3, C_FEAT))
    p["enc_g_b"] = jnp.zeros((1, C_FEAT), jnp.float32)
    p["enc_d_w"] = w(ks[1], (3, C_FEAT))
    p["enc_d_b"] = jnp.zeros((1, C_FEAT), jnp.float32)

    # tiny (batch-row) linears, computed with plain jnp
    p["mot_w0"] = w(ks[2], (MOT_DIMS, C_FEAT)); p["mot_b0"] = jnp.zeros(C_FEAT)
    p["mot_w1"] = w(ks[3], (C_FEAT, C_FEAT)); p["mot_b1"] = jnp.zeros(C_FEAT)
    p["can_w"] = w(ks[4], (C_FEAT, C_FEAT)); p["can_b"] = jnp.zeros(C_FEAT)

    # triplane generator (native 96-lane output, no padding)
    p["tri_w"] = w(ks[5], (2 * C_FEAT, 3 * C_FEAT))
    p["tri_b"] = jnp.zeros(3 * C_FEAT, jnp.float32)

    # OSG decoder
    p["dec_w1"] = w(ks[6], (C_FEAT, DEC_HIDDEN)); p["dec_b1"] = jnp.zeros(DEC_HIDDEN)
    p["dec_w2"] = w(ks[7], (DEC_HIDDEN, 1 + DEC_OUT)); p["dec_b2"] = jnp.zeros(1 + DEC_OUT)
    # registered buffer w_avg -- only consumed by superresolution / background
    # branches, which are disabled in this config (kept for fidelity).
    p["w_avg"] = jnp.zeros(W_DIM)
    return p


# ----------------------------------------------------------------------------
# canonical encoder / triplane generator
# ----------------------------------------------------------------------------
def encoder_canonical(p, feat_global, motions, motions_app, scale=1.0):
    # TODO(synk): real EncoderCanonical (StyleGAN blocks) is external; kept as a
    # 2-layer motion mapping + canonical linear. M = batch rows only -> plain jnp.
    dm = (motions - motions_app) * scale
    m = jax.nn.relu(dm @ p["mot_w0"] + p["mot_b0"])
    m = m @ p["mot_w1"] + p["mot_b1"]
    f = jax.nn.relu((feat_global + m) @ p["can_w"] + p["can_b"])
    n = f.shape[0]
    f_sr = jnp.broadcast_to(f[:, None, None, :], (n, PLANE_RES, PLANE_RES, C_FEAT))
    return f_sr


def generator_triplane(p, f_canon_sr, f_detail):
    n, pr, _, c = f_canon_sr.shape
    x = jnp.concatenate([f_canon_sr, f_detail], axis=-1).reshape(n * pr * pr, 2 * c)
    planes = pallas_linear(x, p["tri_w"], p["tri_b"], act="none")   # (n*P*P, 96)
    planes = planes.reshape(n, pr, pr, 3, C_FEAT)
    return jnp.transpose(planes, (0, 3, 4, 1, 2))   # [N, 3, 32, P, P]


# ----------------------------------------------------------------------------
# ray sampling / plane sampling / renderer (JAX glue around Pallas kernels)
# ----------------------------------------------------------------------------
def ray_sampler(cam2world, intrinsics, resolution):
    n = cam2world.shape[0]
    fx = intrinsics[:, 0, 0][:, None]
    fy = intrinsics[:, 1, 1][:, None]
    cx = intrinsics[:, 0, 2][:, None]
    cy = intrinsics[:, 1, 2][:, None]
    sk = intrinsics[:, 0, 1][:, None]
    uv = (jnp.arange(resolution, dtype=jnp.float32) + 0.5) / resolution
    yy, xx = jnp.meshgrid(uv, uv, indexing="ij")
    x_cam = jnp.broadcast_to(xx.reshape(1, -1), (n, resolution * resolution))
    y_cam = jnp.broadcast_to(yy.reshape(1, -1), (n, resolution * resolution))
    z_cam = jnp.ones_like(x_cam)
    x_lift = (x_cam - cx + cy * sk / fy - sk * y_cam / fy) / fx * z_cam
    y_lift = (y_cam - cy) / fy * z_cam
    cam_rel = jnp.stack([x_lift, y_lift, z_cam, jnp.ones_like(z_cam)], axis=-1)
    world = jnp.einsum("nij,nrj->nri", cam2world, cam_rel)[..., :3]
    origins = jnp.broadcast_to(cam2world[:, None, :3, 3], world.shape)
    dirs = world - origins
    dirs = dirs / jnp.linalg.norm(dirs, axis=-1, keepdims=True)
    return origins, dirs, None


def sample_from_planes(planes, coords, box_warp):
    # TODO(synk): bilinear grid_sample gather kept in plain JAX (data-dependent
    # gather); returns channel-major (N, 3, C, M) so no trailing transpose is needed.
    n, n_planes, c, hp, wp = planes.shape
    coords = (2.0 / box_warp) * coords                          # -> [-1, 1]
    proj = jnp.stack([coords[..., jnp.array([0, 1])],
                      coords[..., jnp.array([0, 2])],
                      coords[..., jnp.array([2, 1])]], axis=1)  # [N,3,M,2]
    x = (proj[..., 0] + 1.0) * wp * 0.5 - 0.5
    y = (proj[..., 1] + 1.0) * hp * 0.5 - 0.5
    x0 = jnp.floor(x); y0 = jnp.floor(y)
    x1 = x0 + 1.0; y1 = y0 + 1.0
    wx1 = x - x0; wx0 = 1.0 - wx1
    wy1 = y - y0; wy0 = 1.0 - wy1
    flat = planes.reshape(n, n_planes, c, hp * wp)

    def gather(ix, iy):
        inb = (ix >= 0) & (ix < wp) & (iy >= 0) & (iy < hp)
        ixc = jnp.clip(ix, 0, wp - 1).astype(jnp.int32)
        iyc = jnp.clip(iy, 0, hp - 1).astype(jnp.int32)
        idx = iyc * wp + ixc                                    # [N,3,M]
        g = jnp.take_along_axis(flat, idx[:, :, None, :], axis=3)
        return g * inb[:, :, None, :].astype(planes.dtype)

    out = (gather(x0, y0) * (wx0 * wy0)[:, :, None, :] +
           gather(x1, y0) * (wx1 * wy0)[:, :, None, :] +
           gather(x0, y1) * (wx0 * wy1)[:, :, None, :] +
           gather(x1, y1) * (wx1 * wy1)[:, :, None, :])
    return out                                                  # [N,3,C,M]


def renderer(p, planes, deformer, ray_origins, ray_dirs, rk):
    # TODO(synk): single uniform coarse pass; two-pass importance re-sampling skipped.
    n, r, _ = ray_origins.shape
    d = rk["depth_resolution"]
    t = jnp.linspace(rk["ray_start"], rk["ray_end"], d, dtype=jnp.float32)

    # depth-major coordinates -> gather output already lands as (N, C, D, R)
    coords = ray_origins[:, None, :, :] + t[None, :, None, None] * ray_dirs[:, None, :, :]
    coords = deformer(coords.reshape(n, d * r, 3))["canonical"]
    feats = sample_from_planes(planes, coords, rk["box_warp"]).mean(axis=1)  # (n, C, d*r)

    # TODO(synk): this single relayout could be removed by fusing the plane gather
    # into the decode kernel (scalar-prefetch indices + manual DMA from pl.ANY planes).
    feats_cdr = jnp.transpose(feats.reshape(n, C_FEAT, d, r),
                              (1, 2, 0, 3)).reshape(C_FEAT, d, n * r)
    depths_col = t.reshape(d, 1)

    out = pallas_decode_and_render(p, feats_cdr, depths_col)   # (3+2+(d-1), n*r)

    feat = jnp.transpose(out[0:DEC_OUT].reshape(DEC_OUT, n, r), (1, 2, 0))
    depth = jnp.transpose(out[DEC_OUT:DEC_OUT + 1].reshape(1, n, r), (1, 2, 0))
    tbg = jnp.transpose(out[DEC_OUT + 1:DEC_OUT + 2].reshape(1, n, r), (1, 2, 0))
    weights = jnp.transpose(out[DEC_OUT + 2:].reshape(d - 1, n, r), (1, 2, 0))[..., None]
    all_depths = jnp.broadcast_to(t.reshape(1, 1, d, 1), (n, r, d, 1))
    return feat, depth, all_depths, weights, tbg


# ----------------------------------------------------------------------------
# synthesis + forward
# ----------------------------------------------------------------------------
def synthesis(p, imgs_app, motions_app, motions, c, deformer, motion_scale=1.0):
    cam2world = c[:, :16].reshape(-1, 4, 4)
    # TODO(synk): world2cam / cam_z feed the importance-sampling pass only; skipped here.
    intrinsics = c[:, 16:25].reshape(-1, 3, 3)
    n = cam2world.shape[0]
    h = w = NRR

    feat_global, feat_detail = encoder_global_detail(p, imgs_app)
    feat_canon_sr = encoder_canonical(p, feat_global, motions, motions_app,
                                      scale=motion_scale)
    planes = generator_triplane(p, feat_canon_sr, feat_detail)  # [N,3,32,P,P]
    planes = [planes]

    ray_o, ray_d, _ = ray_sampler(cam2world, intrinsics, NRR)
    feature_samples, depth_samples, all_depths, all_weights, T_bg = renderer(
        p, planes[0], deformer, ray_o, ray_d, RENDERING_KWARGS)

    feature_image = jnp.transpose(feature_samples, (0, 2, 1)).reshape(n, -1, h, w)
    depth_image = jnp.transpose(depth_samples, (0, 2, 1)).reshape(n, 1, h, w)
    T_bg_img = jnp.transpose(T_bg, (0, 2, 1)).reshape(n, 1, h, w)

    # has_background == False: feature_image + T_bg * 0 is a no-op (dropped).
    feature_image_wobg = 2.0 * feature_image - 1.0
    feature_image = feature_image_wobg
    rgb_image_wobg = feature_image_wobg[:, :3]
    rgb_image = feature_image[:, :3]
    sr_image = rgb_image                                        # superresolution is None

    return {"image": rgb_image, "image_wobg": rgb_image_wobg,
            "image_feature": feature_image, "image_feature_wobg": feature_image_wobg,
            "background_feature": jnp.float32(-1.0),            # 2*0 - 1
            "image_sr": sr_image, "image_depth": depth_image,
            "interval": jnp.squeeze(all_depths, -1),
            "all_weights": jnp.squeeze(all_weights, -1),
            "T_bg": T_bg_img, "seg": (1.0 - T_bg_img) * 2.0 - 1.0,
            "uv": None, "planes": planes, "warp_planes": None}


def forward(p, imgs_app, imgs_mot, motions_app, motions,
            shape_params, exp_params, pose_params, eye_pose_params, c,
            motion_scale=1.0):
    # TODO(synk): FLAME deformation + mesh rasterizer (deformer / deformer.renderer)
    # are external modules -> identity warp and zero uv placeholder.
    deformer = lambda coords: {"canonical": coords}
    uv = jnp.zeros((imgs_app.shape[0], 2, IMG_RES, IMG_RES), jnp.float32)
    out = synthesis(p, imgs_app, motions_app, motions, c, deformer,
                    motion_scale=motion_scale)
    out["uv"] = uv
    return out


# ----------------------------------------------------------------------------
if __name__ == "__main__":
    key = jax.random.PRNGKey(0)
    kp, k1, k2, k3, k4 = jax.random.split(key, 5)
    params = init_params(kp)

    imgs_app = jax.random.normal(k1, (N_BATCH, 3, IMG_RES, IMG_RES), jnp.float32)
    imgs_mot = jax.random.normal(k2, (N_BATCH, 3, IMG_RES, IMG_RES), jnp.float32)
    motions_app = jax.random.normal(k3, (N_BATCH, MOT_DIMS), jnp.float32)
    motions = jax.random.normal(k4, (N_BATCH, MOT_DIMS), jnp.float32)
    shape_params = jnp.zeros((N_BATCH, 4), jnp.float32)
    exp_params = jnp.zeros((N_BATCH, 4), jnp.float32)
    pose_params = jnp.zeros((N_BATCH, 4), jnp.float32)
    eye_pose_params = jnp.zeros((N_BATCH, 4), jnp.float32)

    cam2world = jnp.tile(jnp.array([[1.0, 0.0, 0.0, 0.0],
                                    [0.0, -1.0, 0.0, 0.0],
                                    [0.0, 0.0, -1.0, 2.7],
                                    [0.0, 0.0, 0.0, 1.0]], jnp.float32)[None],
                         (N_BATCH, 1, 1))
    intr = jnp.tile(jnp.array([[4.26, 0.0, 0.5],
                               [0.0, 4.26, 0.5],
                               [0.0, 0.0, 1.0]], jnp.float32)[None], (N_BATCH, 1, 1))
    c = jnp.concatenate([cam2world.reshape(N_BATCH, 16),
                         intr.reshape(N_BATCH, 9)], axis=1)

    out = jax.jit(forward)(params, imgs_app, imgs_mot, motions_app, motions,
                           shape_params, exp_params, pose_params,
                           eye_pose_params, c)

    jax.block_until_ready(out["image"])
    jax.block_until_ready(out["image_depth"])
    jax.block_until_ready(out["planes"][0])
    assert out["image"].shape == (N_BATCH, 3, NRR, NRR)
    assert out["image_depth"].shape == (N_BATCH, 1, NRR, NRR)
    assert out["planes"][0].shape == (N_BATCH, 3, C_FEAT, PLANE_RES, PLANE_RES)
    assert out["all_weights"].shape == (N_BATCH, NRR * NRR, DEPTH_RES - 1)
    print("KERNEL_OK")
</pallas_src>

<mosaic_0001>
module attributes {stable_mosaic.version = 11 : i64} {
  func.func @_encoder_kernel(%arg0: i32, %arg1: i32, %arg2: memref<1x256x3xf32, #tpu.memory_space<vmem>>, %arg3: memref<3x32xf32, #tpu.memory_space<vmem>>, %arg4: memref<1x32xf32, #tpu.memory_space<vmem>>, %arg5: memref<3x32xf32, #tpu.memory_space<vmem>>, %arg6: memref<1x32xf32, #tpu.memory_space<vmem>>, %arg7: memref<1x256x32xf32, #tpu.memory_space<vmem>>, %arg8: memref<1x1x32xf32, #tpu.memory_space<vmem>>) attributes {dimension_semantics = [#tpu.dimension_semantics<parallel>, #tpu.dimension_semantics<arbitrary>], iteration_bounds = array<i64: 2, 1>, scalar_prefetch = 0 : i64, scratch_operands = 0 : i64, tpu.core_type = #tpu.core_type<tc>, window_params = [{transform_indices = @transform_0, window_bounds = array<i64: 1, 256, 3>}, {pipeline_mode = #tpu.pipeline_mode<synchronous>, transform_indices = @transform_1, window_bounds = array<i64: 3, 32>}, {pipeline_mode = #tpu.pipeline_mode<synchronous>, transform_indices = @transform_2, window_bounds = array<i64: 1, 32>}, {pipeline_mode = #tpu.pipeline_mode<synchronous>, transform_indices = @transform_3, window_bounds = array<i64: 3, 32>}, {pipeline_mode = #tpu.pipeline_mode<synchronous>, transform_indices = @transform_4, window_bounds = array<i64: 1, 32>}, {transform_indices = @transform_5, window_bounds = array<i64: 1, 256, 32>}, {transform_indices = @transform_6, window_bounds = array<i64: 1, 1, 32>}]} {
    %c0 = arith.constant 0 : index
    %c0_0 = arith.constant 0 : index
    %c0_1 = arith.constant 0 : index
    %0 = vector.load %arg2[%c0, %c0_0, %c0_1] : memref<1x256x3xf32, #tpu.memory_space<vmem>>, vector<1x256x3xf32>
    %1 = vector.shape_cast %0 : vector<1x256x3xf32> to vector<256x3xf32>
    %c0_2 = arith.constant 0 : index
    %c0_3 = arith.constant 0 : index
    %2 = vector.load %arg3[%c0_2, %c0_3] : memref<3x32xf32, #tpu.memory_space<vmem>>, vector<3x32xf32>
    %cst = arith.constant dense<0.000000e+00> : vector<256x32xf32>
    %3 = tpu.matmul %1, %2, %cst {dimension_numbers = #tpu.dot_dimension_numbers<[1], [0], [0], [1], [0, 0, 1, 1], [], []>} : vector<256x3xf32>, vector<3x32xf32>, vector<256x32xf32> -> vector<256x32xf32>
    %c0_4 = arith.constant 0 : index
    %c0_5 = arith.constant 0 : index
    %4 = vector.load %arg4[%c0_4, %c0_5] : memref<1x32xf32, #tpu.memory_space<vmem>>, vector<1x32xf32>
    %5 = vector.broadcast %4 : vector<1x32xf32> to vector<256x32xf32>
    %6 = arith.addf %3, %5 : vector<256x32xf32>
    %cst_6 = arith.constant 0.000000e+00 : f32
    %7 = vector.broadcast %cst_6 : f32 to vector<256x32xf32>
    %8 = arith.maximumf %6, %7 : vector<256x32xf32>
    %c0_7 = arith.constant 0 : index
    %c0_8 = arith.constant 0 : index
    %9 = vector.load %arg5[%c0_7, %c0_8] : memref<3x32xf32, #tpu.memory_space<vmem>>, vector<3x32xf32>
    %cst_9 = arith.constant dense<0.000000e+00> : vector<256x32xf32>
    %10 = tpu.matmul %1, %9, %cst_9 {dimension_numbers = #tpu.dot_dimension_numbers<[1], [0], [0], [1], [0, 0, 1, 1], [], []>} : vector<256x3xf32>, vector<3x32xf32>, vector<256x32xf32> -> vector<256x32xf32>
    %c0_10 = arith.constant 0 : index
    %c0_11 = arith.constant 0 : index
    %11 = vector.load %arg6[%c0_10, %c0_11] : memref<1x32xf32, #tpu.memory_space<vmem>>, vector<1x32xf32>
    %12 = vector.broadcast %11 : vector<1x32xf32> to vector<256x32xf32>
    %13 = arith.addf %10, %12 : vector<256x32xf32>
    %cst_12 = arith.constant 0.000000e+00 : f32
    %14 = vector.broadcast %cst_12 : f32 to vector<256x32xf32>
    %15 = arith.maximumf %13, %14 : vector<256x32xf32>
    %c0_13 = arith.constant 0 : index
    %c0_14 = arith.constant 0 : index
    %c0_15 = arith.constant 0 : index
    %16 = vector.load %arg7[%c0_13, %c0_14, %c0_15] : memref<1x256x32xf32, #tpu.memory_space<vmem>>, vector<1x256x32xf32>
    %17 = vector.shape_cast %16 : vector<1x256x32xf32> to vector<256x32xf32>
    %18 = vector.shape_cast %15 : vector<256x32xf32> to vector<1x256x32xf32>
    tpu.vector_store %arg7[%c0_13, %c0_14, %c0_15], %18 {strides = array<i32>} : memref<1x256x32xf32, #tpu.memory_space<vmem>>, vector<1x256x32xf32>,
    %c0_i32 = arith.constant 0 : i32
    %19 = arith.cmpi eq, %arg1, %c0_i32 : i32
    %20 = arith.extui %19 : i1 to i32
    %c0_i32_16 = arith.constant 0 : i32
    %21 = arith.cmpi ne, %20, %c0_i32_16 : i32
    scf.if %21 {
      %cst_25 = arith.constant 0.000000e+00 : f32
      %30 = vector.broadcast %cst_25 : f32 to vector<1x1x32xf32>
      %c0_26 = arith.constant 0 : index
      %c0_27 = arith.constant 0 : index
      %c0_28 = arith.constant 0 : index
      %31 = vector.load %arg8[%c0_26, %c0_27, %c0_28] : memref<1x1x32xf32, #tpu.memory_space<vmem>>, vector<1x1x32xf32>
      tpu.vector_store %arg8[%c0_26, %c0_27, %c0_28], %30 {strides = array<i32>} : memref<1x1x32xf32, #tpu.memory_space<vmem>>, vector<1x1x32xf32>,
    } else {
    }
    %c0_17 = arith.constant 0 : index
    %c0_18 = arith.constant 0 : index
    %c0_19 = arith.constant 0 : index
    %22 = vector.load %arg8[%c0_17, %c0_18, %c0_19] : memref<1x1x32xf32, #tpu.memory_space<vmem>>, vector<1x1x32xf32>
    %cst_20 = arith.constant dense<0.000000e+00> : vector<32xf32>
    %23 = vector.multi_reduction <add>, %8, %cst_20 [0] : vector<256x32xf32> to vector<32xf32>
    %24 = vector.shape_cast %23 : vector<32xf32> to vector<1x32xf32>
    %cst_21 = arith.constant 3.906250e-03 : f32
    %25 = vector.broadcast %cst_21 : f32 to vector<1x32xf32>
    %26 = arith.mulf %25, %24 : vector<1x32xf32>
    %27 = vector.shape_cast %26 : vector<1x32xf32> to vector<1x1x32xf32>
    %28 = arith.addf %22, %27 : vector<1x1x32xf32>
    %c0_22 = arith.constant 0 : index
    %c0_23 = arith.constant 0 : index
    %c0_24 = arith.constant 0 : index
    %29 = vector.load %arg8[%c0_22, %c0_23, %c0_24] : memref<1x1x32xf32, #tpu.memory_space<vmem>>, vector<1x1x32xf32>
    tpu.vector_store %arg8[%c0_22, %c0_23, %c0_24], %28 {strides = array<i32>} : memref<1x1x32xf32, #tpu.memory_space<vmem>>, vector<1x1x32xf32>,
    return
  }
  func.func @transform_0(%arg0: i32, %arg1: i32) -> (i32, i32, i32) {
    %c0_i32 = arith.constant 0 : i32
    %c0_i32_0 = arith.constant 0 : i32
    return %arg0, %arg1, %c0_i32 : i32, i32, i32
  }
  func.func @transform_1(%arg0: i32, %arg1: i32) -> (i32, i32) {
    %c0_i32 = arith.constant 0 : i32
    %c0_i32_0 = arith.constant 0 : i32
    %c0_i32_1 = arith.constant 0 : i32
    return %c0_i32, %c0_i32_0 : i32, i32
  }
  func.func @transform_2(%arg0: i32, %arg1: i32) -> (i32, i32) {
    %c0_i32 = arith.constant 0 : i32
    %c0_i32_0 = arith.constant 0 : i32
    %c0_i32_1 = arith.constant 0 : i32
    return %c0_i32, %c0_i32_0 : i32, i32
  }
  func.func @transform_3(%arg0: i32, %arg1: i32) -> (i32, i32) {
    %c0_i32 = arith.constant 0 : i32
    %c0_i32_0 = arith.constant 0 : i32
    %c0_i32_1 = arith.constant 0 : i32
    return %c0_i32, %c0_i32_0 : i32, i32
  }
  func.func @transform_4(%arg0: i32, %arg1: i32) -> (i32, i32) {
    %c0_i32 = arith.constant 0 : i32
    %c0_i32_0 = arith.constant 0 : i32
    %c0_i32_1 = arith.constant 0 : i32
    return %c0_i32, %c0_i32_0 : i32, i32
  }
  func.func @transform_5(%arg0: i32, %arg1: i32) -> (i32, i32, i32) {
    %c0_i32 = arith.constant 0 : i32
    %c0_i32_0 = arith.constant 0 : i32
    return %arg0, %arg1, %c0_i32 : i32, i32, i32
  }
  func.func @transform_6(%arg0: i32, %arg1: i32) -> (i32, i32, i32) {
    %c0_i32 = arith.constant 0 : i32
    %c0_i32_0 = arith.constant 0 : i32
    %c0_i32_1 = arith.constant 0 : i32
    return %arg0, %c0_i32, %c0_i32_0 : i32, i32, i32
  }
}

module attributes {stable_mosaic.version = 11 : i64} {
  func.func @_linear_kernel(%arg0: i32, %arg1: memref<512x64xf32, #tpu.memory_space<vmem>>, %arg2: memref<64x96xf32, #tpu.memory_space<vmem>>, %arg3: memref<1x96xf32, #tpu.memory_space<vmem>>, %arg4: memref<512x96xf32, #tpu.memory_space<vmem>>) attributes {dimension_semantics = [#tpu.dimension_semantics<parallel>], iteration_bounds = array<i64: 1>, scalar_prefetch = 0 : i64, scratch_operands = 0 : i64, tpu.core_type = #tpu.core_type<tc>, window_params = [{transform_indices = @transform_0, window_bounds = array<i64: 512, 64>}, {pipeline_mode = #tpu.pipeline_mode<synchronous>, transform_indices = @transform_1, window_bounds = array<i64: 64, 96>}, {pipeline_mode = #tpu.pipeline_mode<synchronous>, transform_indices = @transform_2, window_bounds = array<i64: 1, 96>}, {transform_indices = @transform_3, window_bounds = array<i64: 512, 96>}]} {
    %c0 = arith.constant 0 : index
    %c0_0 = arith.constant 0 : index
    %0 = vector.load %arg1[%c0, %c0_0] : memref<512x64xf32, #tpu.memory_space<vmem>>, vector<512x64xf32>
    %c0_1 = arith.constant 0 : index
    %c0_2 = arith.constant 0 : index
    %1 = vector.load %arg2[%c0_1, %c0_2] : memref<64x96xf32, #tpu.memory_space<vmem>>, vector<64x96xf32>
    %cst = arith.constant dense<0.000000e+00> : vector<512x96xf32>
    %2 = tpu.matmul %0, %1, %cst {dimension_numbers = #tpu.dot_dimension_numbers<[1], [0], [0], [1], [0, 0, 1, 1], [], []>} : vector<512x64xf32>, vector<64x96xf32>, vector<512x96xf32> -> vector<512x96xf32>
    %c0_3 = arith.constant 0 : index
    %c0_4 = arith.constant 0 : index
    %3 = vector.load %arg3[%c0_3, %c0_4] : memref<1x96xf32, #tpu.memory_space<vmem>>, vector<1x96xf32>
    %4 = vector.broadcast %3 : vector<1x96xf32> to vector<512x96xf32>
    %5 = arith.addf %2, %4 : vector<512x96xf32>
    %c0_5 = arith.constant 0 : index
    %c0_6 = arith.constant 0 : index
    %6 = vector.load %arg4[%c0_5, %c0_6] : memref<512x96xf32, #tpu.memory_space<vmem>>, vector<512x96xf32>
    tpu.vector_store %arg4[%c0_5, %c0_6], %5 {strides = array<i32>} : memref<512x96xf32, #tpu.memory_space<vmem>>, vector<512x96xf32>,
    return
  }
  func.func @transform_0(%arg0: i32) -> (i32, i32) {
    %c0_i32 = arith.constant 0 : i32
    %c0_i32_0 = arith.constant 0 : i32
    return %arg0, %c0_i32 : i32, i32
  }
  func.func @transform_1(%arg0: i32) -> (i32, i32) {
    %c0_i32 = arith.constant 0 : i32
    %c0_i32_0 = arith.constant 0 : i32
    %c0_i32_1 = arith.constant 0 : i32
    return %c0_i32, %c0_i32_0 : i32, i32
  }
  func.func @transform_2(%arg0: i32) -> (i32, i32) {
    %c0_i32 = arith.constant 0 : i32
    %c0_i32_0 = arith.constant 0 : i32
    %c0_i32_1 = arith.constant 0 : i32
    return %c0_i32, %c0_i32_0 : i32, i32
  }
  func.func @transform_3(%arg0: i32) -> (i32, i32) {
    %c0_i32 = arith.constant 0 : i32
    %c0_i32_0 = arith.constant 0 : i32
    return %arg0, %c0_i32 : i32, i32
  }
}

module attributes {stable_mosaic.version = 11 : i64} {
  func.func @_decode_render_kernel(%arg0: i32, %arg1: memref<12x1xf32, #tpu.memory_space<vmem>>, %arg2: memref<32x12x128xf32, #tpu.memory_space<vmem>>, %arg3: memref<64x32xf32, #tpu.memory_space<vmem>>, %arg4: memref<64x1xf32, #tpu.memory_space<vmem>>, %arg5: memref<4x64xf32, #tpu.memory_space<vmem>>, %arg6: memref<4x1xf32, #tpu.memory_space<vmem>>, %arg7: memref<16x128xf32, #tpu.memory_space<vmem>>) attributes {dimension_semantics = [#tpu.dimension_semantics<parallel>], iteration_bounds = array<i64: 1>, scalar_prefetch = 0 : i64, scratch_operands = 0 : i64, tpu.core_type = #tpu.core_type<tc>, window_params = [{pipeline_mode = #tpu.pipeline_mode<synchronous>, transform_indices = @transform_0, window_bounds = array<i64: 12, 1>}, {transform_indices = @transform_1, window_bounds = array<i64: 32, 12, 128>}, {pipeline_mode = #tpu.pipeline_mode<synchronous>, transform_indices = @transform_2, window_bounds = array<i64: 64, 32>}, {pipeline_mode = #tpu.pipeline_mode<synchronous>, transform_indices = @transform_3, window_bounds = array<i64: 64, 1>}, {pipeline_mode = #tpu.pipeline_mode<synchronous>, transform_indices = @transform_4, window_bounds = array<i64: 4, 64>}, {pipeline_mode = #tpu.pipeline_mode<synchronous>, transform_indices = @transform_5, window_bounds = array<i64: 4, 1>}, {transform_indices = @transform_6, window_bounds = array<i64: 16, 128>}]} {
    %c0 = arith.constant 0 : index
    %c0_0 = arith.constant 0 : index
    %c0_1 = arith.constant 0 : index
    %0 = vector.load %arg2[%c0, %c0_0, %c0_1] : memref<32x12x128xf32, #tpu.memory_space<vmem>>, vector<32x12x128xf32>
    %1 = vector.shape_cast %0 : vector<32x12x128xf32> to vector<32x1536xf32>
    %c0_2 = arith.constant 0 : index
    %c0_3 = arith.constant 0 : index
    %2 = vector.load %arg3[%c0_2, %c0_3] : memref<64x32xf32, #tpu.memory_space<vmem>>, vector<64x32xf32>
    %cst = arith.constant dense<0.000000e+00> : vector<64x1536xf32>
    %3 = tpu.matmul %2, %1, %cst {dimension_numbers = #tpu.dot_dimension_numbers<[1], [0], [0], [1], [0, 0, 1, 1], [], []>} : vector<64x32xf32>, vector<32x1536xf32>, vector<64x1536xf32> -> vector<64x1536xf32>
    %c0_4 = arith.constant 0 : index
    %c0_5 = arith.constant 0 : index
    %4 = vector.load %arg4[%c0_4, %c0_5] : memref<64x1xf32, #tpu.memory_space<vmem>>, vector<64x1xf32>
    %5 = vector.broadcast %4 : vector<64x1xf32> to vector<64x1536xf32>
    %6 = arith.addf %3, %5 : vector<64x1536xf32>
    %cst_6 = arith.constant 2.000000e+01 : f32
    %7 = vector.broadcast %cst_6 : f32 to vector<64x1536xf32>
    %8 = arith.cmpf ogt, %6, %7 : vector<64x1536xf32>
    %cst_7 = arith.constant 2.000000e+01 : f32
    %9 = vector.broadcast %cst_7 : f32 to vector<64x1536xf32>
    %10 = arith.minimumf %6, %9 : vector<64x1536xf32>
    %11 = math.exp %10 : vector<64x1536xf32>
    %12 = math.log1p %11 : vector<64x1536xf32>
    %13 = arith.select %8, %6, %12 : vector<64x1536xi1>, vector<64x1536xf32>
    %c0_8 = arith.constant 0 : index
    %c0_9 = arith.constant 0 : index
    %14 = vector.load %arg5[%c0_8, %c0_9] : memref<4x64xf32, #tpu.memory_space<vmem>>, vector<4x64xf32>
    %cst_10 = arith.constant dense<0.000000e+00> : vector<4x1536xf32>
    %15 = tpu.matmul %14, %13, %cst_10 {dimension_numbers = #tpu.dot_dimension_numbers<[1], [0], [0], [1], [0, 0, 1, 1], [], []>} : vector<4x64xf32>, vector<64x1536xf32>, vector<4x1536xf32> -> vector<4x1536xf32>
    %c0_11 = arith.constant 0 : index
    %c0_12 = arith.constant 0 : index
    %16 = vector.load %arg6[%c0_11, %c0_12] : memref<4x1xf32, #tpu.memory_space<vmem>>, vector<4x1xf32>
    %17 = vector.broadcast %16 : vector<4x1xf32> to vector<4x1536xf32>
    %18 = arith.addf %15, %17 : vector<4x1536xf32>
    %19 = vector.shape_cast %18 : vector<4x1536xf32> to vector<4x12x128xf32>
    %20 = vector.extract_strided_slice %19 {offsets = [0, 0, 0], sizes = [1, 12, 128], strides = [1, 1, 1]} : vector<4x12x128xf32> to vector<1x12x128xf32>
    %21 = vector.shape_cast %20 : vector<1x12x128xf32> to vector<12x128xf32>
    %22 = vector.extract_strided_slice %19 {offsets = [1, 0, 0], sizes = [3, 12, 128], strides = [1, 1, 1]} : vector<4x12x128xf32> to vector<3x12x128xf32>
    %cst_13 = arith.constant 5.000000e-01 : f32
    %23 = vector.broadcast %cst_13 : f32 to vector<3x12x128xf32>
    %24 = arith.mulf %23, %22 : vector<3x12x128xf32>
    %25 = math.tanh %24 : vector<3x12x128xf32>
    %cst_14 = arith.constant 5.000000e-01 : f32
    %26 = vector.broadcast %cst_14 : f32 to vector<3x12x128xf32>
    %27 = arith.mulf %26, %25 : vector<3x12x128xf32>
    %cst_15 = arith.constant 5.000000e-01 : f32
    %28 = vector.broadcast %cst_15 : f32 to vector<3x12x128xf32>
    %29 = arith.addf %27, %28 : vector<3x12x128xf32>
    %cst_16 = arith.constant 1.002000e+00 : f32
    %30 = vector.broadcast %cst_16 : f32 to vector<3x12x128xf32>
    %31 = arith.mulf %29, %30 : vector<3x12x128xf32>
    %cst_17 = arith.constant 1.000000e-03 : f32
    %32 = vector.broadcast %cst_17 : f32 to vector<3x12x128xf32>
    %33 = arith.subf %31, %32 : vector<3x12x128xf32>
    %c0_18 = arith.constant 0 : index
    %c0_19 = arith.constant 0 : index
    %34 = vector.load %arg1[%c0_18, %c0_19] : memref<12x1xf32, #tpu.memory_space<vmem>>, vector<12x1xf32>
    %35 = vector.extract_strided_slice %34 {offsets = [1, 0], sizes = [11, 1], strides = [1, 1]} : vector<12x1xf32> to vector<11x1xf32>
    %36 = vector.extract_strided_slice %34 {offsets = [0, 0], sizes = [11, 1], strides = [1, 1]} : vector<12x1xf32> to vector<11x1xf32>
    %37 = arith.subf %35, %36 : vector<11x1xf32>
    %38 = vector.extract_strided_slice %34 {offsets = [0, 0], sizes = [11, 1], strides = [1, 1]} : vector<12x1xf32> to vector<11x1xf32>
    %39 = vector.extract_strided_slice %34 {offsets = [1, 0], sizes = [11, 1], strides = [1, 1]} : vector<12x1xf32> to vector<11x1xf32>
    %40 = arith.addf %38, %39 : vector<11x1xf32>
    %cst_20 = arith.constant 5.000000e-01 : f32
    %41 = vector.broadcast %cst_20 : f32 to vector<11x1xf32>
    %42 = arith.mulf %41, %40 : vector<11x1xf32>
    %43 = vector.extract_strided_slice %21 {offsets = [0, 0], sizes = [11, 128], strides = [1, 1]} : vector<12x128xf32> to vector<11x128xf32>
    %44 = vector.extract_strided_slice %21 {offsets = [1, 0], sizes = [11, 128], strides = [1, 1]} : vector<12x128xf32> to vector<11x128xf32>
    %45 = arith.addf %43, %44 : vector<11x128xf32>
    %cst_21 = arith.constant 5.000000e-01 : f32
    %46 = vector.broadcast %cst_21 : f32 to vector<11x128xf32>
    %47 = arith.mulf %46, %45 : vector<11x128xf32>
    %48 = vector.extract_strided_slice %33 {offsets = [0, 0, 0], sizes = [3, 11, 128], strides = [1, 1, 1]} : vector<3x12x128xf32> to vector<3x11x128xf32>
    %49 = vector.extract_strided_slice %33 {offsets = [0, 1, 0], sizes = [3, 11, 128], strides = [1, 1, 1]} : vector<3x12x128xf32> to vector<3x11x128xf32>
    %50 = arith.addf %48, %49 : vector<3x11x128xf32>
    %cst_22 = arith.constant 5.000000e-01 : f32
    %51 = vector.broadcast %cst_22 : f32 to vector<3x11x128xf32>
    %52 = arith.mulf %51, %50 : vector<3x11x128xf32>
    %cst_23 = arith.constant 1.000000e+00 : f32
    %53 = vector.broadcast %cst_23 : f32 to vector<11x128xf32>
    %54 = arith.subf %47, %53 : vector<11x128xf32>
    %cst_24 = arith.constant 2.000000e+01 : f32
    %55 = vector.broadcast %cst_24 : f32 to vector<11x128xf32>
    %56 = arith.cmpf ogt, %54, %55 : vector<11x128xf32>
    %cst_25 = arith.constant 2.000000e+01 : f32
    %57 = vector.broadcast %cst_25 : f32 to vector<11x128xf32>
    %58 = arith.minimumf %54, %57 : vector<11x128xf32>
    %59 = math.exp %58 : vector<11x128xf32>
    %60 = math.log1p %59 : vector<11x128xf32>
    %61 = arith.select %56, %54, %60 : vector<11x128xi1>, vector<11x128xf32>
    %cst_26 = arith.constant 0.000000e+00 : f32
    %62 = vector.broadcast %cst_26 : f32 to vector<11x128xf32>
    %63 = arith.subf %62, %61 : vector<11x128xf32>
    %64 = vector.broadcast %37 : vector<11x1xf32> to vector<11x128xf32>
    %65 = arith.mulf %63, %64 : vector<11x128xf32>
    %66 = math.exp %65 : vector<11x128xf32>
    %cst_27 = arith.constant 1.000000e+00 : f32
    %67 = vector.broadcast %cst_27 : f32 to vector<11x128xf32>
    %68 = arith.subf %67, %66 : vector<11x128xf32>
    %cst_28 = arith.constant 1.000000e+00 : f32
    %69 = vector.broadcast %cst_28 : f32 to vector<1x128xf32>
    %70 = vector.extract_strided_slice %68 {offsets = [0, 0], sizes = [1, 128], strides = [1, 1]} : vector<11x128xf32> to vector<1x128xf32>
    %71 = arith.mulf %70, %69 : vector<1x128xf32>
    %cst_29 = arith.constant 1.000000e+00 : f32
    %72 = vector.broadcast %cst_29 : f32 to vector<1x128xf32>
    %73 = arith.subf %72, %70 : vector<1x128xf32>
    %cst_30 = arith.constant 1.000000e-10 : f32
    %74 = vector.broadcast %cst_30 : f32 to vector<1x128xf32>
    %75 = arith.addf %73, %74 : vector<1x128xf32>
    %76 = arith.mulf %69, %75 : vector<1x128xf32>
    %77 = vector.extract_strided_slice %68 {offsets = [1, 0], sizes = [1, 128], strides = [1, 1]} : vector<11x128xf32> to vector<1x128xf32>
    %78 = arith.mulf %77, %76 : vector<1x128xf32>
    %cst_31 = arith.constant 1.000000e+00 : f32
    %79 = vector.broadcast %cst_31 : f32 to vector<1x128xf32>
    %80 = arith.subf %79, %77 : vector<1x128xf32>
    %cst_32 = arith.constant 1.000000e-10 : f32
    %81 = vector.broadcast %cst_32 : f32 to vector<1x128xf32>
    %82 = arith.addf %80, %81 : vector<1x128xf32>
    %83 = arith.mulf %76, %82 : vector<1x128xf32>
    %84 = vector.extract_strided_slice %68 {offsets = [2, 0], sizes = [1, 128], strides = [1, 1]} : vector<11x128xf32> to vector<1x128xf32>
    %85 = arith.mulf %84, %83 : vector<1x128xf32>
    %cst_33 = arith.constant 1.000000e+00 : f32
    %86 = vector.broadcast %cst_33 : f32 to vector<1x128xf32>
    %87 = arith.subf %86, %84 : vector<1x128xf32>
    %cst_34 = arith.constant 1.000000e-10 : f32
    %88 = vector.broadcast %cst_34 : f32 to vector<1x128xf32>
    %89 = arith.addf %87, %88 : vector<1x128xf32>
    %90 = arith.mulf %83, %89 : vector<1x128xf32>
    %91 = vector.extract_strided_slice %68 {offsets = [3, 0], sizes = [1, 128], strides = [1, 1]} : vector<11x128xf32> to vector<1x128xf32>
    %92 = arith.mulf %91, %90 : vector<1x128xf32>
    %cst_35 = arith.constant 1.000000e+00 : f32
    %93 = vector.broadcast %cst_35 : f32 to vector<1x128xf32>
    %94 = arith.subf %93, %91 : vector<1x128xf32>
    %cst_36 = arith.constant 1.000000e-10 : f32
    %95 = vector.broadcast %cst_36 : f32 to vector<1x128xf32>
    %96 = arith.addf %94, %95 : vector<1x128xf32>
    %97 = arith.mulf %90, %96 : vector<1x128xf32>
    %98 = vector.extract_strided_slice %68 {offsets = [4, 0], sizes = [1, 128], strides = [1, 1]} : vector<11x128xf32> to vector<1x128xf32>
    %99 = arith.mulf %98, %97 : vector<1x128xf32>
    %cst_37 = arith.constant 1.000000e+00 : f32
    %100 = vector.broadcast %cst_37 : f32 to vector<1x128xf32>
    %101 = arith.subf %100, %98 : vector<1x128xf32>
    %cst_38 = arith.constant 1.000000e-10 : f32
    %102 = vector.broadcast %cst_38 : f32 to vector<1x128xf32>
    %103 = arith.addf %101, %102 : vector<1x128xf32>
    %104 = arith.mulf %97, %103 : vector<1x128xf32>
    %105 = vector.extract_strided_slice %68 {offsets = [5, 0], sizes = [1, 128], strides = [1, 1]} : vector<11x128xf32> to vector<1x128xf32>
    %106 = arith.mulf %105, %104 : vector<1x128xf32>
    %cst_39 = arith.constant 1.000000e+00 : f32
    %107 = vector.broadcast %cst_39 : f32 to vector<1x128xf32>
    %108 = arith.subf %107, %105 : vector<1x128xf32>
    %cst_40 = arith.constant 1.000000e-10 : f32
    %109 = vector.broadcast %cst_40 : f32 to vector<1x128xf32>
    %110 = arith.addf %108, %109 : vector<1x128xf32>
    %111 = arith.mulf %104, %110 : vector<1x128xf32>
    %112 = vector.extract_strided_slice %68 {offsets = [6, 0], sizes = [1, 128], strides = [1, 1]} : vector<11x128xf32> to vector<1x128xf32>
    %113 = arith.mulf %112, %111 : vector<1x128xf32>
    %cst_41 = arith.constant 1.000000e+00 : f32
    %114 = vector.broadcast %cst_41 : f32 to vector<1x128xf32>
    %115 = arith.subf %114, %112 : vector<1x128xf32>
    %cst_42 = arith.constant 1.000000e-10 : f32
    %116 = vector.broadcast %cst_42 : f32 to vector<1x128xf32>
    %117 = arith.addf %115, %116 : vector<1x128xf32>
    %118 = arith.mulf %111, %117 : vector<1x128xf32>
    %119 = vector.extract_strided_slice %68 {offsets = [7, 0], sizes = [1, 128], strides = [1, 1]} : vector<11x128xf32> to vector<1x128xf32>
    %120 = arith.mulf %119, %118 : vector<1x128xf32>
    %cst_43 = arith.constant 1.000000e+00 : f32
    %121 = vector.broadcast %cst_43 : f32 to vector<1x128xf32>
    %122 = arith.subf %121, %119 : vector<1x128xf32>
    %cst_44 = arith.constant 1.000000e-10 : f32
    %123 = vector.broadcast %cst_44 : f32 to vector<1x128xf32>
    %124 = arith.addf %122, %123 : vector<1x128xf32>
    %125 = arith.mulf %118, %124 : vector<1x128xf32>
    %126 = vector.extract_strided_slice %68 {offsets = [8, 0], sizes = [1, 128], strides = [1, 1]} : vector<11x128xf32> to vector<1x128xf32>
    %127 = arith.mulf %126, %125 : vector<1x128xf32>
    %cst_45 = arith.constant 1.000000e+00 : f32
    %128 = vector.broadcast %cst_45 : f32 to vector<1x128xf32>
    %129 = arith.subf %128, %126 : vector<1x128xf32>
    %cst_46 = arith.constant 1.000000e-10 : f32
    %130 = vector.broadcast %cst_46 : f32 to vector<1x128xf32>
    %131 = arith.addf %129, %130 : vector<1x128xf32>
    %132 = arith.mulf %125, %131 : vector<1x128xf32>
    %133 = vector.extract_strided_slice %68 {offsets = [9, 0], sizes = [1, 128], strides = [1, 1]} : vector<11x128xf32> to vector<1x128xf32>
    %134 = arith.mulf %133, %132 : vector<1x128xf32>
    %cst_47 = arith.constant 1.000000e+00 : f32
    %135 = vector.broadcast %cst_47 : f32 to vector<1x128xf32>
    %136 = arith.subf %135, %133 : vector<1x128xf32>
    %cst_48 = arith.constant 1.000000e-10 : f32
    %137 = vector.broadcast %cst_48 : f32 to vector<1x128xf32>
    %138 = arith.addf %136, %137 : vector<1x128xf32>
    %139 = arith.mulf %132, %138 : vector<1x128xf32>
    %140 = vector.extract_strided_slice %68 {offsets = [10, 0], sizes = [1, 128], strides = [1, 1]} : vector<11x128xf32> to vector<1x128xf32>
    %141 = arith.mulf %140, %139 : vector<1x128xf32>
    %cst_49 = arith.constant 1.000000e+00 : f32
    %142 = vector.broadcast %cst_49 : f32 to vector<1x128xf32>
    %143 = arith.subf %142, %140 : vector<1x128xf32>
    %cst_50 = arith.constant 1.000000e-10 : f32
    %144 = vector.broadcast %cst_50 : f32 to vector<1x128xf32>
    %145 = arith.addf %143, %144 : vector<1x128xf32>
    %146 = arith.mulf %139, %145 : vector<1x128xf32>
    %147 = tpu.concatenate %71, %78, %85, %92, %99, %106, %113, %120, %127, %134, %141 in 0 : vector<1x128xf32>, vector<1x128xf32>, vector<1x128xf32>, vector<1x128xf32>, vector<1x128xf32>, vector<1x128xf32>, vector<1x128xf32>, vector<1x128xf32>, vector<1x128xf32>, vector<1x128xf32>, vector<1x128xf32> -> vector<11x128xf32>
    %148 = vector.shape_cast %147 : vector<11x128xf32> to vector<1x11x128xf32>
    %149 = vector.broadcast %148 : vector<1x11x128xf32> to vector<3x11x128xf32>
    %150 = arith.mulf %52, %149 : vector<3x11x128xf32>
    %cst_51 = arith.constant dense<0.000000e+00> : vector<3x128xf32>
    %151 = vector.multi_reduction <add>, %150, %cst_51 [1] : vector<3x11x128xf32> to vector<3x128xf32>
    %152 = vector.broadcast %42 : vector<11x1xf32> to vector<11x128xf32>
    %153 = arith.mulf %147, %152 : vector<11x128xf32>
    %cst_52 = arith.constant dense<0.000000e+00> : vector<128xf32>
    %154 = vector.multi_reduction <add>, %153, %cst_52 [0] : vector<11x128xf32> to vector<128xf32>
    %155 = vector.shape_cast %154 : vector<128xf32> to vector<1x128xf32>
    %156 = tpu.concatenate %151, %155, %146, %147 in 0 : vector<3x128xf32>, vector<1x128xf32>, vector<1x128xf32>, vector<11x128xf32> -> vector<16x128xf32>
    %c0_53 = arith.constant 0 : index
    %c0_54 = arith.constant 0 : index
    %157 = vector.load %arg7[%c0_53, %c0_54] : memref<16x128xf32, #tpu.memory_space<vmem>>, vector<16x128xf32>
    tpu.vector_store %arg7[%c0_53, %c0_54], %156 {strides = array<i32>} : memref<16x128xf32, #tpu.memory_space<vmem>>, vector<16x128xf32>,
    return
  }
  func.func @transform_0(%arg0: i32) -> (i32, i32) {
    %c0_i32 = arith.constant 0 : i32
    %c0_i32_0 = arith.constant 0 : i32
    %c0_i32_1 = arith.constant 0 : i32
    return %c0_i32, %c0_i32_0 : i32, i32
  }
  func.func @transform_1(%arg0: i32) -> (i32, i32, i32) {
    %c0_i32 = arith.constant 0 : i32
    %c0_i32_0 = arith.constant 0 : i32
    %c0_i32_1 = arith.constant 0 : i32
    return %c0_i32, %c0_i32_0, %arg0 : i32, i32, i32
  }
  func.func @transform_2(%arg0: i32) -> (i32, i32) {
    %c0_i32 = arith.constant 0 : i32
    %c0_i32_0 = arith.constant 0 : i32
    %c0_i32_1 = arith.constant 0 : i32
    return %c0_i32, %c0_i32_0 : i32, i32
  }
  func.func @transform_3(%arg0: i32) -> (i32, i32) {
    %c0_i32 = arith.constant 0 : i32
    %c0_i32_0 = arith.constant 0 : i32
    %c0_i32_1 = arith.constant 0 : i32
    return %c0_i32, %c0_i32_0 : i32, i32
  }
  func.func @transform_4(%arg0: i32) -> (i32, i32) {
    %c0_i32 = arith.constant 0 : i32
    %c0_i32_0 = arith.constant 0 : i32
    %c0_i32_1 = arith.constant 0 : i32
    return %c0_i32, %c0_i32_0 : i32, i32
  }
  func.func @transform_5(%arg0: i32) -> (i32, i32) {
    %c0_i32 = arith.constant 0 : i32
    %c0_i32_0 = arith.constant 0 : i32
    %c0_i32_1 = arith.constant 0 : i32
    return %c0_i32, %c0_i32_0 : i32, i32
  }
  func.func @transform_6(%arg0: i32) -> (i32, i32) {
    %c0_i32 = arith.constant 0 : i32
    %c0_i32_0 = arith.constant 0 : i32
    return %c0_i32, %arg0 : i32, i32
  }
}

</mosaic_0001>

<llo_original>
// kernel: forward.4
$region0: #{forward.4}
  #allocation0 [shape = 'u32[]', space=smem, size = 0x4, offset = 0x4, fixed_abs, tag = 'smem constant byte address 0x4 - core index']
  #allocation1 [shape = 'u32[72,128]{1,0:T(1,128)}', space=vmem, size = 0x9000, scoped, tag = 'internal scratch']
  %s0 = inlined_call_operand.vmem [shape: f32[512,64], index: 0, kind: input, shape index: {}]
  %s1 = inlined_call_operand.vmem [shape: f32[64,96], index: 1, kind: input, shape index: {}]
  %s2 = inlined_call_operand.vmem [shape: f32[1,96], index: 2, kind: input, shape index: {}]
  %s3 = inlined_call_operand.vmem [shape: f32[512,96], index: 3, kind: output, shape index: {}]
  %s4 = sld [smem:[#allocation0]]
  $region22: #{forward.4} parent=0
    _
  %s6 = ssub.s32 1, %s4
  %s7 = scalar_select 0, %s6, %s4
  // Predicated region
  $region2: #{forward.4} parent=0 // pred_check
    _
  $region3: #{forward.4} parent=0 // pred_check_branch
    %9 = sbr.rel (0) target = $region5
  $region4: #{forward.4} parent=0 // pred_region
    _
  $region5: #{forward.4} parent=0 // pred_fallthru
    _
  // Predicated region
  $region6: #{forward.4} parent=0 // pred_check
    _
  $region7: #{forward.4} parent=0 // pred_check_branch
    %11 = sbr.rel (0) target = $region9
  $region8: #{forward.4} parent=0 // pred_region
    _
  $region9: #{forward.4} parent=0 // pred_fallthru
    _
  // Predicated region
  $region10: #{forward.4} parent=0 // pred_check
    _
  $region11: #{forward.4} parent=0 // pred_check_branch
    %13 = sbr.rel (0) target = $region13
  $region12: #{forward.4} parent=0 // pred_region
    _
  $region13: #{forward.4} parent=0 // pred_fallthru
    _
  %v14 = vld [vmem:[%s0] sm:$0xff]
  %v15 = vld [vmem:[%s0 + $0x8] sm:$0xff]
  %v16 = vld [vmem:[%s0 + $0x10] sm:$0xff]
  %v17 = vld [vmem:[%s0 + $0x18] sm:$0xff]
  %v18 = vld [vmem:[%s0 + $0x20] sm:$0xff]
  %v19 = vld [vmem:[%s0 + $0x28] sm:$0xff]
  %v20 = vld [vmem:[%s0 + $0x30] sm:$0xff]
  %v21 = vld [vmem:[%s0 + $0x38] sm:$0xff]
  %v22 = vld [vmem:[%s0 + $0x40] sm:$0xff]
  %v23 = vld [vmem:[%s0 + $0x48] sm:$0xff]
  %v24 = vld [vmem:[%s0 + $0x50] sm:$0xff]
  %v25 = vld [vmem:[%s0 + $0x58] sm:$0xff]
  %v26 = vld [vmem:[%s0 + $0x60] sm:$0xff]
  %v27 = vld [vmem:[%s0 + $0x68] sm:$0xff]
  %v28 = vld [vmem:[%s0 + $0x70] sm:$0xff]
  %v29 = vld [vmem:[%s0 + $0x78] sm:$0xff]
  %v30 = vld [vmem:[%s0 + $0x80] sm:$0xff]
  %v31 = vld [vmem:[%s0 + $0x88] sm:$0xff]
  %v32 = vld [vmem:[%s0 + $0x90] sm:$0xff]
  %v33 = vld [vmem:[%s0 + $0x98] sm:$0xff]
  %v34 = vld [vmem:[%s0 + $0xa0] sm:$0xff]
  %v35 = vld [vmem:[%s0 + $0xa8] sm:$0xff]
  %v36 = vld [vmem:[%s0 + $0xb0] sm:$0xff]
  %v37 = vld [vmem:[%s0 + $0xb8] sm:$0xff]
  %v38 = vld [vmem:[%s0 + $0xc0] sm:$0xff]
  %v39 = vld [vmem:[%s0 + $0xc8] sm:$0xff]
  %v40 = vld [vmem:[%s0 + $0xd0] sm:$0xff]
  %v41 = vld [vmem:[%s0 + $0xd8] sm:$0xff]
  %v42 = vld [vmem:[%s0 + $0xe0] sm:$0xff]
  %v43 = vld [vmem:[%s0 + $0xe8] sm:$0xff]
  %v44 = vld [vmem:[%s0 + $0xf0] sm:$0xff]
  %v45 = vld [vmem:[%s0 + $0xf8] sm:$0xff]
  %v46 = vld [vmem:[%s0 + $0x100] sm:$0xff]
  %v47 = vld [vmem:[%s0 + $0x108] sm:$0xff]
  %v48 = vld [vmem:[%s0 + $0x110] sm:$0xff]
  %v49 = vld [vmem:[%s0 + $0x118] sm:$0xff]
  %v50 = vld [vmem:[%s0 + $0x120] sm:$0xff]
  %v51 = vld [vmem:[%s0 + $0x128] sm:$0xff]
  %v52 = vld [vmem:[%s0 + $0x130] sm:$0xff]
  %v53 = vld [vmem:[%s0 + $0x138] sm:$0xff]
  %v54 = vld [vmem:[%s0 + $0x140] sm:$0xff]
  %v55 = vld [vmem:[%s0 + $0x148] sm:$0xff]
  %v56 = vld [vmem:[%s0 + $0x150] sm:$0xff]
  %v57 = vld [vmem:[%s0 + $0x158] sm:$0xff]
  %v58 = vld [vmem:[%s0 + $0x160] sm:$0xff]
  %v59 = vld [vmem:[%s0 + $0x168] sm:$0xff]
  %v60 = vld [vmem:[%s0 + $0x170] sm:$0xff]
  %v61 = vld [vmem:[%s0 + $0x178] sm:$0xff]
  %v62 = vld [vmem:[%s0 + $0x180] sm:$0xff]
  %v63 = vld [vmem:[%s0 + $0x188] sm:$0xff]
  %v64 = vld [vmem:[%s0 + $0x190] sm:$0xff]
  %v65 = vld [vmem:[%s0 + $0x198] sm:$0xff]
  %v66 = vld [vmem:[%s0 + $0x1a0] sm:$0xff]
  %v67 = vld [vmem:[%s0 + $0x1a8] sm:$0xff]
  %v68 = vld [vmem:[%s0 + $0x1b0] sm:$0xff]
  %v69 = vld [vmem:[%s0 + $0x1b8] sm:$0xff]
  %v70 = vld [vmem:[%s0 + $0x1c0] sm:$0xff]
  %v71 = vld [vmem:[%s0 + $0x1c8] sm:$0xff]
  %v72 = vld [vmem:[%s0 + $0x1d0] sm:$0xff]
  %v73 = vld [vmem:[%s0 + $0x1d8] sm:$0xff]
  %v74 = vld [vmem:[%s0 + $0x1e0] sm:$0xff]
  %v75 = vld [vmem:[%s0 + $0x1e8] sm:$0xff]
  %v76 = vld [vmem:[%s0 + $0x1f0] sm:$0xff]
  %v77 = vld [vmem:[%s0 + $0x1f8] sm:$0xff]
  %v78 = vld [vmem:[%s1] sm:$0xff]
  %v79 = vld [vmem:[%s1 + $0x8] sm:$0xff]
  %v80 = vld [vmem:[%s1 + $0x10] sm:$0xff]
  %v81 = vld [vmem:[%s1 + $0x18] sm:$0xff]
  %v82 = vld [vmem:[%s1 + $0x20] sm:$0xff]
  %v83 = vld [vmem:[%s1 + $0x28] sm:$0xff]
  %v84 = vld [vmem:[%s1 + $0x30] sm:$0xff]
  %v85 = vld [vmem:[%s1 + $0x38] sm:$0xff]
  %v86 = vld [vmem:[%s2] sm:$0x1]
  %v88 = vperm.slane %v86, 0
  %vm90 = vcmask 523264
  %v92 = vsel %vm90, %v14, 0
  %v95 = vsel %vm90, %v15, 0
  %v98 = vsel %vm90, %v16, 0
  %v101 = vsel %vm90, %v17, 0
  %v104 = vsel %vm90, %v18, 0
  %v107 = vsel %vm90, %v19, 0
  %v110 = vsel %vm90, %v20, 0
  %v113 = vsel %vm90, %v21, 0
  %v116 = vsel %vm90, %v22, 0
  %v119 = vsel %vm90, %v23, 0
  %v122 = vsel %vm90, %v24, 0
  %v125 = vsel %vm90, %v25, 0
  %v128 = vsel %vm90, %v26, 0
  %v131 = vsel %vm90, %v27, 0
  %v134 = vsel %vm90, %v28, 0
  %v137 = vsel %vm90, %v29, 0
  %v140 = vsel %vm90, %v30, 0
  %v143 = vsel %vm90, %v31, 0
  %v146 = vsel %vm90, %v32, 0
  %v149 = vsel %vm90, %v33, 0
  %v152 = vsel %vm90, %v34, 0
  %v155 = vsel %vm90, %v35, 0
  %v158 = vsel %vm90, %v36, 0
  %v161 = vsel %vm90, %v37, 0
  %v164 = vsel %vm90, %v38, 0
  %v167 = vsel %vm90, %v39, 0
  %v170 = vsel %vm90, %v40, 0
  %v173 = vsel %vm90, %v41, 0
  %v176 = vsel %vm90, %v42, 0
  %v179 = vsel %vm90, %v43, 0
  %v182 = vsel %vm90, %v44, 0
  %v185 = vsel %vm90, %v45, 0
  %v188 = vsel %vm90, %v46, 0
  %v191 = vsel %vm90, %v47, 0
  %v194 = vsel %vm90, %v48, 0
  %v197 = vsel %vm90, %v49, 0
  %v200 = vsel %vm90, %v50, 0
  %v203 = vsel %vm90, %v51, 0
  %v206 = vsel %vm90, %v52, 0
  %v209 = vsel %vm90, %v53, 0
  %v212 = vsel %vm90, %v54, 0
  %v215 = vsel %vm90, %v55, 0
  %v218 = vsel %vm90, %v56, 0
  %v221 = vsel %vm90, %v57, 0
  %v224 = vsel %vm90, %v58, 0
  %v227 = vsel %vm90, %v59, 0
  %v230 = vsel %vm90, %v60, 0
  %v233 = vsel %vm90, %v61, 0
  %v236 = vsel %vm90, %v62, 0
  %v239 = vsel %vm90, %v63, 0
  %v242 = vsel %vm90, %v64, 0
  %v245 = vsel %vm90, %v65, 0
  %v248 = vsel %vm90, %v66, 0
  %v251 = vsel %vm90, %v67, 0
  %v254 = vsel %vm90, %v68, 0
  %v257 = vsel %vm90, %v69, 0
  %v260 = vsel %vm90, %v70, 0
  %v263 = vsel %vm90, %v71, 0
  %v266 = vsel %vm90, %v72, 0
  %v269 = vsel %vm90, %v73, 0
  %v272 = vsel %vm90, %v74, 0
  %v275 = vsel %vm90, %v75, 0
  %v278 = vsel %vm90, %v76, 0
  %v281 = vsel %vm90, %v77, 0
  %283 = vmatpush.msra.mxu0 0.0
  %284 = vmatpush.msra.mxu0 0.0
  %285 = vmatpush.msra.mxu0 0.0
  %286 = vmatpush.msra.mxu0 0.0
  %287 = vmatpush.msra.mxu0 0.0
  %288 = vmatpush.msra.mxu0 0.0
  %289 = vmatpush.msra.mxu0 0.0
  %290 = vmatpush.msra.mxu0 0.0
  %291 = vmatpush.msra.mxu0 %v85
  %292 = vmatpush.msra.mxu0 %v84
  %293 = vmatpush.msra.mxu0 %v83
  %294 = vmatpush.msra.mxu0 %v82
  %295 = vmatpush.msra.mxu0 %v81
  %296 = vmatpush.msra.mxu0 %v80
  %297 = vmatpush.msra.mxu0 %v79
  %298 = vmatpush.msra.mxu0 %v78
  %299 = vmatmul.f32.gmra.mxu0 %v92
  %v300 = vpop.f32.mrf.mxu0
  %v301 = vadd.f32 %v88, %v300
  %302 = vmatmul.f32.gmra.mxu0 %v95
  %v303 = vpop.f32.mrf.mxu0
  %v304 = vadd.f32 %v88, %v303
  %305 = vmatmul.f32.gmra.mxu0 %v98
  %v306 = vpop.f32.mrf.mxu0
  %v307 = vadd.f32 %v88, %v306
  %308 = vmatmul.f32.gmra.mxu0 %v101
  %v309 = vpop.f32.mrf.mxu0
  %v310 = vadd.f32 %v88, %v309
  %311 = vmatmul.f32.gmra.mxu0 %v104
  %v312 = vpop.f32.mrf.mxu0
  %v313 = vadd.f32 %v88, %v312
  %314 = vmatmul.f32.gmra.mxu0 %v107
  %v315 = vpop.f32.mrf.mxu0
  %v316 = vadd.f32 %v88, %v315
  %317 = vmatmul.f32.gmra.mxu0 %v110
  %v318 = vpop.f32.mrf.mxu0
  %v319 = vadd.f32 %v88, %v318
  %320 = vmatmul.f32.gmra.mxu0 %v113
  %v321 = vpop.f32.mrf.mxu0
  %v322 = vadd.f32 %v88, %v321
  %323 = vmatmul.f32.gmra.mxu0 %v116
  %v324 = vpop.f32.mrf.mxu0
  %v325 = vadd.f32 %v88, %v324
  %326 = vmatmul.f32.gmra.mxu0 %v119
  %v327 = vpop.f32.mrf.mxu0
  %v328 = vadd.f32 %v88, %v327
  %329 = vmatmul.f32.gmra.mxu0 %v122
  %v330 = vpop.f32.mrf.mxu0
  %v331 = vadd.f32 %v88, %v330
  %332 = vmatmul.f32.gmra.mxu0 %v125
  %v333 = vpop.f32.mrf.mxu0
  %v334 = vadd.f32 %v88, %v333
  %335 = vmatmul.f32.gmra.mxu0 %v128
  %v336 = vpop.f32.mrf.mxu0
  %v337 = vadd.f32 %v88, %v336
  %338 = vmatmul.f32.gmra.mxu0 %v131
  %v339 = vpop.f32.mrf.mxu0
  %v340 = vadd.f32 %v88, %v339
  %341 = vmatmul.f32.gmra.mxu0 %v134
  %v342 = vpop.f32.mrf.mxu0
  %v343 = vadd.f32 %v88, %v342
  %344 = vmatmul.f32.gmra.mxu0 %v137
  %v345 = vpop.f32.mrf.mxu0
  %v346 = vadd.f32 %v88, %v345
  %347 = vmatmul.f32.gmra.mxu0 %v140
  %v348 = vpop.f32.mrf.mxu0
  %v349 = vadd.f32 %v88, %v348
  %350 = vmatmul.f32.gmra.mxu0 %v143
  %v351 = vpop.f32.mrf.mxu0
  %v352 = vadd.f32 %v88, %v351
  %353 = vmatmul.f32.gmra.mxu0 %v146
  %v354 = vpop.f32.mrf.mxu0
  %v355 = vadd.f32 %v88, %v354
  %356 = vmatmul.f32.gmra.mxu0 %v149
  %v357 = vpop.f32.mrf.mxu0
  %v358 = vadd.f32 %v88, %v357
  %359 = vmatmul.f32.gmra.mxu0 %v152
  %v360 = vpop.f32.mrf.mxu0
  %v361 = vadd.f32 %v88, %v360
  %362 = vmatmul.f32.gmra.mxu0 %v155
  %v363 = vpop.f32.mrf.mxu0
  %v364 = vadd.f32 %v88, %v363
  %365 = vmatmul.f32.gmra.mxu0 %v158
  %v366 = vpop.f32.mrf.mxu0
  %v367 = vadd.f32 %v88, %v366
  %368 = vmatmul.f32.gmra.mxu0 %v161
  %v369 = vpop.f32.mrf.mxu0
  %v370 = vadd.f32 %v88, %v369
  %371 = vmatmul.f32.gmra.mxu0 %v164
  %v372 = vpop.f32.mrf.mxu0
  %v373 = vadd.f32 %v88, %v372
  %374 = vmatmul.f32.gmra.mxu0 %v167
  %v375 = vpop.f32.mrf.mxu0
  %v376 = vadd.f32 %v88, %v375
  %377 = vmatmul.f32.gmra.mxu0 %v170
  %v378 = vpop.f32.mrf.mxu0
  %v379 = vadd.f32 %v88, %v378
  %380 = vmatmul.f32.gmra.mxu0 %v173
  %v381 = vpop.f32.mrf.mxu0
  %v382 = vadd.f32 %v88, %v381
  %383 = vmatmul.f32.gmra.mxu0 %v176
  %v384 = vpop.f32.mrf.mxu0
  %v385 = vadd.f32 %v88, %v384
  %386 = vmatmul.f32.gmra.mxu0 %v179
  %v387 = vpop.f32.mrf.mxu0
  %v388 = vadd.f32 %v88, %v387
  %389 = vmatmul.f32.gmra.mxu0 %v182
  %v390 = vpop.f32.mrf.mxu0
  %v391 = vadd.f32 %v88, %v390
  %392 = vmatmul.f32.gmra.mxu0 %v185
  %v393 = vpop.f32.mrf.mxu0
  %v394 = vadd.f32 %v88, %v393
  %395 = vmatmul.f32.gmra.mxu0 %v188
  %v396 = vpop.f32.mrf.mxu0
  %v397 = vadd.f32 %v88, %v396
  %398 = vmatmul.f32.gmra.mxu0 %v191
  %v399 = vpop.f32.mrf.mxu0
  %v400 = vadd.f32 %v88, %v399
  %401 = vmatmul.f32.gmra.mxu0 %v194
  %v402 = vpop.f32.mrf.mxu0
  %v403 = vadd.f32 %v88, %v402
  %404 = vmatmul.f32.gmra.mxu0 %v197
  %v405 = vpop.f32.mrf.mxu0
  %v406 = vadd.f32 %v88, %v405
  %407 = vmatmul.f32.gmra.mxu0 %v200
  %v408 = vpop.f32.mrf.mxu0
  %v409 = vadd.f32 %v88, %v408
  %410 = vmatmul.f32.gmra.mxu0 %v203
  %v411 = vpop.f32.mrf.mxu0
  %v412 = vadd.f32 %v88, %v411
  %413 = vmatmul.f32.gmra.mxu0 %v206
  %v414 = vpop.f32.mrf.mxu0
  %v415 = vadd.f32 %v88, %v414
  %416 = vmatmul.f32.gmra.mxu0 %v209
  %v417 = vpop.f32.mrf.mxu0
  %v418 = vadd.f32 %v88, %v417
  %419 = vmatmul.f32.gmra.mxu0 %v212
  %v420 = vpop.f32.mrf.mxu0
  %v421 = vadd.f32 %v88, %v420
  %422 = vmatmul.f32.gmra.mxu0 %v215
  %v423 = vpop.f32.mrf.mxu0
  %v424 = vadd.f32 %v88, %v423
  %425 = vmatmul.f32.gmra.mxu0 %v218
  %v426 = vpop.f32.mrf.mxu0
  %v427 = vadd.f32 %v88, %v426
  %428 = vmatmul.f32.gmra.mxu0 %v221
  %v429 = vpop.f32.mrf.mxu0
  %v430 = vadd.f32 %v88, %v429
  %431 = vmatmul.f32.gmra.mxu0 %v224
  %v432 = vpop.f32.mrf.mxu0
  %v433 = vadd.f32 %v88, %v432
  %434 = vmatmul.f32.gmra.mxu0 %v227
  %v435 = vpop.f32.mrf.mxu0
  %v436 = vadd.f32 %v88, %v435
  %437 = vmatmul.f32.gmra.mxu0 %v230
  %v438 = vpop.f32.mrf.mxu0
  %v439 = vadd.f32 %v88, %v438
  %440 = vmatmul.f32.gmra.mxu0 %v233
  %v441 = vpop.f32.mrf.mxu0
  %v442 = vadd.f32 %v88, %v441
  %443 = vmatmul.f32.gmra.mxu0 %v236
  %v444 = vpop.f32.mrf.mxu0
  %v445 = vadd.f32 %v88, %v444
  %446 = vmatmul.f32.gmra.mxu0 %v239
  %v447 = vpop.f32.mrf.mxu0
  %v448 = vadd.f32 %v88, %v447
  %449 = vmatmul.f32.gmra.mxu0 %v242
  %v450 = vpop.f32.mrf.mxu0
  %v451 = vadd.f32 %v88, %v450
  %452 = vmatmul.f32.gmra.mxu0 %v245
  %v453 = vpop.f32.mrf.mxu0
  %v454 = vadd.f32 %v88, %v453
  %455 = vmatmul.f32.gmra.mxu0 %v248
  %v456 = vpop.f32.mrf.mxu0
  %v457 = vadd.f32 %v88, %v456
  %458 = vmatmul.f32.gmra.mxu0 %v251
  %v459 = vpop.f32.mrf.mxu0
  %v460 = vadd.f32 %v88, %v459
  %461 = vmatmul.f32.gmra.mxu0 %v254
  %v462 = vpop.f32.mrf.mxu0
  %v463 = vadd.f32 %v88, %v462
  %464 = vmatmul.f32.gmra.mxu0 %v257
  %v465 = vpop.f32.mrf.mxu0
  %v466 = vadd.f32 %v88, %v465
  %467 = vmatmul.f32.gmra.mxu0 %v260
  %v468 = vpop.f32.mrf.mxu0
  %v469 = vadd.f32 %v88, %v468
  %470 = vmatmul.f32.gmra.mxu0 %v263
  %v471 = vpop.f32.mrf.mxu0
  %v472 = vadd.f32 %v88, %v471
  %473 = vmatmul.f32.gmra.mxu0 %v266
  %v474 = vpop.f32.mrf.mxu0
  %v475 = vadd.f32 %v88, %v474
  %476 = vmatmul.f32.gmra.mxu0 %v269
  %v477 = vpop.f32.mrf.mxu0
  %v478 = vadd.f32 %v88, %v477
  %479 = vmatmul.f32.gmra.mxu0 %v272
  %v480 = vpop.f32.mrf.mxu0
  %v481 = vadd.f32 %v88, %v480
  %482 = vmatmul.f32.gmra.mxu0 %v275
  %v483 = vpop.f32.mrf.mxu0
  %v484 = vadd.f32 %v88, %v483
  %485 = vmatmul.f32.gmra.mxu0 %v278
  %v486 = vpop.f32.mrf.mxu0
  %v487 = vadd.f32 %v88, %v486
  %488 = vmatmul.f32.gmra.mxu0 %v281
  %v489 = vpop.f32.mrf.mxu0
  %v490 = vadd.f32 %v88, %v489
  %491 = vdwg.mxu0
  %vm492 = vcmask 785408
  %493 = vst.msk [vmem:[%s3] sm:$0xff] %vm492, %v301
  %494 = vst.msk [vmem:[%s3 + $0x8] sm:$0xff] %vm492, %v304
  %495 = vst.msk [vmem:[%s3 + $0x10] sm:$0xff] %vm492, %v307
  %496 = vst.msk [vmem:[%s3 + $0x18] sm:$0xff] %vm492, %v310
  %497 = vst.msk [vmem:[%s3 + $0x20] sm:$0xff] %vm492, %v313
  %498 = vst.msk [vmem:[%s3 + $0x28] sm:$0xff] %vm492, %v316
  %499 = vst.msk [vmem:[%s3 + $0x30] sm:$0xff] %vm492, %v319
  %500 = vst.msk [vmem:[%s3 + $0x38] sm:$0xff] %vm492, %v322
  %501 = vst.msk [vmem:[%s3 + $0x40] sm:$0xff] %vm492, %v325
  %502 = vst.msk [vmem:[%s3 + $0x48] sm:$0xff] %vm492, %v328
  %503 = vst.msk [vmem:[%s3 + $0x50] sm:$0xff] %vm492, %v331
  %504 = vst.msk [vmem:[%s3 + $0x58] sm:$0xff] %vm492, %v334
  %505 = vst.msk [vmem:[%s3 + $0x60] sm:$0xff] %vm492, %v337
  %506 = vst.msk [vmem:[%s3 + $0x68] sm:$0xff] %vm492, %v340
  %507 = vst.msk [vmem:[%s3 + $0x70] sm:$0xff] %vm492, %v343
  %508 = vst.msk [vmem:[%s3 + $0x78] sm:$0xff] %vm492, %v346
  %509 = vst.msk [vmem:[%s3 + $0x80] sm:$0xff] %vm492, %v349
  %510 = vst.msk [vmem:[%s3 + $0x88] sm:$0xff] %vm492, %v352
  %511 = vst.msk [vmem:[%s3 + $0x90] sm:$0xff] %vm492, %v355
  %512 = vst.msk [vmem:[%s3 + $0x98] sm:$0xff] %vm492, %v358
  %513 = vst.msk [vmem:[%s3 + $0xa0] sm:$0xff] %vm492, %v361
  %514 = vst.msk [vmem:[%s3 + $0xa8] sm:$0xff] %vm492, %v364
  %515 = vst.msk [vmem:[%s3 + $0xb0] sm:$0xff] %vm492, %v367
  %516 = vst.msk [vmem:[%s3 + $0xb8] sm:$0xff] %vm492, %v370
  %517 = vst.msk [vmem:[%s3 + $0xc0] sm:$0xff] %vm492, %v373
  %518 = vst.msk [vmem:[%s3 + $0xc8] sm:$0xff] %vm492, %v376
  %519 = vst.msk [vmem:[%s3 + $0xd0] sm:$0xff] %vm492, %v379
  %520 = vst.msk [vmem:[%s3 + $0xd8] sm:$0xff] %vm492, %v382
  %521 = vst.msk [vmem:[%s3 + $0xe0] sm:$0xff] %vm492, %v385
  %522 = vst.msk [vmem:[%s3 + $0xe8] sm:$0xff] %vm492, %v388
  %523 = vst.msk [vmem:[%s3 + $0xf0] sm:$0xff] %vm492, %v391
  %524 = vst.msk [vmem:[%s3 + $0xf8] sm:$0xff] %vm492, %v394
  %525 = vst.msk [vmem:[%s3 + $0x100] sm:$0xff] %vm492, %v397
  %526 = vst.msk [vmem:[%s3 + $0x108] sm:$0xff] %vm492, %v400
  %527 = vst.msk [vmem:[%s3 + $0x110] sm:$0xff] %vm492, %v403
  %528 = vst.msk [vmem:[%s3 + $0x118] sm:$0xff] %vm492, %v406
  %529 = vst.msk [vmem:[%s3 + $0x120] sm:$0xff] %vm492, %v409
  %530 = vst.msk [vmem:[%s3 + $0x128] sm:$0xff] %vm492, %v412
  %531 = vst.msk [vmem:[%s3 + $0x130] sm:$0xff] %vm492, %v415
  %532 = vst.msk [vmem:[%s3 + $0x138] sm:$0xff] %vm492, %v418
  %533 = vst.msk [vmem:[%s3 + $0x140] sm:$0xff] %vm492, %v421
  %534 = vst.msk [vmem:[%s3 + $0x148] sm:$0xff] %vm492, %v424
  %535 = vst.msk [vmem:[%s3 + $0x150] sm:$0xff] %vm492, %v427
  %536 = vst.msk [vmem:[%s3 + $0x158] sm:$0xff] %vm492, %v430
  %537 = vst.msk [vmem:[%s3 + $0x160] sm:$0xff] %vm492, %v433
  %538 = vst.msk [vmem:[%s3 + $0x168] sm:$0xff] %vm492, %v436
  %539 = vst.msk [vmem:[%s3 + $0x170] sm:$0xff] %vm492, %v439
  %540 = vst.msk [vmem:[%s3 + $0x178] sm:$0xff] %vm492, %v442
  %541 = vst.msk [vmem:[%s3 + $0x180] sm:$0xff] %vm492, %v445
  %542 = vst.msk [vmem:[%s3 + $0x188] sm:$0xff] %vm492, %v448
  %543 = vst.msk [vmem:[%s3 + $0x190] sm:$0xff] %vm492, %v451
  %544 = vst.msk [vmem:[%s3 + $0x198] sm:$0xff] %vm492, %v454
  %545 = vst.msk [vmem:[%s3 + $0x1a0] sm:$0xff] %vm492, %v457
  %546 = vst.msk [vmem:[%s3 + $0x1a8] sm:$0xff] %vm492, %v460
  %547 = vst.msk [vmem:[%s3 + $0x1b0] sm:$0xff] %vm492, %v463
  %548 = vst.msk [vmem:[%s3 + $0x1b8] sm:$0xff] %vm492, %v466
  %549 = vst.msk [vmem:[%s3 + $0x1c0] sm:$0xff] %vm492, %v469
  %550 = vst.msk [vmem:[%s3 + $0x1c8] sm:$0xff] %vm492, %v472
  %551 = vst.msk [vmem:[%s3 + $0x1d0] sm:$0xff] %vm492, %v475
  %552 = vst.msk [vmem:[%s3 + $0x1d8] sm:$0xff] %vm492, %v478
  %553 = vst.msk [vmem:[%s3 + $0x1e0] sm:$0xff] %vm492, %v481
  %554 = vst.msk [vmem:[%s3 + $0x1e8] sm:$0xff] %vm492, %v484
  %555 = vst.msk [vmem:[%s3 + $0x1f0] sm:$0xff] %vm492, %v487
  %556 = vst.msk [vmem:[%s3 + $0x1f8] sm:$0xff] %vm492, %v490
  // Predicated region
  $region14: #{forward.4} parent=0 // pred_check
    _
  $region15: #{forward.4} parent=0 // pred_check_branch
    %558 = sbr.rel (0) target = $region17
  $region16: #{forward.4} parent=0 // pred_region
    _
  $region17: #{forward.4} parent=0 // pred_fallthru
    _
  // Predicated region
  $region18: #{forward.4} parent=0 // pred_check
    _
  $region19: #{forward.4} parent=0 // pred_check_branch
    %560 = sbr.rel (0) target = $region21
  $region20: #{forward.4} parent=0 // pred_region
    _
  $region21: #{forward.4} parent=0 // pred_fallthru
    _

// kernel: forward.3
$region0: #{forward.3}
  #allocation0 [shape = 'u32[]', space=smem, size = 0x4, offset = 0x4, fixed_abs, tag = 'smem constant byte address 0x4 - core index']
  #allocation1 [shape = 'u32[72,128]{1,0:T(1,128)}', space=vmem, size = 0x9000, scoped, tag = 'internal scratch']
  %s0 = inlined_call_operand.vmem [shape: f32[2,256,3], index: 0, kind: input, shape index: {}]
  %s1 = inlined_call_operand.vmem [shape: f32[3,32], index: 1, kind: input, shape index: {}]
  %s2 = inlined_call_operand.vmem [shape: f32[1,32], index: 2, kind: input, shape index: {}]
  %s3 = inlined_call_operand.vmem [shape: f32[3,32], index: 3, kind: input, shape index: {}]
  %s4 = inlined_call_operand.vmem [shape: f32[1,32], index: 4, kind: input, shape index: {}]
  %s5 = inlined_call_operand.vmem [shape: f32[2,256,32], index: 5, kind: output, shape index: {0}]
  %s6 = inlined_call_operand.vmem [shape: f32[2,1,32], index: 6, kind: output, shape index: {1}]
  %7 = xla_tuple %s5, %s6
  %s8 = sld [smem:[#allocation0]]
  $region65: #{forward.3} parent=0
    _
  %s10 = ssub.s32 1, %s8
  %s11 = scalar_select 0, %s10, %s8
  loop: start=0, step=1, limit=4
  $region2: #{forward.3} parent=0 // loop_pre_header
    _
  $region3: #{forward.3} parent=0 // loop_header
    %s13 = sphi 0, %s17
    %p14 = scmp.ge.s32.totalorder %s13, 4
    %s20 = sphi 0, %s32
    %s21 = sphi 0, %s28
    %s22 = sphi 0, %s20
    %s23 = sphi 0, %s21
    %s24 = sphi 0, %s22
    %s25 = sphi 0, %s23
    %s37 = sphi 0, %s39
    %s40 = sphi 0, %s37
    %s41 = sphi 0, %s40
    %s57 = sphi 0, %s41
    %s61 = sphi 0, %s61
    %s63 = sphi 0, %s61
    %s64 = sphi 0, %s63
    %s78 = sphi 0, %s64
    %s82 = sphi 0, %s82
    %s84 = sphi 0, %s82
    %s85 = sphi 0, %s84
    %s99 = sphi 0, %s85
    %s103 = sphi 0, %s103
    %s105 = sphi 0, %s103
    %s106 = sphi 0, %s105
    %s120 = sphi 0, %s106
    %s124 = sphi 0, %s124
    %s126 = sphi 0, %s124
    %s127 = sphi 0, %s126
    %s141 = sphi 0, %s127
    %s149 = sphi 0, %s151
    %s152 = sphi 0, %s149
    %s153 = sphi 0, %s152
    %s169 = sphi 0, %s153
    %s175 = sphi 0, %s177
    %s178 = sphi 0, %s175
    %s179 = sphi 0, %s178
    %s195 = sphi 0, %s179
  $region4: #{forward.3} parent=0 // loop_header_branch
    %16 = sbr.rel (%p14) target = $region8
  $region5: #{forward.3} parent=0 // loop_body
    %s18 = ssub.s32 %s13, 1
    %s19 = ssub.s32 %s13, 2
    %s26 = sadd.s32 1, %s21
    %p27 = scmp.ge.s32.totalorder %s26, 1
    %s28 = scalar_select %p27, 0, %s26
    %s29 = sadd.s32 1, %s20
    %s30 = scalar_select %p27, %s29, %s20
    %p31 = scmp.ge.s32.totalorder %s30, 2
    %s32 = scalar_select %p31, 0, %s30
    %s33 = ssub.s32 %s20, %s32
    %s34 = ssub.s32 %s21, %s28
    %s35 = sor.u32 %s33, %s34
    %p36 = scmp.eq.s32.totalorder %s35, 0
    %s38 = sadd.s32 %s37, 1
    %s39 = scalar_select %p36, %s37, %s38
    %p42 = pneg %p36
    %p43 = scmp.eq.s32.totalorder %s13, 1
    %p44 = por %p42, %p43
    %p45 = scmp.ne.s32.totalorder %s37, %s40
    %p46 = scmp.eq.s32.totalorder %s13, 0
    %p47 = por %p45, %p46
    %p48 = scmp.ne.s32.totalorder %s37, %s40
    %p49 = scmp.eq.s32.totalorder %s18, 1
    %p50 = por %p48, %p49
    %p51 = scmp.ne.s32.totalorder %s40, %s41
    %p52 = scmp.eq.s32.totalorder %s18, 0
    %p53 = por %p51, %p52
    %p54 = scmp.ne.s32.totalorder %s40, %s41
    %p55 = scmp.eq.s32.totalorder %s19, 1
    %p56 = por %p54, %p55
    %p58 = scmp.ne.s32.totalorder %s41, %s57
    %p59 = scmp.eq.s32.totalorder %s19, 0
    %p60 = por %p58, %p59
    %s62 = sadd.s32 %s61, 1
    %p65 = scmp.eq.s32.totalorder %s13, 1
    %p66 = scmp.ne.s32.totalorder %s61, %s63
    %p67 = scmp.eq.s32.totalorder %s13, 0
    %p68 = por %p66, %p67
    %p69 = scmp.ne.s32.totalorder %s61, %s63
    %p70 = scmp.eq.s32.totalorder %s18, 1
    %p71 = por %p69, %p70
    %p72 = scmp.ne.s32.totalorder %s63, %s64
    %p73 = scmp.eq.s32.totalorder %s18, 0
    %p74 = por %p72, %p73
    %p75 = scmp.ne.s32.totalorder %s63, %s64
    %p76 = scmp.eq.s32.totalorder %s19, 1
    %p77 = por %p75, %p76
    %p79 = scmp.ne.s32.totalorder %s64, %s78
    %p80 = scmp.eq.s32.totalorder %s19, 0
    %p81 = por %p79, %p80
    %s83 = sadd.s32 %s82, 1
    %p86 = scmp.eq.s32.totalorder %s13, 1
    %p87 = scmp.ne.s32.totalorder %s82, %s84
    %p88 = scmp.eq.s32.totalorder %s13, 0
    %p89 = por %p87, %p88
    %p90 = scmp.ne.s32.totalorder %s82, %s84
    %p91 = scmp.eq.s32.totalorder %s18, 1
    %p92 = por %p90, %p91
    %p93 = scmp.ne.s32.totalorder %s84, %s85
    %p94 = scmp.eq.s32.totalorder %s18, 0
    %p95 = por %p93, %p94
    %p96 = scmp.ne.s32.totalorder %s84, %s85
    %p97 = scmp.eq.s32.totalorder %s19, 1
    %p98 = por %p96, %p97
    %p100 = scmp.ne.s32.totalorder %s85, %s99
    %p101 = scmp.eq.s32.totalorder %s19, 0
    %p102 = por %p100, %p101
    %s104 = sadd.s32 %s103, 1
    %p107 = scmp.eq.s32.totalorder %s13, 1
    %p108 = scmp.ne.s32.totalorder %s103, %s105
    %p109 = scmp.eq.s32.totalorder %s13, 0
    %p110 = por %p108, %p109
    %p111 = scmp.ne.s32.totalorder %s103, %s105
    %p112 = scmp.eq.s32.totalorder %s18, 1
    %p113 = por %p111, %p112
    %p114 = scmp.ne.s32.totalorder %s105, %s106
    %p115 = scmp.eq.s32.totalorder %s18, 0
    %p116 = por %p114, %p115
    %p117 = scmp.ne.s32.totalorder %s105, %s106
    %p118 = scmp.eq.s32.totalorder %s19, 1
    %p119 = por %p117, %p118
    %p121 = scmp.ne.s32.totalorder %s106, %s120
    %p122 = scmp.eq.s32.totalorder %s19, 0
    %p123 = por %p121, %p122
    %s125 = sadd.s32 %s124, 1
    %p128 = scmp.eq.s32.totalorder %s13, 1
    %p129 = scmp.ne.s32.totalorder %s124, %s126
    %p130 = scmp.eq.s32.totalorder %s13, 0
    %p131 = por %p129, %p130
    %p132 = scmp.ne.s32.totalorder %s124, %s126
    %p133 = scmp.eq.s32.totalorder %s18, 1
    %p134 = por %p132, %p133
    %p135 = scmp.ne.s32.totalorder %s126, %s127
    %p136 = scmp.eq.s32.totalorder %s18, 0
    %p137 = por %p135, %p136
    %p138 = scmp.ne.s32.totalorder %s126, %s127
    %p139 = scmp.eq.s32.totalorder %s19, 1
    %p140 = por %p138, %p139
    %p142 = scmp.ne.s32.totalorder %s127, %s141
    %p143 = scmp.eq.s32.totalorder %s19, 0
    %p144 = por %p142, %p143
    %s145 = ssub.s32 %s20, %s32
    %s146 = ssub.s32 %s21, %s28
    %s147 = sor.u32 %s145, %s146
    %p148 = scmp.eq.s32.totalorder %s147, 0
    %s150 = sadd.s32 %s149, 1
    %s151 = scalar_select %p148, %s149, %s150
    %p154 = pneg %p148
    %p155 = scmp.eq.s32.totalorder %s13, 1
    %p156 = por %p154, %p155
    %p157 = scmp.ne.s32.totalorder %s149, %s152
    %p158 = scmp.eq.s32.totalorder %s13, 0
    %p159 = por %p157, %p158
    %p160 = scmp.ne.s32.totalorder %s149, %s152
    %p161 = scmp.eq.s32.totalorder %s18, 1
    %p162 = por %p160, %p161
    %p163 = scmp.ne.s32.totalorder %s152, %s153
    %p164 = scmp.eq.s32.totalorder %s18, 0
    %p165 = por %p163, %p164
    %p166 = scmp.ne.s32.totalorder %s152, %s153
    %p167 = scmp.eq.s32.totalorder %s19, 1
    %p168 = por %p166, %p167
    %p170 = scmp.ne.s32.totalorder %s153, %s169
    %p171 = scmp.eq.s32.totalorder %s19, 0
    %p172 = por %p170, %p171
    %s173 = ssub.s32 %s20, %s32
    %p174 = scmp.eq.s32.totalorder %s173, 0
    %s176 = sadd.s32 %s175, 1
    %s177 = scalar_select %p174, %s175, %s176
    %p180 = pneg %p174
    %p181 = scmp.eq.s32.totalorder %s13, 1
    %p182 = por %p180, %p181
    %p183 = scmp.ne.s32.totalorder %s175, %s178
    %p184 = scmp.eq.s32.totalorder %s13, 0
    %p185 = por %p183, %p184
    %p186 = scmp.ne.s32.totalorder %s175, %s178
    %p187 = scmp.eq.s32.totalorder %s18, 1
    %p188 = por %p186, %p187
    %p189 = scmp.ne.s32.totalorder %s178, %s179
    %p190 = scmp.eq.s32.totalorder %s18, 0
    %p191 = por %p189, %p190
    %p192 = scmp.ne.s32.totalorder %s178, %s179
    %p193 = scmp.eq.s32.totalorder %s19, 1
    %p194 = por %p192, %p193
    %p196 = scmp.ne.s32.totalorder %s179, %s195
    %p197 = scmp.eq.s32.totalorder %s19, 0
    %p198 = por %p196, %p197
    %p199 = scmp.le.s32.totalorder 1, %s13
    %p200 = scmp.lt.s32.totalorder %s13, 3
    %p201 = pnand %p199, %p200
    %p202 = pneg %p201
    // Predicated region
    $region9: #{forward.3} parent=5 // pred_check
      _
    $region10: #{forward.3} parent=5 // pred_check_branch
      %204 = sbr.rel (%p201) target = $region12
    $region11: #{forward.3} parent=5 // pred_region
      %s205 = ssub.s32 %s13, 1
      // Predicated region
      $region13: #{forward.3} parent=11 // pred_check
        %p206 = pneg %p74
      $region14: #{forward.3} parent=11 // pred_check_branch
        %208 = sbr.rel (%p206) target = $region16
      $region15: #{forward.3} parent=11 // pred_region
        _
      $region16: #{forward.3} parent=11 // pred_fallthru
        _
      // Predicated region
      $region17: #{forward.3} parent=11 // pred_check
        %p209 = pneg %p95
      $region18: #{forward.3} parent=11 // pred_check_branch
        %211 = sbr.rel (%p209) target = $region20
      $region19: #{forward.3} parent=11 // pred_region
        _
      $region20: #{forward.3} parent=11 // pred_fallthru
        _
      // Predicated region
      $region21: #{forward.3} parent=11 // pred_check
        %p212 = pneg %p116
      $region22: #{forward.3} parent=11 // pred_check_branch
        %214 = sbr.rel (%p212) target = $region24
      $region23: #{forward.3} parent=11 // pred_region
        _
      $region24: #{forward.3} parent=11 // pred_fallthru
        _
      // Predicated region
      $region25: #{forward.3} parent=11 // pred_check
        %p215 = pneg %p137
      $region26: #{forward.3} parent=11 // pred_check_branch
        %217 = sbr.rel (%p215) target = $region28
      $region27: #{forward.3} parent=11 // pred_region
        _
      $region28: #{forward.3} parent=11 // pred_fallthru
        _
    $region12: #{forward.3} parent=5 // pred_fallthru
      _
    %p218 = scmp.lt.s32.totalorder %s13, 2
    // Predicated region
    $region29: #{forward.3} parent=5 // pred_check
      %p219 = pneg %p218
    $region30: #{forward.3} parent=5 // pred_check_branch
      %221 = sbr.rel (%p219) target = $region32
    $region31: #{forward.3} parent=5 // pred_region
      // Predicated region
      $region33: #{forward.3} parent=31 // pred_check
        %p222 = pneg %p47
      $region34: #{forward.3} parent=31 // pred_check_branch
        %224 = sbr.rel (%p222) target = $region36
      $region35: #{forward.3} parent=31 // pred_region
        %s225 = smul.u32 32, %s21
        %p226 = scmp.lt.s32.totalorder %s20, 1
        %s227 = scalar_select %p226, %s20, 1
        %p228 = scmp.lt.s32.totalorder %s225, 31
        %s229 = scalar_select %p228, %s225, 31
        %s230 = smul.addr %s227, 32
        %s231 = sadd.s32 %s229, %s230
        %s232 = smul.addr %s231, 8
        %s233 = scalar_lea.vmem %s0, %s232
        %s234 = smul.u32 32, %s21
      $region36: #{forward.3} parent=31 // pred_fallthru
        _
    $region32: #{forward.3} parent=5 // pred_fallthru
      _
    %p235 = scmp.le.s32.totalorder 1, %s13
    %p236 = scmp.lt.s32.totalorder %s13, 3
    %p237 = pnand %p235, %p236
    %p238 = pneg %p237
    // Predicated region
    $region37: #{forward.3} parent=5 // pred_check
      _
    $region38: #{forward.3} parent=5 // pred_check_branch
      %240 = sbr.rel (%p237) target = $region40
    $region39: #{forward.3} parent=5 // pred_region
      %s241 = ssub.s32 %s13, 1
      %s242 = smul.u32 32, %s23
      %p243 = scmp.lt.s32.totalorder %s22, 1
      %s244 = scalar_select %p243, %s22, 1
      %p245 = scmp.lt.s32.totalorder %s242, 31
      %s246 = scalar_select %p245, %s242, 31
      %s247 = smul.addr %s244, 32
      %s248 = sadd.s32 %s246, %s247
      %s249 = smul.addr %s248, 8
      %s250 = scalar_lea.vmem %s0, %s249
      %p251 = pneg %p53
      %p252 = pneg %p50
      %p253 = pneg %p74
      %p254 = pneg %p71
      %p255 = pneg %p95
      %p256 = pneg %p92
      %p257 = pneg %p116
      %p258 = pneg %p113
      %p259 = pneg %p137
      %p260 = pneg %p134
      %p261 = pneg %p165
      %p262 = pneg %p162
      %s263 = smul.u32 32, %s23
      %p264 = scmp.lt.s32.totalorder %s22, 1
      %s265 = scalar_select %p264, %s22, 1
      %p266 = scmp.lt.s32.totalorder %s263, 31
      %s267 = scalar_select %p266, %s263, 31
      %s268 = smul.addr %s265, 32
      %s269 = sadd.s32 %s267, %s268
      %s270 = smul.addr %s269, 8
      %s271 = scalar_lea.vmem %s5, %s270
      %p272 = pneg %p191
      %p273 = pneg %p188
      %p274 = scmp.lt.s32.totalorder %s22, 1
      %s275 = scalar_select %p274, %s22, 1
      %s276 = scalar_lea.vmem %s6, %s275
      %s277 = smul.u32 32, %s23
      %p278 = scmp.lt.s32.totalorder %s22, 1
      %s279 = scalar_select %p278, %s22, 1
      %p280 = scmp.lt.s32.totalorder %s277, 31
      %s281 = scalar_select %p280, %s277, 31
      %s282 = smul.addr %s279, 32
      %s283 = sadd.s32 %s281, %s282
      %s284 = smul.addr %s283, 8
      %s285 = scalar_lea.vmem %s0, %s284
      %s286 = smul.u32 32, %s23
      %s287 = smul.u32 32, %s23
      %p288 = scmp.lt.s32.totalorder %s22, 1
      %s289 = scalar_select %p288, %s22, 1
      %p290 = scmp.lt.s32.totalorder %s287, 31
      %s291 = scalar_select %p290, %s287, 31
      %s292 = smul.addr %s289, 32
      %s293 = sadd.s32 %s291, %s292
      %s294 = smul.addr %s293, 8
      %s295 = scalar_lea.vmem %s5, %s294
      %s296 = smul.u32 32, %s23
      %p297 = scmp.lt.s32.totalorder %s22, 1
      %s298 = scalar_select %p297, %s22, 1
      %s299 = scalar_lea.vmem %s6, %s298
      %v300 = vld [vmem:[%s285] sm:$0xff]
      %v301 = vld [vmem:[%s285 + $0x8] sm:$0xff]
      %v302 = vld [vmem:[%s285 + $0x10] sm:$0xff]
      %v303 = vld [vmem:[%s285 + $0x18] sm:$0xff]
      %v304 = vld [vmem:[%s285 + $0x20] sm:$0xff]
      %v305 = vld [vmem:[%s285 + $0x28] sm:$0xff]
      %v306 = vld [vmem:[%s285 + $0x30] sm:$0xff]
      %v307 = vld [vmem:[%s285 + $0x38] sm:$0xff]
      %v308 = vld [vmem:[%s285 + $0x40] sm:$0xff]
      %v309 = vld [vmem:[%s285 + $0x48] sm:$0xff]
      %v310 = vld [vmem:[%s285 + $0x50] sm:$0xff]
      %v311 = vld [vmem:[%s285 + $0x58] sm:$0xff]
      %v312 = vld [vmem:[%s285 + $0x60] sm:$0xff]
      %v313 = vld [vmem:[%s285 + $0x68] sm:$0xff]
      %v314 = vld [vmem:[%s285 + $0x70] sm:$0xff]
      %v315 = vld [vmem:[%s285 + $0x78] sm:$0xff]
      %v316 = vld [vmem:[%s285 + $0x80] sm:$0xff]
      %v317 = vld [vmem:[%s285 + $0x88] sm:$0xff]
      %v318 = vld [vmem:[%s285 + $0x90] sm:$0xff]
      %v319 = vld [vmem:[%s285 + $0x98] sm:$0xff]
      %v320 = vld [vmem:[%s285 + $0xa0] sm:$0xff]
      %v321 = vld [vmem:[%s285 + $0xa8] sm:$0xff]
      %v322 = vld [vmem:[%s285 + $0xb0] sm:$0xff]
      %v323 = vld [vmem:[%s285 + $0xb8] sm:$0xff]
      %v324 = vld [vmem:[%s285 + $0xc0] sm:$0xff]
      %v325 = vld [vmem:[%s285 + $0xc8] sm:$0xff]
      %v326 = vld [vmem:[%s285 + $0xd0] sm:$0xff]
      %v327 = vld [vmem:[%s285 + $0xd8] sm:$0xff]
      %v328 = vld [vmem:[%s285 + $0xe0] sm:$0xff]
      %v329 = vld [vmem:[%s285 + $0xe8] sm:$0xff]
      %v330 = vld [vmem:[%s285 + $0xf0] sm:$0xff]
      %v331 = vld [vmem:[%s285 + $0xf8] sm:$0xff]
      %v332 = vld [vmem:[%s1] sm:$0x7]
      %v333 = vld [vmem:[%s2] sm:$0x1]
      %v335 = vperm.slane %v333, 0
      %vm337 = vcmask 23552
      %v339 = vsel %vm337, %v300, 0
      %v342 = vsel %vm337, %v301, 0
      %v345 = vsel %vm337, %v302, 0
      %v348 = vsel %vm337, %v303, 0
      %v351 = vsel %vm337, %v304, 0
      %v354 = vsel %vm337, %v305, 0
      %v357 = vsel %vm337, %v306, 0
      %v360 = vsel %vm337, %v307, 0
      %v363 = vsel %vm337, %v308, 0
      %v366 = vsel %vm337, %v309, 0
      %v369 = vsel %vm337, %v310, 0
      %v372 = vsel %vm337, %v311, 0
      %v375 = vsel %vm337, %v312, 0
      %v378 = vsel %vm337, %v313, 0
      %v381 = vsel %vm337, %v314, 0
      %v384 = vsel %vm337, %v315, 0
      %v387 = vsel %vm337, %v316, 0
      %v390 = vsel %vm337, %v317, 0
      %v393 = vsel %vm337, %v318, 0
      %v396 = vsel %vm337, %v319, 0
      %v399 = vsel %vm337, %v320, 0
      %v402 = vsel %vm337, %v321, 0
      %v405 = vsel %vm337, %v322, 0
      %v408 = vsel %vm337, %v323, 0
      %v411 = vsel %vm337, %v324, 0
      %v414 = vsel %vm337, %v325, 0
      %v417 = vsel %vm337, %v326, 0
      %v420 = vsel %vm337, %v327, 0
      %v423 = vsel %vm337, %v328, 0
      %v426 = vsel %vm337, %v329, 0
      %v429 = vsel %vm337, %v330, 0
      %v432 = vsel %vm337, %v331, 0
      %vm434 = vcmask 1042432
      %v436 = vsel %vm434, %v332, 0
      %438 = vmatpush.msra.mxu0 0.0
      %439 = vmatpush.msra.mxu0 0.0
      %440 = vmatpush.msra.mxu0 0.0
      %441 = vmatpush.msra.mxu0 0.0
      %442 = vmatpush.msra.mxu0 0.0
      %443 = vmatpush.msra.mxu0 0.0
      %444 = vmatpush.msra.mxu0 0.0
      %445 = vmatpush.msra.mxu0 0.0
      %446 = vmatpush.msra.mxu0 0.0
      %447 = vmatpush.msra.mxu0 0.0
      %448 = vmatpush.msra.mxu0 0.0
      %449 = vmatpush.msra.mxu0 0.0
      %450 = vmatpush.msra.mxu0 0.0
      %451 = vmatpush.msra.mxu0 0.0
      %452 = vmatpush.msra.mxu0 0.0
      %453 = vmatpush.msra.mxu0 %v436
      %454 = vmatmul.f32.gmra.mxu0 %v339
      %v455 = vpop.f32.mrf.mxu0
      %v456 = vadd.f32 %v335, %v455
      %457 = vmatmul.f32.gmra.mxu0 %v342
      %v458 = vpop.f32.mrf.mxu0
      %v459 = vadd.f32 %v335, %v458
      %460 = vmatmul.f32.gmra.mxu0 %v345
      %v461 = vpop.f32.mrf.mxu0
      %v462 = vadd.f32 %v335, %v461
      %463 = vmatmul.f32.gmra.mxu0 %v348
      %v464 = vpop.f32.mrf.mxu0
      %v465 = vadd.f32 %v335, %v464
      %466 = vmatmul.f32.gmra.mxu0 %v351
      %v467 = vpop.f32.mrf.mxu0
      %v468 = vadd.f32 %v335, %v467
      %469 = vmatmul.f32.gmra.mxu0 %v354
      %v470 = vpop.f32.mrf.mxu0
      %v471 = vadd.f32 %v335, %v470
      %472 = vmatmul.f32.gmra.mxu0 %v357
      %v473 = vpop.f32.mrf.mxu0
      %v474 = vadd.f32 %v335, %v473
      %475 = vmatmul.f32.gmra.mxu0 %v360
      %v476 = vpop.f32.mrf.mxu0
      %v477 = vadd.f32 %v335, %v476
      %478 = vmatmul.f32.gmra.mxu0 %v363
      %v479 = vpop.f32.mrf.mxu0
      %v480 = vadd.f32 %v335, %v479
      %481 = vmatmul.f32.gmra.mxu0 %v366
      %v482 = vpop.f32.mrf.mxu0
      %v483 = vadd.f32 %v335, %v482
      %484 = vmatmul.f32.gmra.mxu0 %v369
      %v485 = vpop.f32.mrf.mxu0
      %v486 = vadd.f32 %v335, %v485
      %487 = vmatmul.f32.gmra.mxu0 %v372
      %v488 = vpop.f32.mrf.mxu0
      %v489 = vadd.f32 %v335, %v488
      %490 = vmatmul.f32.gmra.mxu0 %v375
      %v491 = vpop.f32.mrf.mxu0
      %v492 = vadd.f32 %v335, %v491
      %493 = vmatmul.f32.gmra.mxu0 %v378
      %v494 = vpop.f32.mrf.mxu0
      %v495 = vadd.f32 %v335, %v494
      %496 = vmatmul.f32.gmra.mxu0 %v381
      %v497 = vpop.f32.mrf.mxu0
      %v498 = vadd.f32 %v335, %v497
      %499 = vmatmul.f32.gmra.mxu0 %v384
      %v500 = vpop.f32.mrf.mxu0
      %v501 = vadd.f32 %v335, %v500
      %502 = vmatmul.f32.gmra.mxu0 %v387
      %v503 = vpop.f32.mrf.mxu0
      %v504 = vadd.f32 %v335, %v503
      %505 = vmatmul.f32.gmra.mxu0 %v390
      %v506 = vpop.f32.mrf.mxu0
      %v507 = vadd.f32 %v335, %v506
      %508 = vmatmul.f32.gmra.mxu0 %v393
      %v509 = vpop.f32.mrf.mxu0
      %v510 = vadd.f32 %v335, %v509
      %511 = vmatmul.f32.gmra.mxu0 %v396
      %v512 = vpop.f32.mrf.mxu0
      %v513 = vadd.f32 %v335, %v512
      %514 = vmatmul.f32.gmra.mxu0 %v399
      %v515 = vpop.f32.mrf.mxu0
      %v516 = vadd.f32 %v335, %v515
      %517 = vmatmul.f32.gmra.mxu0 %v402
      %v518 = vpop.f32.mrf.mxu0
      %v519 = vadd.f32 %v335, %v518
      %520 = vmatmul.f32.gmra.mxu0 %v405
      %v521 = vpop.f32.mrf.mxu0
      %v522 = vadd.f32 %v335, %v521
      %523 = vmatmul.f32.gmra.mxu0 %v408
      %v524 = vpop.f32.mrf.mxu0
      %v525 = vadd.f32 %v335, %v524
      %526 = vmatmul.f32.gmra.mxu0 %v411
      %v527 = vpop.f32.mrf.mxu0
      %v528 = vadd.f32 %v335, %v527
      %529 = vmatmul.f32.gmra.mxu0 %v414
      %v530 = vpop.f32.mrf.mxu0
      %v531 = vadd.f32 %v335, %v530
      %532 = vmatmul.f32.gmra.mxu0 %v417
      %v533 = vpop.f32.mrf.mxu0
      %v534 = vadd.f32 %v335, %v533
      %535 = vmatmul.f32.gmra.mxu0 %v420
      %v536 = vpop.f32.mrf.mxu0
      %v537 = vadd.f32 %v335, %v536
      %538 = vmatmul.f32.gmra.mxu0 %v423
      %v539 = vpop.f32.mrf.mxu0
      %v540 = vadd.f32 %v335, %v539
      %541 = vmatmul.f32.gmra.mxu0 %v426
      %v542 = vpop.f32.mrf.mxu0
      %v543 = vadd.f32 %v335, %v542
      %544 = vmatmul.f32.gmra.mxu0 %v429
      %v545 = vpop.f32.mrf.mxu0
      %v546 = vadd.f32 %v335, %v545
      %547 = vmatmul.f32.gmra.mxu0 %v432
      %v548 = vpop.f32.mrf.mxu0
      %v549 = vadd.f32 %v335, %v548
      %550 = vdwg.mxu0
      %v551 = vmax.f32 %v456, 0.0
      %v552 = vmax.f32 %v459, 0.0
      %v553 = vmax.f32 %v462, 0.0
      %v554 = vmax.f32 %v465, 0.0
      %v555 = vmax.f32 %v468, 0.0
      %v556 = vmax.f32 %v471, 0.0
      %v557 = vmax.f32 %v474, 0.0
      %v558 = vmax.f32 %v477, 0.0
      %v559 = vmax.f32 %v480, 0.0
      %v560 = vmax.f32 %v483, 0.0
      %v561 = vmax.f32 %v486, 0.0
      %v562 = vmax.f32 %v489, 0.0
      %v563 = vmax.f32 %v492, 0.0
      %v564 = vmax.f32 %v495, 0.0
      %v565 = vmax.f32 %v498, 0.0
      %v566 = vmax.f32 %v501, 0.0
      %v567 = vmax.f32 %v504, 0.0
      %v568 = vmax.f32 %v507, 0.0
      %v569 = vmax.f32 %v510, 0.0
      %v570 = vmax.f32 %v513, 0.0
      %v571 = vmax.f32 %v516, 0.0
      %v572 = vmax.f32 %v519, 0.0
      %v573 = vmax.f32 %v522, 0.0
      %v574 = vmax.f32 %v525, 0.0
      %v575 = vmax.f32 %v528, 0.0
      %v576 = vmax.f32 %v531, 0.0
      %v577 = vmax.f32 %v534, 0.0
      %v578 = vmax.f32 %v537, 0.0
      %v579 = vmax.f32 %v540, 0.0
      %v580 = vmax.f32 %v543, 0.0
      %v581 = vmax.f32 %v546, 0.0
      %v582 = vmax.f32 %v549, 0.0
      %v583 = vld [vmem:[%s3] sm:$0x7]
      %v584 = vld [vmem:[%s4] sm:$0x1]
      %v586 = vperm.slane %v584, 0
      %v589 = vsel %vm434, %v583, 0
      %591 = vmatpush.msra.mxu0 0.0
      %592 = vmatpush.msra.mxu0 0.0
      %593 = vmatpush.msra.mxu0 0.0
      %594 = vmatpush.msra.mxu0 0.0
      %595 = vmatpush.msra.mxu0 0.0
      %596 = vmatpush.msra.mxu0 0.0
      %597 = vmatpush.msra.mxu0 0.0
      %598 = vmatpush.msra.mxu0 0.0
      %599 = vmatpush.msra.mxu0 0.0
      %600 = vmatpush.msra.mxu0 0.0
      %601 = vmatpush.msra.mxu0 0.0
      %602 = vmatpush.msra.mxu0 0.0
      %603 = vmatpush.msra.mxu0 0.0
      %604 = vmatpush.msra.mxu0 0.0
      %605 = vmatpush.msra.mxu0 0.0
      %606 = vmatpush.msra.mxu0 %v589
      %607 = vmatmul.f32.gmra.mxu0 %v339
      %v608 = vpop.f32.mrf.mxu0
      %v609 = vadd.f32 %v586, %v608
      %610 = vmatmul.f32.gmra.mxu0 %v342
      %v611 = vpop.f32.mrf.mxu0
      %v612 = vadd.f32 %v586, %v611
      %613 = vmatmul.f32.gmra.mxu0 %v345
      %v614 = vpop.f32.mrf.mxu0
      %v615 = vadd.f32 %v586, %v614
      %616 = vmatmul.f32.gmra.mxu0 %v348
      %v617 = vpop.f32.mrf.mxu0
      %v618 = vadd.f32 %v586, %v617
      %619 = vmatmul.f32.gmra.mxu0 %v351
      %v620 = vpop.f32.mrf.mxu0
      %v621 = vadd.f32 %v586, %v620
      %622 = vmatmul.f32.gmra.mxu0 %v354
      %v623 = vpop.f32.mrf.mxu0
      %v624 = vadd.f32 %v586, %v623
      %625 = vmatmul.f32.gmra.mxu0 %v357
      %v626 = vpop.f32.mrf.mxu0
      %v627 = vadd.f32 %v586, %v626
      %628 = vmatmul.f32.gmra.mxu0 %v360
      %v629 = vpop.f32.mrf.mxu0
      %v630 = vadd.f32 %v586, %v629
      %631 = vmatmul.f32.gmra.mxu0 %v363
      %v632 = vpop.f32.mrf.mxu0
      %v633 = vadd.f32 %v586, %v632
      %634 = vmatmul.f32.gmra.mxu0 %v366
      %v635 = vpop.f32.mrf.mxu0
      %v636 = vadd.f32 %v586, %v635
      %637 = vmatmul.f32.gmra.mxu0 %v369
      %v638 = vpop.f32.mrf.mxu0
      %v639 = vadd.f32 %v586, %v638
      %640 = vmatmul.f32.gmra.mxu0 %v372
      %v641 = vpop.f32.mrf.mxu0
      %v642 = vadd.f32 %v586, %v641
      %643 = vmatmul.f32.gmra.mxu0 %v375
      %v644 = vpop.f32.mrf.mxu0
      %v645 = vadd.f32 %v586, %v644
      %646 = vmatmul.f32.gmra.mxu0 %v378
      %v647 = vpop.f32.mrf.mxu0
      %v648 = vadd.f32 %v586, %v647
      %649 = vmatmul.f32.gmra.mxu0 %v381
      %v650 = vpop.f32.mrf.mxu0
      %v651 = vadd.f32 %v586, %v650
      %652 = vmatmul.f32.gmra.mxu0 %v384
      %v653 = vpop.f32.mrf.mxu0
      %v654 = vadd.f32 %v586, %v653
      %655 = vmatmul.f32.gmra.mxu0 %v387
      %v656 = vpop.f32.mrf.mxu0
      %v657 = vadd.f32 %v586, %v656
      %658 = vmatmul.f32.gmra.mxu0 %v390
      %v659 = vpop.f32.mrf.mxu0
      %v660 = vadd.f32 %v586, %v659
      %661 = vmatmul.f32.gmra.mxu0 %v393
      %v662 = vpop.f32.mrf.mxu0
      %v663 = vadd.f32 %v586, %v662
      %664 = vmatmul.f32.gmra.mxu0 %v396
      %v665 = vpop.f32.mrf.mxu0
      %v666 = vadd.f32 %v586, %v665
      %667 = vmatmul.f32.gmra.mxu0 %v399
      %v668 = vpop.f32.mrf.mxu0
      %v669 = vadd.f32 %v586, %v668
      %670 = vmatmul.f32.gmra.mxu0 %v402
      %v671 = vpop.f32.mrf.mxu0
      %v672 = vadd.f32 %v586, %v671
      %673 = vmatmul.f32.gmra.mxu0 %v405
      %v674 = vpop.f32.mrf.mxu0
      %v675 = vadd.f32 %v586, %v674
      %676 = vmatmul.f32.gmra.mxu0 %v408
      %v677 = vpop.f32.mrf.mxu0
      %v678 = vadd.f32 %v586, %v677
      %679 = vmatmul.f32.gmra.mxu0 %v411
      %v680 = vpop.f32.mrf.mxu0
      %v681 = vadd.f32 %v586, %v680
      %682 = vmatmul.f32.gmra.mxu0 %v414
      %v683 = vpop.f32.mrf.mxu0
      %v684 = vadd.f32 %v586, %v683
      %685 = vmatmul.f32.gmra.mxu0 %v417
      %v686 = vpop.f32.mrf.mxu0
      %v687 = vadd.f32 %v586, %v686
      %688 = vmatmul.f32.gmra.mxu0 %v420
      %v689 = vpop.f32.mrf.mxu0
      %v690 = vadd.f32 %v586, %v689
      %691 = vmatmul.f32.gmra.mxu0 %v423
      %v692 = vpop.f32.mrf.mxu0
      %v693 = vadd.f32 %v586, %v692
      %694 = vmatmul.f32.gmra.mxu0 %v426
      %v695 = vpop.f32.mrf.mxu0
      %v696 = vadd.f32 %v586, %v695
      %697 = vmatmul.f32.gmra.mxu0 %v429
      %v698 = vpop.f32.mrf.mxu0
      %v699 = vadd.f32 %v586, %v698
      %700 = vmatmul.f32.gmra.mxu0 %v432
      %v701 = vpop.f32.mrf.mxu0
      %v702 = vadd.f32 %v586, %v701
      %703 = vdwg.mxu0
      %v704 = vmax.f32 %v609, 0.0
      %v705 = vmax.f32 %v612, 0.0
      %v706 = vmax.f32 %v615, 0.0
      %v707 = vmax.f32 %v618, 0.0
      %v708 = vmax.f32 %v621, 0.0
      %v709 = vmax.f32 %v624, 0.0
      %v710 = vmax.f32 %v627, 0.0
      %v711 = vmax.f32 %v630, 0.0
      %v712 = vmax.f32 %v633, 0.0
      %v713 = vmax.f32 %v636, 0.0
      %v714 = vmax.f32 %v639, 0.0
      %v715 = vmax.f32 %v642, 0.0
      %v716 = vmax.f32 %v645, 0.0
      %v717 = vmax.f32 %v648, 0.0
      %v718 = vmax.f32 %v651, 0.0
      %v719 = vmax.f32 %v654, 0.0
      %v720 = vmax.f32 %v657, 0.0
      %v721 = vmax.f32 %v660, 0.0
      %v722 = vmax.f32 %v663, 0.0
      %v723 = vmax.f32 %v666, 0.0
      %v724 = vmax.f32 %v669, 0.0
      %v725 = vmax.f32 %v672, 0.0
      %v726 = vmax.f32 %v675, 0.0
      %v727 = vmax.f32 %v678, 0.0
      %v728 = vmax.f32 %v681, 0.0
      %v729 = vmax.f32 %v684, 0.0
      %v730 = vmax.f32 %v687, 0.0
      %v731 = vmax.f32 %v690, 0.0
      %v732 = vmax.f32 %v693, 0.0
      %v733 = vmax.f32 %v696, 0.0
      %v734 = vmax.f32 %v699, 0.0
      %v735 = vmax.f32 %v702, 0.0
      %vm736 = vcmask 261120
      %737 = vst.msk [vmem:[%s295] sm:$0xff] %vm736, %v704
      %738 = vst.msk [vmem:[%s295 + $0x8] sm:$0xff] %vm736, %v705
      %739 = vst.msk [vmem:[%s295 + $0x10] sm:$0xff] %vm736, %v706
      %740 = vst.msk [vmem:[%s295 + $0x18] sm:$0xff] %vm736, %v707
      %741 = vst.msk [vmem:[%s295 + $0x20] sm:$0xff] %vm736, %v708
      %742 = vst.msk [vmem:[%s295 + $0x28] sm:$0xff] %vm736, %v709
      %743 = vst.msk [vmem:[%s295 + $0x30] sm:$0xff] %vm736, %v710
      %744 = vst.msk [vmem:[%s295 + $0x38] sm:$0xff] %vm736, %v711
      %745 = vst.msk [vmem:[%s295 + $0x40] sm:$0xff] %vm736, %v712
      %746 = vst.msk [vmem:[%s295 + $0x48] sm:$0xff] %vm736, %v713
      %747 = vst.msk [vmem:[%s295 + $0x50] sm:$0xff] %vm736, %v714
      %748 = vst.msk [vmem:[%s295 + $0x58] sm:$0xff] %vm736, %v715
      %749 = vst.msk [vmem:[%s295 + $0x60] sm:$0xff] %vm736, %v716
      %750 = vst.msk [vmem:[%s295 + $0x68] sm:$0xff] %vm736, %v717
      %751 = vst.msk [vmem:[%s295 + $0x70] sm:$0xff] %vm736, %v718
      %752 = vst.msk [vmem:[%s295 + $0x78] sm:$0xff] %vm736, %v719
      %753 = vst.msk [vmem:[%s295 + $0x80] sm:$0xff] %vm736, %v720
      %754 = vst.msk [vmem:[%s295 + $0x88] sm:$0xff] %vm736, %v721
      %755 = vst.msk [vmem:[%s295 + $0x90] sm:$0xff] %vm736, %v722
      %756 = vst.msk [vmem:[%s295 + $0x98] sm:$0xff] %vm736, %v723
      %757 = vst.msk [vmem:[%s295 + $0xa0] sm:$0xff] %vm736, %v724
      %758 = vst.msk [vmem:[%s295 + $0xa8] sm:$0xff] %vm736, %v725
      %759 = vst.msk [vmem:[%s295 + $0xb0] sm:$0xff] %vm736, %v726
      %760 = vst.msk [vmem:[%s295 + $0xb8] sm:$0xff] %vm736, %v727
      %761 = vst.msk [vmem:[%s295 + $0xc0] sm:$0xff] %vm736, %v728
      %762 = vst.msk [vmem:[%s295 + $0xc8] sm:$0xff] %vm736, %v729
      %763 = vst.msk [vmem:[%s295 + $0xd0] sm:$0xff] %vm736, %v730
      %764 = vst.msk [vmem:[%s295 + $0xd8] sm:$0xff] %vm736, %v731
      %765 = vst.msk [vmem:[%s295 + $0xe0] sm:$0xff] %vm736, %v732
      %766 = vst.msk [vmem:[%s295 + $0xe8] sm:$0xff] %vm736, %v733
      %767 = vst.msk [vmem:[%s295 + $0xf0] sm:$0xff] %vm736, %v734
      %768 = vst.msk [vmem:[%s295 + $0xf8] sm:$0xff] %vm736, %v735
      %p769 = scmp.eq.s32.totalorder %s23, 0
      // Predicated region
      $region41: #{forward.3} parent=39 // pred_check
        %p770 = pneg %p769
      $region42: #{forward.3} parent=39 // pred_check_branch
        %772 = sbr.rel (%p770) target = $region44
      $region43: #{forward.3} parent=39 // pred_region
        %vm773 = vcmask 253952
        %774 = vst.msk [vmem:[%s299] sm:$0x1] %vm773, 0.0
      $region44: #{forward.3} parent=39 // pred_fallthru
        _
      %v775 = vld [vmem:[%s299] sm:$0x1]
      %v776 = vsel %vm736, %v551, 0.0
      %v777 = vsel %vm736, %v552, 0.0
      %v778 = vadd.f32 %v776, %v777
      %v779 = vsel %vm736, %v553, 0.0
      %v780 = vadd.f32 %v778, %v779
      %v781 = vsel %vm736, %v554, 0.0
      %v782 = vadd.f32 %v780, %v781
      %v783 = vsel %vm736, %v555, 0.0
      %v784 = vadd.f32 %v782, %v783
      %v785 = vsel %vm736, %v556, 0.0
      %v786 = vadd.f32 %v784, %v785
      %v787 = vsel %vm736, %v557, 0.0
      %v788 = vadd.f32 %v786, %v787
      %v789 = vsel %vm736, %v558, 0.0
      %v790 = vadd.f32 %v788, %v789
      %v791 = vsel %vm736, %v559, 0.0
      %v792 = vadd.f32 %v790, %v791
      %v793 = vsel %vm736, %v560, 0.0
      %v794 = vadd.f32 %v792, %v793
      %v795 = vsel %vm736, %v561, 0.0
      %v796 = vadd.f32 %v794, %v795
      %v797 = vsel %vm736, %v562, 0.0
      %v798 = vadd.f32 %v796, %v797
      %v799 = vsel %vm736, %v563, 0.0
      %v800 = vadd.f32 %v798, %v799
      %v801 = vsel %vm736, %v564, 0.0
      %v802 = vadd.f32 %v800, %v801
      %v803 = vsel %vm736, %v565, 0.0
      %v804 = vadd.f32 %v802, %v803
      %v805 = vsel %vm736, %v566, 0.0
      %v806 = vadd.f32 %v804, %v805
      %v807 = vsel %vm736, %v567, 0.0
      %v808 = vadd.f32 %v806, %v807
      %v809 = vsel %vm736, %v568, 0.0
      %v810 = vadd.f32 %v808, %v809
      %v811 = vsel %vm736, %v569, 0.0
      %v812 = vadd.f32 %v810, %v811
      %v813 = vsel %vm736, %v570, 0.0
      %v814 = vadd.f32 %v812, %v813
      %v815 = vsel %vm736, %v571, 0.0
      %v816 = vadd.f32 %v814, %v815
      %v817 = vsel %vm736, %v572, 0.0
      %v818 = vadd.f32 %v816, %v817
      %v819 = vsel %vm736, %v573, 0.0
      %v820 = vadd.f32 %v818, %v819
      %v821 = vsel %vm736, %v574, 0.0
      %v822 = vadd.f32 %v820, %v821
      %v823 = vsel %vm736, %v575, 0.0
      %v824 = vadd.f32 %v822, %v823
      %v825 = vsel %vm736, %v576, 0.0
      %v826 = vadd.f32 %v824, %v825
      %v827 = vsel %vm736, %v577, 0.0
      %v828 = vadd.f32 %v826, %v827
      %v829 = vsel %vm736, %v578, 0.0
      %v830 = vadd.f32 %v828, %v829
      %v831 = vsel %vm736, %v579, 0.0
      %v832 = vadd.f32 %v830, %v831
      %v833 = vsel %vm736, %v580, 0.0
      %v834 = vadd.f32 %v832, %v833
      %v835 = vsel %vm736, %v581, 0.0
      %v836 = vadd.f32 %v834, %v835
      %v837 = vsel %vm736, %v582, 0.0
      %v838 = vadd.f32 %v836, %v837
      %v839 = vrot.slane %v838, 4
      %v840 = vadd.f32 %v838, %v839
      %v841 = vrot.slane %v840, 2
      %v842 = vadd.f32 %v840, %v841
      %v843 = vrot.slane %v842, 1
      %v844 = vadd.f32 %v842, %v843
      %v845 = vmul.f32 %v844, 0.00390625
      %v846 = vadd.f32 %v775, %v845
      %vm847 = vcmask 253952
      %848 = vst.msk [vmem:[%s299] sm:$0x1] %vm847, %v846
      %s849 = smul.u32 32, %s23
      %p850 = scmp.lt.s32.totalorder %s22, 1
      %s851 = scalar_select %p850, %s22, 1
      %p852 = scmp.lt.s32.totalorder %s849, 31
      %s853 = scalar_select %p852, %s849, 31
      %s854 = smul.addr %s851, 32
      %s855 = sadd.s32 %s853, %s854
      %s856 = smul.addr %s855, 8
      %s857 = scalar_lea.vmem %s5, %s856
      %p858 = scmp.lt.s32.totalorder %s22, 1
      %s859 = scalar_select %p858, %s22, 1
      %s860 = scalar_lea.vmem %s6, %s859
      // Predicated region
      $region45: #{forward.3} parent=39 // pred_check
        %p861 = pneg %p162
      $region46: #{forward.3} parent=39 // pred_check_branch
        %863 = sbr.rel (%p861) target = $region48
      $region47: #{forward.3} parent=39 // pred_region
        %s864 = smul.u32 32, %s23
      $region48: #{forward.3} parent=39 // pred_fallthru
        _
      // Predicated region
      $region49: #{forward.3} parent=39 // pred_check
        %p865 = pneg %p188
      $region50: #{forward.3} parent=39 // pred_check_branch
        %867 = sbr.rel (%p865) target = $region52
      $region51: #{forward.3} parent=39 // pred_region
        _
      $region52: #{forward.3} parent=39 // pred_fallthru
        _
    $region40: #{forward.3} parent=5 // pred_fallthru
      _
    %p868 = scmp.le.s32.totalorder 2, %s13
    // Predicated region
    $region53: #{forward.3} parent=5 // pred_check
      %p869 = pneg %p868
    $region54: #{forward.3} parent=5 // pred_check_branch
      %871 = sbr.rel (%p869) target = $region56
    $region55: #{forward.3} parent=5 // pred_region
      %s872 = ssub.s32 %s13, 2
      // Predicated region
      $region57: #{forward.3} parent=55 // pred_check
        %p873 = pneg %p168
      $region58: #{forward.3} parent=55 // pred_check_branch
        %875 = sbr.rel (%p873) target = $region60
      $region59: #{forward.3} parent=55 // pred_region
        %s876 = smul.u32 32, %s25
        %p877 = scmp.lt.s32.totalorder %s24, 1
        %s878 = scalar_select %p877, %s24, 1
        %p879 = scmp.lt.s32.totalorder %s876, 31
        %s880 = scalar_select %p879, %s876, 31
        %s881 = smul.addr %s878, 32
        %s882 = sadd.s32 %s880, %s881
        %s883 = smul.addr %s882, 8
        %s884 = scalar_lea.vmem %s5, %s883
      $region60: #{forward.3} parent=55 // pred_fallthru
        _
      // Predicated region
      $region61: #{forward.3} parent=55 // pred_check
        %p885 = pneg %p194
      $region62: #{forward.3} parent=55 // pred_check_branch
        %887 = sbr.rel (%p885) target = $region64
      $region63: #{forward.3} parent=55 // pred_region
        %p888 = scmp.lt.s32.totalorder %s24, 1
        %s889 = scalar_select %p888, %s24, 1
        %s890 = scalar_lea.vmem %s6, %s889
      $region64: #{forward.3} parent=55 // pred_fallthru
        _
    $region56: #{forward.3} parent=5 // pred_fallthru
      _
  $region6: #{forward.3} parent=0 // loop_footer
    %s17 = sadd.s32 1, %s13
  $region7: #{forward.3} parent=0 // loop_footer_branch
    %12 = sbr.rel target = $region3
  $region8: #{forward.3} parent=0 // loop_exit
    _

// kernel: forward.5
$region0: #{forward.5}
  #allocation0 [shape = 'u32[]', space=smem, size = 0x4, offset = 0x4, fixed_abs, tag = 'smem constant byte address 0x4 - core index']
  #allocation1 [shape = 'u32[72,128]{1,0:T(1,128)}', space=vmem, size = 0x9000, scoped, tag = 'internal scratch']
  %s0 = inlined_call_operand.vmem [shape: f32[12,1], index: 0, kind: input, shape index: {}]
  %s1 = inlined_call_operand.vmem [shape: f32[32,12,128], index: 1, kind: input, shape index: {}]
  %s2 = inlined_call_operand.vmem [shape: f32[64,32], index: 2, kind: input, shape index: {}]
  %s3 = inlined_call_operand.vmem [shape: f32[64,1], index: 3, kind: input, shape index: {}]
  %s4 = inlined_call_operand.vmem [shape: f32[4,64], index: 4, kind: input, shape index: {}]
  %s5 = inlined_call_operand.vmem [shape: f32[4,1], index: 5, kind: input, shape index: {}]
  %s6 = inlined_call_operand.vmem [shape: f32[16,128], index: 6, kind: output, shape index: {}]
  %s7 = sld [smem:[#allocation0]]
  $region34: #{forward.5} parent=0
    _
  %s9 = ssub.s32 1, %s7
  %s10 = scalar_select 0, %s9, %s7
  // Predicated region
  $region2: #{forward.5} parent=0 // pred_check
    _
  $region3: #{forward.5} parent=0 // pred_check_branch
    %12 = sbr.rel (0) target = $region5
  $region4: #{forward.5} parent=0 // pred_region
    _
  $region5: #{forward.5} parent=0 // pred_fallthru
    _
  // Predicated region
  $region6: #{forward.5} parent=0 // pred_check
    _
  $region7: #{forward.5} parent=0 // pred_check_branch
    %14 = sbr.rel (0) target = $region9
  $region8: #{forward.5} parent=0 // pred_region
    _
  $region9: #{forward.5} parent=0 // pred_fallthru
    _
  // Predicated region
  $region10: #{forward.5} parent=0 // pred_check
    _
  $region11: #{forward.5} parent=0 // pred_check_branch
    %16 = sbr.rel (0) target = $region13
  $region12: #{forward.5} parent=0 // pred_region
    _
  $region13: #{forward.5} parent=0 // pred_fallthru
    _
  // Predicated region
  $region14: #{forward.5} parent=0 // pred_check
    _
  $region15: #{forward.5} parent=0 // pred_check_branch
    %18 = sbr.rel (0) target = $region17
  $region16: #{forward.5} parent=0 // pred_region
    _
  $region17: #{forward.5} parent=0 // pred_fallthru
    _
  // Predicated region
  $region18: #{forward.5} parent=0 // pred_check
    _
  $region19: #{forward.5} parent=0 // pred_check_branch
    %20 = sbr.rel (0) target = $region21
  $region20: #{forward.5} parent=0 // pred_region
    _
  $region21: #{forward.5} parent=0 // pred_fallthru
    _
  // Predicated region
  $region22: #{forward.5} parent=0 // pred_check
    _
  $region23: #{forward.5} parent=0 // pred_check_branch
    %22 = sbr.rel (0) target = $region25
  $region24: #{forward.5} parent=0 // pred_region
    _
  $region25: #{forward.5} parent=0 // pred_fallthru
    _
  %v23 = vld [vmem:[%s1] sm:$0xff]
  %v24 = vld [vmem:[%s1 + $0x8] sm:$0xf]
  %v25 = vld [vmem:[%s1 + $0x10] sm:$0xff]
  %v26 = vld [vmem:[%s1 + $0x18] sm:$0xf]
  %v27 = vld [vmem:[%s1 + $0x20] sm:$0xff]
  %v28 = vld [vmem:[%s1 + $0x28] sm:$0xf]
  %v29 = vld [vmem:[%s1 + $0x30] sm:$0xff]
  %v30 = vld [vmem:[%s1 + $0x38] sm:$0xf]
  %v31 = vld [vmem:[%s1 + $0x40] sm:$0xff]
  %v32 = vld [vmem:[%s1 + $0x48] sm:$0xf]
  %v33 = vld [vmem:[%s1 + $0x50] sm:$0xff]
  %v34 = vld [vmem:[%s1 + $0x58] sm:$0xf]
  %v35 = vld [vmem:[%s1 + $0x60] sm:$0xff]
  %v36 = vld [vmem:[%s1 + $0x68] sm:$0xf]
  %v37 = vld [vmem:[%s1 + $0x70] sm:$0xff]
  %v38 = vld [vmem:[%s1 + $0x78] sm:$0xf]
  %v39 = vld [vmem:[%s1 + $0x80] sm:$0xff]
  %v40 = vld [vmem:[%s1 + $0x88] sm:$0xf]
  %v41 = vld [vmem:[%s1 + $0x90] sm:$0xff]
  %v42 = vld [vmem:[%s1 + $0x98] sm:$0xf]
  %v43 = vld [vmem:[%s1 + $0xa0] sm:$0xff]
  %v44 = vld [vmem:[%s1 + $0xa8] sm:$0xf]
  %v45 = vld [vmem:[%s1 + $0xb0] sm:$0xff]
  %v46 = vld [vmem:[%s1 + $0xb8] sm:$0xf]
  %v47 = vld [vmem:[%s1 + $0xc0] sm:$0xff]
  %v48 = vld [vmem:[%s1 + $0xc8] sm:$0xf]
  %v49 = vld [vmem:[%s1 + $0xd0] sm:$0xff]
  %v50 = vld [vmem:[%s1 + $0xd8] sm:$0xf]
  %v51 = vld [vmem:[%s1 + $0xe0] sm:$0xff]
  %v52 = vld [vmem:[%s1 + $0xe8] sm:$0xf]
  %v53 = vld [vmem:[%s1 + $0xf0] sm:$0xff]
  %v54 = vld [vmem:[%s1 + $0xf8] sm:$0xf]
  %v55 = vld [vmem:[%s1 + $0x100] sm:$0xff]
  %v56 = vld [vmem:[%s1 + $0x108] sm:$0xf]
  %v57 = vld [vmem:[%s1 + $0x110] sm:$0xff]
  %v58 = vld [vmem:[%s1 + $0x118] sm:$0xf]
  %v59 = vld [vmem:[%s1 + $0x120] sm:$0xff]
  %v60 = vld [vmem:[%s1 + $0x128] sm:$0xf]
  %v61 = vld [vmem:[%s1 + $0x130] sm:$0xff]
  %v62 = vld [vmem:[%s1 + $0x138] sm:$0xf]
  %v63 = vld [vmem:[%s1 + $0x140] sm:$0xff]
  %v64 = vld [vmem:[%s1 + $0x148] sm:$0xf]
  %v65 = vld [vmem:[%s1 + $0x150] sm:$0xff]
  %v66 = vld [vmem:[%s1 + $0x158] sm:$0xf]
  %v67 = vld [vmem:[%s1 + $0x160] sm:$0xff]
  %v68 = vld [vmem:[%s1 + $0x168] sm:$0xf]
  %v69 = vld [vmem:[%s1 + $0x170] sm:$0xff]
  %v70 = vld [vmem:[%s1 + $0x178] sm:$0xf]
  %v71 = vld [vmem:[%s1 + $0x180] sm:$0xff]
  %v72 = vld [vmem:[%s1 + $0x188] sm:$0xf]
  %v73 = vld [vmem:[%s1 + $0x190] sm:$0xff]
  %v74 = vld [vmem:[%s1 + $0x198] sm:$0xf]
  %v75 = vld [vmem:[%s1 + $0x1a0] sm:$0xff]
  %v76 = vld [vmem:[%s1 + $0x1a8] sm:$0xf]
  %v77 = vld [vmem:[%s1 + $0x1b0] sm:$0xff]
  %v78 = vld [vmem:[%s1 + $0x1b8] sm:$0xf]
  %v79 = vld [vmem:[%s1 + $0x1c0] sm:$0xff]
  %v80 = vld [vmem:[%s1 + $0x1c8] sm:$0xf]
  %v81 = vld [vmem:[%s1 + $0x1d0] sm:$0xff]
  %v82 = vld [vmem:[%s1 + $0x1d8] sm:$0xf]
  %v83 = vld [vmem:[%s1 + $0x1e0] sm:$0xff]
  %v84 = vld [vmem:[%s1 + $0x1e8] sm:$0xf]
  %v85 = vld [vmem:[%s1 + $0x1f0] sm:$0xff]
  %v86 = vld [vmem:[%s1 + $0x1f8] sm:$0xf]
  %v87 = vrot.slane %v27, 4
  %vm88 = vcmask 1047556
  %v89 = vsel %vm88, %v87, %v23
  %v90 = vrot.slane %v23, 4
  %v91 = vsel %vm88, %v27, %v90
  %v93 = vunpack.c.l.s4 1983009808
  %v94 = vunpack.c.0.s8 %v93
  %v95 = vperm.slane %v89, %v94
  %v97 = vunpack.c.l.s4 1983009808
  %v98 = vunpack.c.0.s8 %v97
  %v99 = vperm.slane %v91, %v98
  %v100 = vrot.slane %v29, 4
  %v101 = vsel %vm88, %v100, %v25
  %v102 = vrot.slane %v25, 4
  %v103 = vsel %vm88, %v29, %v102
  %v105 = vunpack.c.l.s4 1983009808
  %v106 = vunpack.c.0.s8 %v105
  %v107 = vperm.slane %v101, %v106
  %v109 = vunpack.c.l.s4 1983009808
  %v110 = vunpack.c.0.s8 %v109
  %v111 = vperm.slane %v103, %v110
  %v112 = vrot.slane %v35, 4
  %v113 = vsel %vm88, %v112, %v31
  %v114 = vrot.slane %v31, 4
  %v115 = vsel %vm88, %v35, %v114
  %v117 = vunpack.c.l.s4 1983009808
  %v118 = vunpack.c.0.s8 %v117
  %v119 = vperm.slane %v113, %v118
  %v121 = vunpack.c.l.s4 1983009808
  %v122 = vunpack.c.0.s8 %v121
  %v123 = vperm.slane %v115, %v122
  %v124 = vrot.slane %v37, 4
  %v125 = vsel %vm88, %v124, %v33
  %v126 = vrot.slane %v33, 4
  %v127 = vsel %vm88, %v37, %v126
  %v129 = vunpack.c.l.s4 1983009808
  %v130 = vunpack.c.0.s8 %v129
  %v131 = vperm.slane %v125, %v130
  %v133 = vunpack.c.l.s4 1983009808
  %v134 = vunpack.c.0.s8 %v133
  %v135 = vperm.slane %v127, %v134
  %v136 = vrot.slane %v107, 4
  %v137 = vsel %vm88, %v136, %v95
  %v138 = vrot.slane %v95, 4
  %v139 = vsel %vm88, %v107, %v138
  %v141 = vunpack.c.l.s4 1934713408
  %v142 = vunpack.c.0.s8 %v141
  %v143 = vperm.slane %v137, %v142
  %v145 = vunpack.c.l.s4 1934713408
  %v146 = vunpack.c.0.s8 %v145
  %v147 = vperm.slane %v139, %v146
  %v148 = vrot.slane %v111, 4
  %v149 = vsel %vm88, %v148, %v99
  %v150 = vrot.slane %v99, 4
  %v151 = vsel %vm88, %v111, %v150
  %v153 = vunpack.c.l.s4 1934713408
  %v154 = vunpack.c.0.s8 %v153
  %v155 = vperm.slane %v149, %v154
  %v157 = vunpack.c.l.s4 1934713408
  %v158 = vunpack.c.0.s8 %v157
  %v159 = vperm.slane %v151, %v158
  %v160 = vrot.slane %v131, 4
  %v161 = vsel %vm88, %v160, %v119
  %v162 = vrot.slane %v119, 4
  %v163 = vsel %vm88, %v131, %v162
  %v165 = vunpack.c.l.s4 1934713408
  %v166 = vunpack.c.0.s8 %v165
  %v167 = vperm.slane %v161, %v166
  %v169 = vunpack.c.l.s4 1934713408
  %v170 = vunpack.c.0.s8 %v169
  %v171 = vperm.slane %v163, %v170
  %v172 = vrot.slane %v135, 4
  %v173 = vsel %vm88, %v172, %v123
  %v174 = vrot.slane %v123, 4
  %v175 = vsel %vm88, %v135, %v174
  %v177 = vunpack.c.l.s4 1934713408
  %v178 = vunpack.c.0.s8 %v177
  %v179 = vperm.slane %v173, %v178
  %v181 = vunpack.c.l.s4 1934713408
  %v182 = vunpack.c.0.s8 %v181
  %v183 = vperm.slane %v175, %v182
  %v184 = vrot.slane %v167, 4
  %v185 = vsel %vm88, %v184, %v143
  %v186 = vrot.slane %v143, 4
  %v187 = vsel %vm88, %v167, %v186
  %v188 = vrot.slane %v171, 4
  %v189 = vsel %vm88, %v188, %v147
  %v190 = vrot.slane %v147, 4
  %v191 = vsel %vm88, %v171, %v190
  %v192 = vrot.slane %v179, 4
  %v193 = vsel %vm88, %v192, %v155
  %v194 = vrot.slane %v155, 4
  %v195 = vsel %vm88, %v179, %v194
  %v196 = vrot.slane %v183, 4
  %v197 = vsel %vm88, %v196, %v159
  %v198 = vrot.slane %v159, 4
  %v199 = vsel %vm88, %v183, %v198
  %v200 = vrot.slane %v43, 4
  %v201 = vsel %vm88, %v200, %v39
  %v202 = vrot.slane %v39, 4
  %v203 = vsel %vm88, %v43, %v202
  %v205 = vunpack.c.l.s4 1983009808
  %v206 = vunpack.c.0.s8 %v205
  %v207 = vperm.slane %v201, %v206
  %v209 = vunpack.c.l.s4 1983009808
  %v210 = vunpack.c.0.s8 %v209
  %v211 = vperm.slane %v203, %v210
  %v212 = vrot.slane %v45, 4
  %v213 = vsel %vm88, %v212, %v41
  %v214 = vrot.slane %v41, 4
  %v215 = vsel %vm88, %v45, %v214
  %v217 = vunpack.c.l.s4 1983009808
  %v218 = vunpack.c.0.s8 %v217
  %v219 = vperm.slane %v213, %v218
  %v221 = vunpack.c.l.s4 1983009808
  %v222 = vunpack.c.0.s8 %v221
  %v223 = vperm.slane %v215, %v222
  %v224 = vrot.slane %v51, 4
  %v225 = vsel %vm88, %v224, %v47
  %v226 = vrot.slane %v47, 4
  %v227 = vsel %vm88, %v51, %v226
  %v229 = vunpack.c.l.s4 1983009808
  %v230 = vunpack.c.0.s8 %v229
  %v231 = vperm.slane %v225, %v230
  %v233 = vunpack.c.l.s4 1983009808
  %v234 = vunpack.c.0.s8 %v233
  %v235 = vperm.slane %v227, %v234
  %v236 = vrot.slane %v53, 4
  %v237 = vsel %vm88, %v236, %v49
  %v238 = vrot.slane %v49, 4
  %v239 = vsel %vm88, %v53, %v238
  %v241 = vunpack.c.l.s4 1983009808
  %v242 = vunpack.c.0.s8 %v241
  %v243 = vperm.slane %v237, %v242
  %v245 = vunpack.c.l.s4 1983009808
  %v246 = vunpack.c.0.s8 %v245
  %v247 = vperm.slane %v239, %v246
  %v248 = vrot.slane %v219, 4
  %v249 = vsel %vm88, %v248, %v207
  %v250 = vrot.slane %v207, 4
  %v251 = vsel %vm88, %v219, %v250
  %v253 = vunpack.c.l.s4 1934713408
  %v254 = vunpack.c.0.s8 %v253
  %v255 = vperm.slane %v249, %v254
  %v257 = vunpack.c.l.s4 1934713408
  %v258 = vunpack.c.0.s8 %v257
  %v259 = vperm.slane %v251, %v258
  %v260 = vrot.slane %v223, 4
  %v261 = vsel %vm88, %v260, %v211
  %v262 = vrot.slane %v211, 4
  %v263 = vsel %vm88, %v223, %v262
  %v265 = vunpack.c.l.s4 1934713408
  %v266 = vunpack.c.0.s8 %v265
  %v267 = vperm.slane %v261, %v266
  %v269 = vunpack.c.l.s4 1934713408
  %v270 = vunpack.c.0.s8 %v269
  %v271 = vperm.slane %v263, %v270
  %v272 = vrot.slane %v243, 4
  %v273 = vsel %vm88, %v272, %v231
  %v274 = vrot.slane %v231, 4
  %v275 = vsel %vm88, %v243, %v274
  %v277 = vunpack.c.l.s4 1934713408
  %v278 = vunpack.c.0.s8 %v277
  %v279 = vperm.slane %v273, %v278
  %v281 = vunpack.c.l.s4 1934713408
  %v282 = vunpack.c.0.s8 %v281
  %v283 = vperm.slane %v275, %v282
  %v284 = vrot.slane %v247, 4
  %v285 = vsel %vm88, %v284, %v235
  %v286 = vrot.slane %v235, 4
  %v287 = vsel %vm88, %v247, %v286
  %v289 = vunpack.c.l.s4 1934713408
  %v290 = vunpack.c.0.s8 %v289
  %v291 = vperm.slane %v285, %v290
  %v293 = vunpack.c.l.s4 1934713408
  %v294 = vunpack.c.0.s8 %v293
  %v295 = vperm.slane %v287, %v294
  %v296 = vrot.slane %v279, 4
  %v297 = vsel %vm88, %v296, %v255
  %v298 = vrot.slane %v255, 4
  %v299 = vsel %vm88, %v279, %v298
  %v300 = vrot.slane %v283, 4
  %v301 = vsel %vm88, %v300, %v259
  %v302 = vrot.slane %v259, 4
  %v303 = vsel %vm88, %v283, %v302
  %v304 = vrot.slane %v291, 4
  %v305 = vsel %vm88, %v304, %v267
  %v306 = vrot.slane %v267, 4
  %v307 = vsel %vm88, %v291, %v306
  %v308 = vrot.slane %v295, 4
  %v309 = vsel %vm88, %v308, %v271
  %v310 = vrot.slane %v271, 4
  %v311 = vsel %vm88, %v295, %v310
  %v312 = vrot.slane %v59, 4
  %v313 = vsel %vm88, %v312, %v55
  %v314 = vrot.slane %v55, 4
  %v315 = vsel %vm88, %v59, %v314
  %v317 = vunpack.c.l.s4 1983009808
  %v318 = vunpack.c.0.s8 %v317
  %v319 = vperm.slane %v313, %v318
  %v321 = vunpack.c.l.s4 1983009808
  %v322 = vunpack.c.0.s8 %v321
  %v323 = vperm.slane %v315, %v322
  %v324 = vrot.slane %v61, 4
  %v325 = vsel %vm88, %v324, %v57
  %v326 = vrot.slane %v57, 4
  %v327 = vsel %vm88, %v61, %v326
  %v329 = vunpack.c.l.s4 1983009808
  %v330 = vunpack.c.0.s8 %v329
  %v331 = vperm.slane %v325, %v330
  %v333 = vunpack.c.l.s4 1983009808
  %v334 = vunpack.c.0.s8 %v333
  %v335 = vperm.slane %v327, %v334
  %v336 = vrot.slane %v67, 4
  %v337 = vsel %vm88, %v336, %v63
  %v338 = vrot.slane %v63, 4
  %v339 = vsel %vm88, %v67, %v338
  %v341 = vunpack.c.l.s4 1983009808
  %v342 = vunpack.c.0.s8 %v341
  %v343 = vperm.slane %v337, %v342
  %v345 = vunpack.c.l.s4 1983009808
  %v346 = vunpack.c.0.s8 %v345
  %v347 = vperm.slane %v339, %v346
  %v348 = vrot.slane %v69, 4
  %v349 = vsel %vm88, %v348, %v65
  %v350 = vrot.slane %v65, 4
  %v351 = vsel %vm88, %v69, %v350
  %v353 = vunpack.c.l.s4 1983009808
  %v354 = vunpack.c.0.s8 %v353
  %v355 = vperm.slane %v349, %v354
  %v357 = vunpack.c.l.s4 1983009808
  %v358 = vunpack.c.0.s8 %v357
  %v359 = vperm.slane %v351, %v358
  %v360 = vrot.slane %v331, 4
  %v361 = vsel %vm88, %v360, %v319
  %v362 = vrot.slane %v319, 4
  %v363 = vsel %vm88, %v331, %v362
  %v365 = vunpack.c.l.s4 1934713408
  %v366 = vunpack.c.0.s8 %v365
  %v367 = vperm.slane %v361, %v366
  %v369 = vunpack.c.l.s4 1934713408
  %v370 = vunpack.c.0.s8 %v369
  %v371 = vperm.slane %v363, %v370
  %v372 = vrot.slane %v335, 4
  %v373 = vsel %vm88, %v372, %v323
  %v374 = vrot.slane %v323, 4
  %v375 = vsel %vm88, %v335, %v374
  %v377 = vunpack.c.l.s4 1934713408
  %v378 = vunpack.c.0.s8 %v377
  %v379 = vperm.slane %v373, %v378
  %v381 = vunpack.c.l.s4 1934713408
  %v382 = vunpack.c.0.s8 %v381
  %v383 = vperm.slane %v375, %v382
  %v384 = vrot.slane %v355, 4
  %v385 = vsel %vm88, %v384, %v343
  %v386 = vrot.slane %v343, 4
  %v387 = vsel %vm88, %v355, %v386
  %v389 = vunpack.c.l.s4 1934713408
  %v390 = vunpack.c.0.s8 %v389
  %v391 = vperm.slane %v385, %v390
  %v393 = vunpack.c.l.s4 1934713408
  %v394 = vunpack.c.0.s8 %v393
  %v395 = vperm.slane %v387, %v394
  %v396 = vrot.slane %v359, 4
  %v397 = vsel %vm88, %v396, %v347
  %v398 = vrot.slane %v347, 4
  %v399 = vsel %vm88, %v359, %v398
  %v401 = vunpack.c.l.s4 1934713408
  %v402 = vunpack.c.0.s8 %v401
  %v403 = vperm.slane %v397, %v402
  %v405 = vunpack.c.l.s4 1934713408
  %v406 = vunpack.c.0.s8 %v405
  %v407 = vperm.slane %v399, %v406
  %v408 = vrot.slane %v391, 4
  %v409 = vsel %vm88, %v408, %v367
  %v410 = vrot.slane %v367, 4
  %v411 = vsel %vm88, %v391, %v410
  %v412 = vrot.slane %v395, 4
  %v413 = vsel %vm88, %v412, %v371
  %v414 = vrot.slane %v371, 4
  %v415 = vsel %vm88, %v395, %v414
  %v416 = vrot.slane %v403, 4
  %v417 = vsel %vm88, %v416, %v379
  %v418 = vrot.slane %v379, 4
  %v419 = vsel %vm88, %v403, %v418
  %v420 = vrot.slane %v407, 4
  %v421 = vsel %vm88, %v420, %v383
  %v422 = vrot.slane %v383, 4
  %v423 = vsel %vm88, %v407, %v422
  %v424 = vrot.slane %v75, 4
  %v425 = vsel %vm88, %v424, %v71
  %v426 = vrot.slane %v71, 4
  %v427 = vsel %vm88, %v75, %v426
  %v429 = vunpack.c.l.s4 1983009808
  %v430 = vunpack.c.0.s8 %v429
  %v431 = vperm.slane %v425, %v430
  %v433 = vunpack.c.l.s4 1983009808
  %v434 = vunpack.c.0.s8 %v433
  %v435 = vperm.slane %v427, %v434
  %v436 = vrot.slane %v77, 4
  %v437 = vsel %vm88, %v436, %v73
  %v438 = vrot.slane %v73, 4
  %v439 = vsel %vm88, %v77, %v438
  %v441 = vunpack.c.l.s4 1983009808
  %v442 = vunpack.c.0.s8 %v441
  %v443 = vperm.slane %v437, %v442
  %v445 = vunpack.c.l.s4 1983009808
  %v446 = vunpack.c.0.s8 %v445
  %v447 = vperm.slane %v439, %v446
  %v448 = vrot.slane %v83, 4
  %v449 = vsel %vm88, %v448, %v79
  %v450 = vrot.slane %v79, 4
  %v451 = vsel %vm88, %v83, %v450
  %v453 = vunpack.c.l.s4 1983009808
  %v454 = vunpack.c.0.s8 %v453
  %v455 = vperm.slane %v449, %v454
  %v457 = vunpack.c.l.s4 1983009808
  %v458 = vunpack.c.0.s8 %v457
  %v459 = vperm.slane %v451, %v458
  %v460 = vrot.slane %v85, 4
  %v461 = vsel %vm88, %v460, %v81
  %v462 = vrot.slane %v81, 4
  %v463 = vsel %vm88, %v85, %v462
  %v465 = vunpack.c.l.s4 1983009808
  %v466 = vunpack.c.0.s8 %v465
  %v467 = vperm.slane %v461, %v466
  %v469 = vunpack.c.l.s4 1983009808
  %v470 = vunpack.c.0.s8 %v469
  %v471 = vperm.slane %v463, %v470
  %v472 = vrot.slane %v443, 4
  %v473 = vsel %vm88, %v472, %v431
  %v474 = vrot.slane %v431, 4
  %v475 = vsel %vm88, %v443, %v474
  %v477 = vunpack.c.l.s4 1934713408
  %v478 = vunpack.c.0.s8 %v477
  %v479 = vperm.slane %v473, %v478
  %v481 = vunpack.c.l.s4 1934713408
  %v482 = vunpack.c.0.s8 %v481
  %v483 = vperm.slane %v475, %v482
  %v484 = vrot.slane %v447, 4
  %v485 = vsel %vm88, %v484, %v435
  %v486 = vrot.slane %v435, 4
  %v487 = vsel %vm88, %v447, %v486
  %v489 = vunpack.c.l.s4 1934713408
  %v490 = vunpack.c.0.s8 %v489
  %v491 = vperm.slane %v485, %v490
  %v493 = vunpack.c.l.s4 1934713408
  %v494 = vunpack.c.0.s8 %v493
  %v495 = vperm.slane %v487, %v494
  %v496 = vrot.slane %v467, 4
  %v497 = vsel %vm88, %v496, %v455
  %v498 = vrot.slane %v455, 4
  %v499 = vsel %vm88, %v467, %v498
  %v501 = vunpack.c.l.s4 1934713408
  %v502 = vunpack.c.0.s8 %v501
  %v503 = vperm.slane %v497, %v502
  %v505 = vunpack.c.l.s4 1934713408
  %v506 = vunpack.c.0.s8 %v505
  %v507 = vperm.slane %v499, %v506
  %v508 = vrot.slane %v471, 4
  %v509 = vsel %vm88, %v508, %v459
  %v510 = vrot.slane %v459, 4
  %v511 = vsel %vm88, %v471, %v510
  %v513 = vunpack.c.l.s4 1934713408
  %v514 = vunpack.c.0.s8 %v513
  %v515 = vperm.slane %v509, %v514
  %v517 = vunpack.c.l.s4 1934713408
  %v518 = vunpack.c.0.s8 %v517
  %v519 = vperm.slane %v511, %v518
  %v520 = vrot.slane %v503, 4
  %v521 = vsel %vm88, %v520, %v479
  %v522 = vrot.slane %v479, 4
  %v523 = vsel %vm88, %v503, %v522
  %v524 = vrot.slane %v507, 4
  %v525 = vsel %vm88, %v524, %v483
  %v526 = vrot.slane %v483, 4
  %v527 = vsel %vm88, %v507, %v526
  %v528 = vrot.slane %v515, 4
  %v529 = vsel %vm88, %v528, %v491
  %v530 = vrot.slane %v491, 4
  %v531 = vsel %vm88, %v515, %v530
  %v532 = vrot.slane %v519, 4
  %v533 = vsel %vm88, %v532, %v495
  %v534 = vrot.slane %v495, 4
  %v535 = vsel %vm88, %v519, %v534
  %v536 = vrot.slane %v28, 4
  %v537 = vsel %vm88, %v536, %v24
  %v539 = vunpack.c.l.s4 1983009808
  %v540 = vunpack.c.0.s8 %v539
  %v541 = vperm.slane %v537, %v540
  %v542 = vrot.slane %v30, 4
  %v543 = vsel %vm88, %v542, %v26
  %v545 = vunpack.c.l.s4 1983009808
  %v546 = vunpack.c.0.s8 %v545
  %v547 = vperm.slane %v543, %v546
  %v548 = vrot.slane %v36, 4
  %v549 = vsel %vm88, %v548, %v32
  %v551 = vunpack.c.l.s4 1983009808
  %v552 = vunpack.c.0.s8 %v551
  %v553 = vperm.slane %v549, %v552
  %v554 = vrot.slane %v38, 4
  %v555 = vsel %vm88, %v554, %v34
  %v557 = vunpack.c.l.s4 1983009808
  %v558 = vunpack.c.0.s8 %v557
  %v559 = vperm.slane %v555, %v558
  %v560 = vrot.slane %v547, 4
  %v561 = vsel %vm88, %v560, %v541
  %v562 = vrot.slane %v541, 4
  %v563 = vsel %vm88, %v547, %v562
  %v565 = vunpack.c.l.s4 1934713408
  %v566 = vunpack.c.0.s8 %v565
  %v567 = vperm.slane %v561, %v566
  %v569 = vunpack.c.l.s4 1934713408
  %v570 = vunpack.c.0.s8 %v569
  %v571 = vperm.slane %v563, %v570
  %v572 = vrot.slane %v559, 4
  %v573 = vsel %vm88, %v572, %v553
  %v574 = vrot.slane %v553, 4
  %v575 = vsel %vm88, %v559, %v574
  %v577 = vunpack.c.l.s4 1934713408
  %v578 = vunpack.c.0.s8 %v577
  %v579 = vperm.slane %v573, %v578
  %v581 = vunpack.c.l.s4 1934713408
  %v582 = vunpack.c.0.s8 %v581
  %v583 = vperm.slane %v575, %v582
  %v584 = vrot.slane %v579, 4
  %v585 = vsel %vm88, %v584, %v567
  %v586 = vrot.slane %v567, 4
  %v587 = vsel %vm88, %v579, %v586
  %v588 = vrot.slane %v583, 4
  %v589 = vsel %vm88, %v588, %v571
  %v590 = vrot.slane %v571, 4
  %v591 = vsel %vm88, %v583, %v590
  %v592 = vrot.slane %v44, 4
  %v593 = vsel %vm88, %v592, %v40
  %v595 = vunpack.c.l.s4 1983009808
  %v596 = vunpack.c.0.s8 %v595
  %v597 = vperm.slane %v593, %v596
  %v598 = vrot.slane %v46, 4
  %v599 = vsel %vm88, %v598, %v42
  %v601 = vunpack.c.l.s4 1983009808
  %v602 = vunpack.c.0.s8 %v601
  %v603 = vperm.slane %v599, %v602
  %v604 = vrot.slane %v52, 4
  %v605 = vsel %vm88, %v604, %v48
  %v607 = vunpack.c.l.s4 1983009808
  %v608 = vunpack.c.0.s8 %v607
  %v609 = vperm.slane %v605, %v608
  %v610 = vrot.slane %v54, 4
  %v611 = vsel %vm88, %v610, %v50
  %v613 = vunpack.c.l.s4 1983009808
  %v614 = vunpack.c.0.s8 %v613
  %v615 = vperm.slane %v611, %v614
  %v616 = vrot.slane %v603, 4
  %v617 = vsel %vm88, %v616, %v597
  %v618 = vrot.slane %v597, 4
  %v619 = vsel %vm88, %v603, %v618
  %v621 = vunpack.c.l.s4 1934713408
  %v622 = vunpack.c.0.s8 %v621
  %v623 = vperm.slane %v617, %v622
  %v625 = vunpack.c.l.s4 1934713408
  %v626 = vunpack.c.0.s8 %v625
  %v627 = vperm.slane %v619, %v626
  %v628 = vrot.slane %v615, 4
  %v629 = vsel %vm88, %v628, %v609
  %v630 = vrot.slane %v609, 4
  %v631 = vsel %vm88, %v615, %v630
  %v633 = vunpack.c.l.s4 1934713408
  %v634 = vunpack.c.0.s8 %v633
  %v635 = vperm.slane %v629, %v634
  %v637 = vunpack.c.l.s4 1934713408
  %v638 = vunpack.c.0.s8 %v637
  %v639 = vperm.slane %v631, %v638
  %v640 = vrot.slane %v635, 4
  %v641 = vsel %vm88, %v640, %v623
  %v642 = vrot.slane %v623, 4
  %v643 = vsel %vm88, %v635, %v642
  %v644 = vrot.slane %v639, 4
  %v645 = vsel %vm88, %v644, %v627
  %v646 = vrot.slane %v627, 4
  %v647 = vsel %vm88, %v639, %v646
  %v648 = vrot.slane %v60, 4
  %v649 = vsel %vm88, %v648, %v56
  %v651 = vunpack.c.l.s4 1983009808
  %v652 = vunpack.c.0.s8 %v651
  %v653 = vperm.slane %v649, %v652
  %v654 = vrot.slane %v62, 4
  %v655 = vsel %vm88, %v654, %v58
  %v657 = vunpack.c.l.s4 1983009808
  %v658 = vunpack.c.0.s8 %v657
  %v659 = vperm.slane %v655, %v658
  %v660 = vrot.slane %v68, 4
  %v661 = vsel %vm88, %v660, %v64
  %v663 = vunpack.c.l.s4 1983009808
  %v664 = vunpack.c.0.s8 %v663
  %v665 = vperm.slane %v661, %v664
  %v666 = vrot.slane %v70, 4
  %v667 = vsel %vm88, %v666, %v66
  %v669 = vunpack.c.l.s4 1983009808
  %v670 = vunpack.c.0.s8 %v669
  %v671 = vperm.slane %v667, %v670
  %v672 = vrot.slane %v659, 4
  %v673 = vsel %vm88, %v672, %v653
  %v674 = vrot.slane %v653, 4
  %v675 = vsel %vm88, %v659, %v674
  %v677 = vunpack.c.l.s4 1934713408
  %v678 = vunpack.c.0.s8 %v677
  %v679 = vperm.slane %v673, %v678
  %v681 = vunpack.c.l.s4 1934713408
  %v682 = vunpack.c.0.s8 %v681
  %v683 = vperm.slane %v675, %v682
  %v684 = vrot.slane %v671, 4
  %v685 = vsel %vm88, %v684, %v665
  %v686 = vrot.slane %v665, 4
  %v687 = vsel %vm88, %v671, %v686
  %v689 = vunpack.c.l.s4 1934713408
  %v690 = vunpack.c.0.s8 %v689
  %v691 = vperm.slane %v685, %v690
  %v693 = vunpack.c.l.s4 1934713408
  %v694 = vunpack.c.0.s8 %v693
  %v695 = vperm.slane %v687, %v694
  %v696 = vrot.slane %v691, 4
  %v697 = vsel %vm88, %v696, %v679
  %v698 = vrot.slane %v679, 4
  %v699 = vsel %vm88, %v691, %v698
  %v700 = vrot.slane %v695, 4
  %v701 = vsel %vm88, %v700, %v683
  %v702 = vrot.slane %v683, 4
  %v703 = vsel %vm88, %v695, %v702
  %v704 = vrot.slane %v76, 4
  %v705 = vsel %vm88, %v704, %v72
  %v707 = vunpack.c.l.s4 1983009808
  %v708 = vunpack.c.0.s8 %v707
  %v709 = vperm.slane %v705, %v708
  %v710 = vrot.slane %v78, 4
  %v711 = vsel %vm88, %v710, %v74
  %v713 = vunpack.c.l.s4 1983009808
  %v714 = vunpack.c.0.s8 %v713
  %v715 = vperm.slane %v711, %v714
  %v716 = vrot.slane %v84, 4
  %v717 = vsel %vm88, %v716, %v80
  %v719 = vunpack.c.l.s4 1983009808
  %v720 = vunpack.c.0.s8 %v719
  %v721 = vperm.slane %v717, %v720
  %v722 = vrot.slane %v86, 4
  %v723 = vsel %vm88, %v722, %v82
  %v725 = vunpack.c.l.s4 1983009808
  %v726 = vunpack.c.0.s8 %v725
  %v727 = vperm.slane %v723, %v726
  %v728 = vrot.slane %v715, 4
  %v729 = vsel %vm88, %v728, %v709
  %v730 = vrot.slane %v709, 4
  %v731 = vsel %vm88, %v715, %v730
  %v733 = vunpack.c.l.s4 1934713408
  %v734 = vunpack.c.0.s8 %v733
  %v735 = vperm.slane %v729, %v734
  %v737 = vunpack.c.l.s4 1934713408
  %v738 = vunpack.c.0.s8 %v737
  %v739 = vperm.slane %v731, %v738
  %v740 = vrot.slane %v727, 4
  %v741 = vsel %vm88, %v740, %v721
  %v742 = vrot.slane %v721, 4
  %v743 = vsel %vm88, %v727, %v742
  %v745 = vunpack.c.l.s4 1934713408
  %v746 = vunpack.c.0.s8 %v745
  %v747 = vperm.slane %v741, %v746
  %v749 = vunpack.c.l.s4 1934713408
  %v750 = vunpack.c.0.s8 %v749
  %v751 = vperm.slane %v743, %v750
  %v752 = vrot.slane %v747, 4
  %v753 = vsel %vm88, %v752, %v735
  %v754 = vrot.slane %v735, 4
  %v755 = vsel %vm88, %v747, %v754
  %v756 = vrot.slane %v751, 4
  %v757 = vsel %vm88, %v756, %v739
  %v758 = vrot.slane %v739, 4
  %v759 = vsel %vm88, %v751, %v758
  %v760 = vld [vmem:[%s2] sm:$0xff]
  %v761 = vld [vmem:[%s2 + $0x8] sm:$0xff]
  %v762 = vld [vmem:[%s2 + $0x10] sm:$0xff]
  %v763 = vld [vmem:[%s2 + $0x18] sm:$0xff]
  %v764 = vld [vmem:[%s2 + $0x20] sm:$0xff]
  %v765 = vld [vmem:[%s2 + $0x28] sm:$0xff]
  %v766 = vld [vmem:[%s2 + $0x30] sm:$0xff]
  %v767 = vld [vmem:[%s2 + $0x38] sm:$0xff]
  %v768 = vld [vmem:[%s3] sm:$0xff]
  %v769 = vld [vmem:[%s3 + $0x8] sm:$0xff]
  %v770 = vld [vmem:[%s3 + $0x10] sm:$0xff]
  %v771 = vld [vmem:[%s3 + $0x18] sm:$0xff]
  %v772 = vld [vmem:[%s3 + $0x20] sm:$0xff]
  %v773 = vld [vmem:[%s3 + $0x28] sm:$0xff]
  %v774 = vld [vmem:[%s3 + $0x30] sm:$0xff]
  %v775 = vld [vmem:[%s3 + $0x38] sm:$0xff]
  %777 = vset.pattern.permute.xlu0 0
  %778 = vperm.xlu0 %777, %v768
  %v779 = vpop.permute.xlu0 %778
  %782 = vset.pattern.permute.xlu0 0
  %783 = vperm.xlu0 %782, %v769
  %v784 = vpop.permute.xlu0 %783
  %787 = vset.pattern.permute.xlu0 0
  %788 = vperm.xlu0 %787, %v770
  %v789 = vpop.permute.xlu0 %788
  %792 = vset.pattern.permute.xlu0 0
  %793 = vperm.xlu0 %792, %v771
  %v794 = vpop.permute.xlu0 %793
  %797 = vset.pattern.permute.xlu0 0
  %798 = vperm.xlu0 %797, %v772
  %v799 = vpop.permute.xlu0 %798
  %802 = vset.pattern.permute.xlu0 0
  %803 = vperm.xlu0 %802, %v773
  %v804 = vpop.permute.xlu0 %803
  %807 = vset.pattern.permute.xlu0 0
  %808 = vperm.xlu0 %807, %v774
  %v809 = vpop.permute.xlu0 %808
  %812 = vset.pattern.permute.xlu0 0
  %813 = vperm.xlu0 %812, %v775
  %v814 = vpop.permute.xlu0 %813
  %vm816 = vcmask 261120
  %v818 = vsel %vm816, %v760, 0
  %v821 = vsel %vm816, %v761, 0
  %v824 = vsel %vm816, %v762, 0
  %v827 = vsel %vm816, %v763, 0
  %v830 = vsel %vm816, %v764, 0
  %v833 = vsel %vm816, %v765, 0
  %v836 = vsel %vm816, %v766, 0
  %v839 = vsel %vm816, %v767, 0
  %841 = vmatpush.msra.mxu0 0.0
  %842 = vmatpush.msra.mxu0 0.0
  %843 = vmatpush.msra.mxu0 0.0
  %844 = vmatpush.msra.mxu0 0.0
  %845 = vmatpush.msra.mxu0 0.0
  %846 = vmatpush.msra.mxu0 0.0
  %847 = vmatpush.msra.mxu0 0.0
  %848 = vmatpush.msra.mxu0 0.0
  %849 = vmatpush.msra.mxu0 0.0
  %850 = vmatpush.msra.mxu0 0.0
  %851 = vmatpush.msra.mxu0 0.0
  %852 = vmatpush.msra.mxu0 0.0
  %853 = vmatpush.msra.mxu0 %v521
  %854 = vmatpush.msra.mxu0 %v409
  %855 = vmatpush.msra.mxu0 %v297
  %856 = vmatpush.msra.mxu0 %v185
  %857 = vmatmul.f32.gmra.mxu0 %v818
  %v858 = vpop.f32.mrf.mxu0
  %v859 = vadd.f32 %v779, %v858
  %860 = vmatmul.f32.gmra.mxu0 %v821
  %v861 = vpop.f32.mrf.mxu0
  %v862 = vadd.f32 %v784, %v861
  %863 = vmatmul.f32.gmra.mxu0 %v824
  %v864 = vpop.f32.mrf.mxu0
  %v865 = vadd.f32 %v789, %v864
  %866 = vmatmul.f32.gmra.mxu0 %v827
  %v867 = vpop.f32.mrf.mxu0
  %v868 = vadd.f32 %v794, %v867
  %869 = vmatmul.f32.gmra.mxu0 %v830
  %v870 = vpop.f32.mrf.mxu0
  %v871 = vadd.f32 %v799, %v870
  %872 = vmatmul.f32.gmra.mxu0 %v833
  %v873 = vpop.f32.mrf.mxu0
  %v874 = vadd.f32 %v804, %v873
  %875 = vmatmul.f32.gmra.mxu0 %v836
  %v876 = vpop.f32.mrf.mxu0
  %v877 = vadd.f32 %v809, %v876
  %878 = vmatmul.f32.gmra.mxu0 %v839
  %v879 = vpop.f32.mrf.mxu0
  %v880 = vadd.f32 %v814, %v879
  %881 = vdwg.mxu0
  %882 = vmatpush.msra.mxu0 0.0
  %883 = vmatpush.msra.mxu0 0.0
  %884 = vmatpush.msra.mxu0 0.0
  %885 = vmatpush.msra.mxu0 0.0
  %886 = vmatpush.msra.mxu0 0.0
  %887 = vmatpush.msra.mxu0 0.0
  %888 = vmatpush.msra.mxu0 0.0
  %889 = vmatpush.msra.mxu0 0.0
  %890 = vmatpush.msra.mxu0 0.0
  %891 = vmatpush.msra.mxu0 0.0
  %892 = vmatpush.msra.mxu0 0.0
  %893 = vmatpush.msra.mxu0 0.0
  %894 = vmatpush.msra.mxu0 %v523
  %895 = vmatpush.msra.mxu0 %v411
  %896 = vmatpush.msra.mxu0 %v299
  %897 = vmatpush.msra.mxu0 %v187
  %898 = vmatmul.f32.gmra.mxu0 %v818
  %v899 = vpop.f32.mrf.mxu0
  %v900 = vadd.f32 %v779, %v899
  %901 = vmatmul.f32.gmra.mxu0 %v821
  %v902 = vpop.f32.mrf.mxu0
  %v903 = vadd.f32 %v784, %v902
  %904 = vmatmul.f32.gmra.mxu0 %v824
  %v905 = vpop.f32.mrf.mxu0
  %v906 = vadd.f32 %v789, %v905
  %907 = vmatmul.f32.gmra.mxu0 %v827
  %v908 = vpop.f32.mrf.mxu0
  %v909 = vadd.f32 %v794, %v908
  %910 = vmatmul.f32.gmra.mxu0 %v830
  %v911 = vpop.f32.mrf.mxu0
  %v912 = vadd.f32 %v799, %v911
  %913 = vmatmul.f32.gmra.mxu0 %v833
  %v914 = vpop.f32.mrf.mxu0
  %v915 = vadd.f32 %v804, %v914
  %916 = vmatmul.f32.gmra.mxu0 %v836
  %v917 = vpop.f32.mrf.mxu0
  %v918 = vadd.f32 %v809, %v917
  %919 = vmatmul.f32.gmra.mxu0 %v839
  %v920 = vpop.f32.mrf.mxu0
  %v921 = vadd.f32 %v814, %v920
  %922 = vdwg.mxu0
  %923 = vmatpush.msra.mxu0 0.0
  %924 = vmatpush.msra.mxu0 0.0
  %925 = vmatpush.msra.mxu0 0.0
  %926 = vmatpush.msra.mxu0 0.0
  %927 = vmatpush.msra.mxu0 0.0
  %928 = vmatpush.msra.mxu0 0.0
  %929 = vmatpush.msra.mxu0 0.0
  %930 = vmatpush.msra.mxu0 0.0
  %931 = vmatpush.msra.mxu0 0.0
  %932 = vmatpush.msra.mxu0 0.0
  %933 = vmatpush.msra.mxu0 0.0
  %934 = vmatpush.msra.mxu0 0.0
  %935 = vmatpush.msra.mxu0 %v525
  %936 = vmatpush.msra.mxu0 %v413
  %937 = vmatpush.msra.mxu0 %v301
  %938 = vmatpush.msra.mxu0 %v189
  %939 = vmatmul.f32.gmra.mxu0 %v818
  %v940 = vpop.f32.mrf.mxu0
  %v941 = vadd.f32 %v779, %v940
  %942 = vmatmul.f32.gmra.mxu0 %v821
  %v943 = vpop.f32.mrf.mxu0
  %v944 = vadd.f32 %v784, %v943
  %945 = vmatmul.f32.gmra.mxu0 %v824
  %v946 = vpop.f32.mrf.mxu0
  %v947 = vadd.f32 %v789, %v946
  %948 = vmatmul.f32.gmra.mxu0 %v827
  %v949 = vpop.f32.mrf.mxu0
  %v950 = vadd.f32 %v794, %v949
  %951 = vmatmul.f32.gmra.mxu0 %v830
  %v952 = vpop.f32.mrf.mxu0
  %v953 = vadd.f32 %v799, %v952
  %954 = vmatmul.f32.gmra.mxu0 %v833
  %v955 = vpop.f32.mrf.mxu0
  %v956 = vadd.f32 %v804, %v955
  %957 = vmatmul.f32.gmra.mxu0 %v836
  %v958 = vpop.f32.mrf.mxu0
  %v959 = vadd.f32 %v809, %v958
  %960 = vmatmul.f32.gmra.mxu0 %v839
  %v961 = vpop.f32.mrf.mxu0
  %v962 = vadd.f32 %v814, %v961
  %963 = vdwg.mxu0
  %964 = vmatpush.msra.mxu0 0.0
  %965 = vmatpush.msra.mxu0 0.0
  %966 = vmatpush.msra.mxu0 0.0
  %967 = vmatpush.msra.mxu0 0.0
  %968 = vmatpush.msra.mxu0 0.0
  %969 = vmatpush.msra.mxu0 0.0
  %970 = vmatpush.msra.mxu0 0.0
  %971 = vmatpush.msra.mxu0 0.0
  %972 = vmatpush.msra.mxu0 0.0
  %973 = vmatpush.msra.mxu0 0.0
  %974 = vmatpush.msra.mxu0 0.0
  %975 = vmatpush.msra.mxu0 0.0
  %976 = vmatpush.msra.mxu0 %v527
  %977 = vmatpush.msra.mxu0 %v415
  %978 = vmatpush.msra.mxu0 %v303
  %979 = vmatpush.msra.mxu0 %v191
  %980 = vmatmul.f32.gmra.mxu0 %v818
  %v981 = vpop.f32.mrf.mxu0
  %v982 = vadd.f32 %v779, %v981
  %983 = vmatmul.f32.gmra.mxu0 %v821
  %v984 = vpop.f32.mrf.mxu0
  %v985 = vadd.f32 %v784, %v984
  %986 = vmatmul.f32.gmra.mxu0 %v824
  %v987 = vpop.f32.mrf.mxu0
  %v988 = vadd.f32 %v789, %v987
  %989 = vmatmul.f32.gmra.mxu0 %v827
  %v990 = vpop.f32.mrf.mxu0
  %v991 = vadd.f32 %v794, %v990
  %992 = vmatmul.f32.gmra.mxu0 %v830
  %v993 = vpop.f32.mrf.mxu0
  %v994 = vadd.f32 %v799, %v993
  %995 = vmatmul.f32.gmra.mxu0 %v833
  %v996 = vpop.f32.mrf.mxu0
  %v997 = vadd.f32 %v804, %v996
  %998 = vmatmul.f32.gmra.mxu0 %v836
  %v999 = vpop.f32.mrf.mxu0
  %v1000 = vadd.f32 %v809, %v999
  %1001 = vmatmul.f32.gmra.mxu0 %v839
  %v1002 = vpop.f32.mrf.mxu0
  %v1003 = vadd.f32 %v814, %v1002
  %1004 = vdwg.mxu0
  %1005 = vmatpush.msra.mxu0 0.0
  %1006 = vmatpush.msra.mxu0 0.0
  %1007 = vmatpush.msra.mxu0 0.0
  %1008 = vmatpush.msra.mxu0 0.0
  %1009 = vmatpush.msra.mxu0 0.0
  %1010 = vmatpush.msra.mxu0 0.0
  %1011 = vmatpush.msra.mxu0 0.0
  %1012 = vmatpush.msra.mxu0 0.0
  %1013 = vmatpush.msra.mxu0 0.0
  %1014 = vmatpush.msra.mxu0 0.0
  %1015 = vmatpush.msra.mxu0 0.0
  %1016 = vmatpush.msra.mxu0 0.0
  %1017 = vmatpush.msra.mxu0 %v529
  %1018 = vmatpush.msra.mxu0 %v417
  %1019 = vmatpush.msra.mxu0 %v305
  %1020 = vmatpush.msra.mxu0 %v193
  %1021 = vmatmul.f32.gmra.mxu0 %v818
  %v1022 = vpop.f32.mrf.mxu0
  %v1023 = vadd.f32 %v779, %v1022
  %1024 = vmatmul.f32.gmra.mxu0 %v821
  %v1025 = vpop.f32.mrf.mxu0
  %v1026 = vadd.f32 %v784, %v1025
  %1027 = vmatmul.f32.gmra.mxu0 %v824
  %v1028 = vpop.f32.mrf.mxu0
  %v1029 = vadd.f32 %v789, %v1028
  %1030 = vmatmul.f32.gmra.mxu0 %v827
  %v1031 = vpop.f32.mrf.mxu0
  %v1032 = vadd.f32 %v794, %v1031
  %1033 = vmatmul.f32.gmra.mxu0 %v830
  %v1034 = vpop.f32.mrf.mxu0
  %v1035 = vadd.f32 %v799, %v1034
  %1036 = vmatmul.f32.gmra.mxu0 %v833
  %v1037 = vpop.f32.mrf.mxu0
  %v1038 = vadd.f32 %v804, %v1037
  %1039 = vmatmul.f32.gmra.mxu0 %v836
  %v1040 = vpop.f32.mrf.mxu0
  %v1041 = vadd.f32 %v809, %v1040
  %1042 = vmatmul.f32.gmra.mxu0 %v839
  %v1043 = vpop.f32.mrf.mxu0
  %v1044 = vadd.f32 %v814, %v1043
  %1045 = vdwg.mxu0
  %1046 = vmatpush.msra.mxu0 0.0
  %1047 = vmatpush.msra.mxu0 0.0
  %1048 = vmatpush.msra.mxu0 0.0
  %1049 = vmatpush.msra.mxu0 0.0
  %1050 = vmatpush.msra.mxu0 0.0
  %1051 = vmatpush.msra.mxu0 0.0
  %1052 = vmatpush.msra.mxu0 0.0
  %1053 = vmatpush.msra.mxu0 0.0
  %1054 = vmatpush.msra.mxu0 0.0
  %1055 = vmatpush.msra.mxu0 0.0
  %1056 = vmatpush.msra.mxu0 0.0
  %1057 = vmatpush.msra.mxu0 0.0
  %1058 = vmatpush.msra.mxu0 %v531
  %1059 = vmatpush.msra.mxu0 %v419
  %1060 = vmatpush.msra.mxu0 %v307
  %1061 = vmatpush.msra.mxu0 %v195
  %1062 = vmatmul.f32.gmra.mxu0 %v818
  %v1063 = vpop.f32.mrf.mxu0
  %v1064 = vadd.f32 %v779, %v1063
  %1065 = vmatmul.f32.gmra.mxu0 %v821
  %v1066 = vpop.f32.mrf.mxu0
  %v1067 = vadd.f32 %v784, %v1066
  %1068 = vmatmul.f32.gmra.mxu0 %v824
  %v1069 = vpop.f32.mrf.mxu0
  %v1070 = vadd.f32 %v789, %v1069
  %1071 = vmatmul.f32.gmra.mxu0 %v827
  %v1072 = vpop.f32.mrf.mxu0
  %v1073 = vadd.f32 %v794, %v1072
  %1074 = vmatmul.f32.gmra.mxu0 %v830
  %v1075 = vpop.f32.mrf.mxu0
  %v1076 = vadd.f32 %v799, %v1075
  %1077 = vmatmul.f32.gmra.mxu0 %v833
  %v1078 = vpop.f32.mrf.mxu0
  %v1079 = vadd.f32 %v804, %v1078
  %1080 = vmatmul.f32.gmra.mxu0 %v836
  %v1081 = vpop.f32.mrf.mxu0
  %v1082 = vadd.f32 %v809, %v1081
  %1083 = vmatmul.f32.gmra.mxu0 %v839
  %v1084 = vpop.f32.mrf.mxu0
  %v1085 = vadd.f32 %v814, %v1084
  %1086 = vdwg.mxu0
  %1087 = vmatpush.msra.mxu0 0.0
  %1088 = vmatpush.msra.mxu0 0.0
  %1089 = vmatpush.msra.mxu0 0.0
  %1090 = vmatpush.msra.mxu0 0.0
  %1091 = vmatpush.msra.mxu0 0.0
  %1092 = vmatpush.msra.mxu0 0.0
  %1093 = vmatpush.msra.mxu0 0.0
  %1094 = vmatpush.msra.mxu0 0.0
  %1095 = vmatpush.msra.mxu0 0.0
  %1096 = vmatpush.msra.mxu0 0.0
  %1097 = vmatpush.msra.mxu0 0.0
  %1098 = vmatpush.msra.mxu0 0.0
  %1099 = vmatpush.msra.mxu0 %v533
  %1100 = vmatpush.msra.mxu0 %v421
  %1101 = vmatpush.msra.mxu0 %v309
  %1102 = vmatpush.msra.mxu0 %v197
  %1103 = vmatmul.f32.gmra.mxu0 %v818
  %v1104 = vpop.f32.mrf.mxu0
  %v1105 = vadd.f32 %v779, %v1104
  %1106 = vmatmul.f32.gmra.mxu0 %v821
  %v1107 = vpop.f32.mrf.mxu0
  %v1108 = vadd.f32 %v784, %v1107
  %1109 = vmatmul.f32.gmra.mxu0 %v824
  %v1110 = vpop.f32.mrf.mxu0
  %v1111 = vadd.f32 %v789, %v1110
  %1112 = vmatmul.f32.gmra.mxu0 %v827
  %v1113 = vpop.f32.mrf.mxu0
  %v1114 = vadd.f32 %v794, %v1113
  %1115 = vmatmul.f32.gmra.mxu0 %v830
  %v1116 = vpop.f32.mrf.mxu0
  %v1117 = vadd.f32 %v799, %v1116
  %1118 = vmatmul.f32.gmra.mxu0 %v833
  %v1119 = vpop.f32.mrf.mxu0
  %v1120 = vadd.f32 %v804, %v1119
  %1121 = vmatmul.f32.gmra.mxu0 %v836
  %v1122 = vpop.f32.mrf.mxu0
  %v1123 = vadd.f32 %v809, %v1122
  %1124 = vmatmul.f32.gmra.mxu0 %v839
  %v1125 = vpop.f32.mrf.mxu0
  %v1126 = vadd.f32 %v814, %v1125
  %1127 = vdwg.mxu0
  %1128 = vmatpush.msra.mxu0 0.0
  %1129 = vmatpush.msra.mxu0 0.0
  %1130 = vmatpush.msra.mxu0 0.0
  %1131 = vmatpush.msra.mxu0 0.0
  %1132 = vmatpush.msra.mxu0 0.0
  %1133 = vmatpush.msra.mxu0 0.0
  %1134 = vmatpush.msra.mxu0 0.0
  %1135 = vmatpush.msra.mxu0 0.0
  %1136 = vmatpush.msra.mxu0 0.0
  %1137 = vmatpush.msra.mxu0 0.0
  %1138 = vmatpush.msra.mxu0 0.0
  %1139 = vmatpush.msra.mxu0 0.0
  %1140 = vmatpush.msra.mxu0 %v535
  %1141 = vmatpush.msra.mxu0 %v423
  %1142 = vmatpush.msra.mxu0 %v311
  %1143 = vmatpush.msra.mxu0 %v199
  %1144 = vmatmul.f32.gmra.mxu0 %v818
  %v1145 = vpop.f32.mrf.mxu0
  %v1146 = vadd.f32 %v779, %v1145
  %1147 = vmatmul.f32.gmra.mxu0 %v821
  %v1148 = vpop.f32.mrf.mxu0
  %v1149 = vadd.f32 %v784, %v1148
  %1150 = vmatmul.f32.gmra.mxu0 %v824
  %v1151 = vpop.f32.mrf.mxu0
  %v1152 = vadd.f32 %v789, %v1151
  %1153 = vmatmul.f32.gmra.mxu0 %v827
  %v1154 = vpop.f32.mrf.mxu0
  %v1155 = vadd.f32 %v794, %v1154
  %1156 = vmatmul.f32.gmra.mxu0 %v830
  %v1157 = vpop.f32.mrf.mxu0
  %v1158 = vadd.f32 %v799, %v1157
  %1159 = vmatmul.f32.gmra.mxu0 %v833
  %v1160 = vpop.f32.mrf.mxu0
  %v1161 = vadd.f32 %v804, %v1160
  %1162 = vmatmul.f32.gmra.mxu0 %v836
  %v1163 = vpop.f32.mrf.mxu0
  %v1164 = vadd.f32 %v809, %v1163
  %1165 = vmatmul.f32.gmra.mxu0 %v839
  %v1166 = vpop.f32.mrf.mxu0
  %v1167 = vadd.f32 %v814, %v1166
  %1168 = vdwg.mxu0
  %1169 = vmatpush.msra.mxu0 0.0
  %1170 = vmatpush.msra.mxu0 0.0
  %1171 = vmatpush.msra.mxu0 0.0
  %1172 = vmatpush.msra.mxu0 0.0
  %1173 = vmatpush.msra.mxu0 0.0
  %1174 = vmatpush.msra.mxu0 0.0
  %1175 = vmatpush.msra.mxu0 0.0
  %1176 = vmatpush.msra.mxu0 0.0
  %1177 = vmatpush.msra.mxu0 0.0
  %1178 = vmatpush.msra.mxu0 0.0
  %1179 = vmatpush.msra.mxu0 0.0
  %1180 = vmatpush.msra.mxu0 0.0
  %1181 = vmatpush.msra.mxu0 %v753
  %1182 = vmatpush.msra.mxu0 %v697
  %1183 = vmatpush.msra.mxu0 %v641
  %1184 = vmatpush.msra.mxu0 %v585
  %1185 = vmatmul.f32.gmra.mxu0 %v818
  %v1186 = vpop.f32.mrf.mxu0
  %v1187 = vadd.f32 %v779, %v1186
  %1188 = vmatmul.f32.gmra.mxu0 %v821
  %v1189 = vpop.f32.mrf.mxu0
  %v1190 = vadd.f32 %v784, %v1189
  %1191 = vmatmul.f32.gmra.mxu0 %v824
  %v1192 = vpop.f32.mrf.mxu0
  %v1193 = vadd.f32 %v789, %v1192
  %1194 = vmatmul.f32.gmra.mxu0 %v827
  %v1195 = vpop.f32.mrf.mxu0
  %v1196 = vadd.f32 %v794, %v1195
  %1197 = vmatmul.f32.gmra.mxu0 %v830
  %v1198 = vpop.f32.mrf.mxu0
  %v1199 = vadd.f32 %v799, %v1198
  %1200 = vmatmul.f32.gmra.mxu0 %v833
  %v1201 = vpop.f32.mrf.mxu0
  %v1202 = vadd.f32 %v804, %v1201
  %1203 = vmatmul.f32.gmra.mxu0 %v836
  %v1204 = vpop.f32.mrf.mxu0
  %v1205 = vadd.f32 %v809, %v1204
  %1206 = vmatmul.f32.gmra.mxu0 %v839
  %v1207 = vpop.f32.mrf.mxu0
  %v1208 = vadd.f32 %v814, %v1207
  %1209 = vdwg.mxu0
  %1210 = vmatpush.msra.mxu0 0.0
  %1211 = vmatpush.msra.mxu0 0.0
  %1212 = vmatpush.msra.mxu0 0.0
  %1213 = vmatpush.msra.mxu0 0.0
  %1214 = vmatpush.msra.mxu0 0.0
  %1215 = vmatpush.msra.mxu0 0.0
  %1216 = vmatpush.msra.mxu0 0.0
  %1217 = vmatpush.msra.mxu0 0.0
  %1218 = vmatpush.msra.mxu0 0.0
  %1219 = vmatpush.msra.mxu0 0.0
  %1220 = vmatpush.msra.mxu0 0.0
  %1221 = vmatpush.msra.mxu0 0.0
  %1222 = vmatpush.msra.mxu0 %v755
  %1223 = vmatpush.msra.mxu0 %v699
  %1224 = vmatpush.msra.mxu0 %v643
  %1225 = vmatpush.msra.mxu0 %v587
  %1226 = vmatmul.f32.gmra.mxu0 %v818
  %v1227 = vpop.f32.mrf.mxu0
  %v1228 = vadd.f32 %v779, %v1227
  %1229 = vmatmul.f32.gmra.mxu0 %v821
  %v1230 = vpop.f32.mrf.mxu0
  %v1231 = vadd.f32 %v784, %v1230
  %1232 = vmatmul.f32.gmra.mxu0 %v824
  %v1233 = vpop.f32.mrf.mxu0
  %v1234 = vadd.f32 %v789, %v1233
  %1235 = vmatmul.f32.gmra.mxu0 %v827
  %v1236 = vpop.f32.mrf.mxu0
  %v1237 = vadd.f32 %v794, %v1236
  %1238 = vmatmul.f32.gmra.mxu0 %v830
  %v1239 = vpop.f32.mrf.mxu0
  %v1240 = vadd.f32 %v799, %v1239
  %1241 = vmatmul.f32.gmra.mxu0 %v833
  %v1242 = vpop.f32.mrf.mxu0
  %v1243 = vadd.f32 %v804, %v1242
  %1244 = vmatmul.f32.gmra.mxu0 %v836
  %v1245 = vpop.f32.mrf.mxu0
  %v1246 = vadd.f32 %v809, %v1245
  %1247 = vmatmul.f32.gmra.mxu0 %v839
  %v1248 = vpop.f32.mrf.mxu0
  %v1249 = vadd.f32 %v814, %v1248
  %1250 = vdwg.mxu0
  %1251 = vmatpush.msra.mxu0 0.0
  %1252 = vmatpush.msra.mxu0 0.0
  %1253 = vmatpush.msra.mxu0 0.0
  %1254 = vmatpush.msra.mxu0 0.0
  %1255 = vmatpush.msra.mxu0 0.0
  %1256 = vmatpush.msra.mxu0 0.0
  %1257 = vmatpush.msra.mxu0 0.0
  %1258 = vmatpush.msra.mxu0 0.0
  %1259 = vmatpush.msra.mxu0 0.0
  %1260 = vmatpush.msra.mxu0 0.0
  %1261 = vmatpush.msra.mxu0 0.0
  %1262 = vmatpush.msra.mxu0 0.0
  %1263 = vmatpush.msra.mxu0 %v757
  %1264 = vmatpush.msra.mxu0 %v701
  %1265 = vmatpush.msra.mxu0 %v645
  %1266 = vmatpush.msra.mxu0 %v589
  %1267 = vmatmul.f32.gmra.mxu0 %v818
  %v1268 = vpop.f32.mrf.mxu0
  %v1269 = vadd.f32 %v779, %v1268
  %1270 = vmatmul.f32.gmra.mxu0 %v821
  %v1271 = vpop.f32.mrf.mxu0
  %v1272 = vadd.f32 %v784, %v1271
  %1273 = vmatmul.f32.gmra.mxu0 %v824
  %v1274 = vpop.f32.mrf.mxu0
  %v1275 = vadd.f32 %v789, %v1274
  %1276 = vmatmul.f32.gmra.mxu0 %v827
  %v1277 = vpop.f32.mrf.mxu0
  %v1278 = vadd.f32 %v794, %v1277
  %1279 = vmatmul.f32.gmra.mxu0 %v830
  %v1280 = vpop.f32.mrf.mxu0
  %v1281 = vadd.f32 %v799, %v1280
  %1282 = vmatmul.f32.gmra.mxu0 %v833
  %v1283 = vpop.f32.mrf.mxu0
  %v1284 = vadd.f32 %v804, %v1283
  %1285 = vmatmul.f32.gmra.mxu0 %v836
  %v1286 = vpop.f32.mrf.mxu0
  %v1287 = vadd.f32 %v809, %v1286
  %1288 = vmatmul.f32.gmra.mxu0 %v839
  %v1289 = vpop.f32.mrf.mxu0
  %v1290 = vadd.f32 %v814, %v1289
  %1291 = vdwg.mxu0
  %1292 = vmatpush.msra.mxu0 0.0
  %1293 = vmatpush.msra.mxu0 0.0
  %1294 = vmatpush.msra.mxu0 0.0
  %1295 = vmatpush.msra.mxu0 0.0
  %1296 = vmatpush.msra.mxu0 0.0
  %1297 = vmatpush.msra.mxu0 0.0
  %1298 = vmatpush.msra.mxu0 0.0
  %1299 = vmatpush.msra.mxu0 0.0
  %1300 = vmatpush.msra.mxu0 0.0
  %1301 = vmatpush.msra.mxu0 0.0
  %1302 = vmatpush.msra.mxu0 0.0
  %1303 = vmatpush.msra.mxu0 0.0
  %1304 = vmatpush.msra.mxu0 %v759
  %1305 = vmatpush.msra.mxu0 %v703
  %1306 = vmatpush.msra.mxu0 %v647
  %1307 = vmatpush.msra.mxu0 %v591
  %1308 = vmatmul.f32.gmra.mxu0 %v818
  %v1309 = vpop.f32.mrf.mxu0
  %v1310 = vadd.f32 %v779, %v1309
  %1311 = vmatmul.f32.gmra.mxu0 %v821
  %v1312 = vpop.f32.mrf.mxu0
  %v1313 = vadd.f32 %v784, %v1312
  %1314 = vmatmul.f32.gmra.mxu0 %v824
  %v1315 = vpop.f32.mrf.mxu0
  %v1316 = vadd.f32 %v789, %v1315
  %1317 = vmatmul.f32.gmra.mxu0 %v827
  %v1318 = vpop.f32.mrf.mxu0
  %v1319 = vadd.f32 %v794, %v1318
  %1320 = vmatmul.f32.gmra.mxu0 %v830
  %v1321 = vpop.f32.mrf.mxu0
  %v1322 = vadd.f32 %v799, %v1321
  %1323 = vmatmul.f32.gmra.mxu0 %v833
  %v1324 = vpop.f32.mrf.mxu0
  %v1325 = vadd.f32 %v804, %v1324
  %1326 = vmatmul.f32.gmra.mxu0 %v836
  %v1327 = vpop.f32.mrf.mxu0
  %v1328 = vadd.f32 %v809, %v1327
  %1329 = vmatmul.f32.gmra.mxu0 %v839
  %v1330 = vpop.f32.mrf.mxu0
  %v1331 = vadd.f32 %v814, %v1330
  %1332 = vdwg.mxu0
  %vm1333 = vcmp.gt.f32.partialorder %v859, 20.0
  %vm1334 = vcmp.gt.f32.partialorder %v900, 20.0
  %vm1335 = vcmp.gt.f32.partialorder %v941, 20.0
  %vm1336 = vcmp.gt.f32.partialorder %v982, 20.0
  %vm1337 = vcmp.gt.f32.partialorder %v1023, 20.0
  %vm1338 = vcmp.gt.f32.partialorder %v1064, 20.0
  %vm1339 = vcmp.gt.f32.partialorder %v1105, 20.0
  %vm1340 = vcmp.gt.f32.partialorder %v1146, 20.0
  %vm1341 = vcmp.gt.f32.partialorder %v1187, 20.0
  %vm1342 = vcmp.gt.f32.partialorder %v1228, 20.0
  %vm1343 = vcmp.gt.f32.partialorder %v1269, 20.0
  %vm1344 = vcmp.gt.f32.partialorder %v1310, 20.0
  %vm1345 = vcmp.gt.f32.partialorder %v862, 20.0
  %vm1346 = vcmp.gt.f32.partialorder %v903, 20.0
  %vm1347 = vcmp.gt.f32.partialorder %v944, 20.0
  %vm1348 = vcmp.gt.f32.partialorder %v985, 20.0
  %vm1349 = vcmp.gt.f32.partialorder %v1026, 20.0
  %vm1350 = vcmp.gt.f32.partialorder %v1067, 20.0
  %vm1351 = vcmp.gt.f32.partialorder %v1108, 20.0
  %vm1352 = vcmp.gt.f32.partialorder %v1149, 20.0
  %vm1353 = vcmp.gt.f32.partialorder %v1190, 20.0
  %vm1354 = vcmp.gt.f32.partialorder %v1231, 20.0
  %vm1355 = vcmp.gt.f32.partialorder %v1272, 20.0
  %vm1356 = vcmp.gt.f32.partialorder %v1313, 20.0
  %vm1357 = vcmp.gt.f32.partialorder %v865, 20.0
  %vm1358 = vcmp.gt.f32.partialorder %v906, 20.0
  %vm1359 = vcmp.gt.f32.partialorder %v947, 20.0
  %vm1360 = vcmp.gt.f32.partialorder %v988, 20.0
  %vm1361 = vcmp.gt.f32.partialorder %v1029, 20.0
  %vm1362 = vcmp.gt.f32.partialorder %v1070, 20.0
  %vm1363 = vcmp.gt.f32.partialorder %v1111, 20.0
  %vm1364 = vcmp.gt.f32.partialorder %v1152, 20.0
  %vm1365 = vcmp.gt.f32.partialorder %v1193, 20.0
  %vm1366 = vcmp.gt.f32.partialorder %v1234, 20.0
  %vm1367 = vcmp.gt.f32.partialorder %v1275, 20.0
  %vm1368 = vcmp.gt.f32.partialorder %v1316, 20.0
  %vm1369 = vcmp.gt.f32.partialorder %v868, 20.0
  %vm1370 = vcmp.gt.f32.partialorder %v909, 20.0
  %vm1371 = vcmp.gt.f32.partialorder %v950, 20.0
  %vm1372 = vcmp.gt.f32.partialorder %v991, 20.0
  %vm1373 = vcmp.gt.f32.partialorder %v1032, 20.0
  %vm1374 = vcmp.gt.f32.partialorder %v1073, 20.0
  %vm1375 = vcmp.gt.f32.partialorder %v1114, 20.0
  %vm1376 = vcmp.gt.f32.partialorder %v1155, 20.0
  %vm1377 = vcmp.gt.f32.partialorder %v1196, 20.0
  %vm1378 = vcmp.gt.f32.partialorder %v1237, 20.0
  %vm1379 = vcmp.gt.f32.partialorder %v1278, 20.0
  %vm1380 = vcmp.gt.f32.partialorder %v1319, 20.0
  %vm1381 = vcmp.gt.f32.partialorder %v871, 20.0
  %vm1382 = vcmp.gt.f32.partialorder %v912, 20.0
  %vm1383 = vcmp.gt.f32.partialorder %v953, 20.0
  %vm1384 = vcmp.gt.f32.partialorder %v994, 20.0
  %vm1385 = vcmp.gt.f32.partialorder %v1035, 20.0
  %vm1386 = vcmp.gt.f32.partialorder %v1076, 20.0
  %vm1387 = vcmp.gt.f32.partialorder %v1117, 20.0
  %vm1388 = vcmp.gt.f32.partialorder %v1158, 20.0
  %vm1389 = vcmp.gt.f32.partialorder %v1199, 20.0
  %vm1390 = vcmp.gt.f32.partialorder %v1240, 20.0
  %vm1391 = vcmp.gt.f32.partialorder %v1281, 20.0
  %vm1392 = vcmp.gt.f32.partialorder %v1322, 20.0
  %vm1393 = vcmp.gt.f32.partialorder %v874, 20.0
  %vm1394 = vcmp.gt.f32.partialorder %v915, 20.0
  %vm1395 = vcmp.gt.f32.partialorder %v956, 20.0
  %vm1396 = vcmp.gt.f32.partialorder %v997, 20.0
  %vm1397 = vcmp.gt.f32.partialorder %v1038, 20.0
  %vm1398 = vcmp.gt.f32.partialorder %v1079, 20.0
  %vm1399 = vcmp.gt.f32.partialorder %v1120, 20.0
  %vm1400 = vcmp.gt.f32.partialorder %v1161, 20.0
  %vm1401 = vcmp.gt.f32.partialorder %v1202, 20.0
  %vm1402 = vcmp.gt.f32.partialorder %v1243, 20.0
  %vm1403 = vcmp.gt.f32.partialorder %v1284, 20.0
  %vm1404 = vcmp.gt.f32.partialorder %v1325, 20.0
  %vm1405 = vcmp.gt.f32.partialorder %v877, 20.0
  %vm1406 = vcmp.gt.f32.partialorder %v918, 20.0
  %vm1407 = vcmp.gt.f32.partialorder %v959, 20.0
  %vm1408 = vcmp.gt.f32.partialorder %v1000, 20.0
  %vm1409 = vcmp.gt.f32.partialorder %v1041, 20.0
  %vm1410 = vcmp.gt.f32.partialorder %v1082, 20.0
  %vm1411 = vcmp.gt.f32.partialorder %v1123, 20.0
  %vm1412 = vcmp.gt.f32.partialorder %v1164, 20.0
  %vm1413 = vcmp.gt.f32.partialorder %v1205, 20.0
  %vm1414 = vcmp.gt.f32.partialorder %v1246, 20.0
  %vm1415 = vcmp.gt.f32.partialorder %v1287, 20.0
  %vm1416 = vcmp.gt.f32.partialorder %v1328, 20.0
  %vm1417 = vcmp.gt.f32.partialorder %v880, 20.0
  %vm1418 = vcmp.gt.f32.partialorder %v921, 20.0
  %vm1419 = vcmp.gt.f32.partialorder %v962, 20.0
  %vm1420 = vcmp.gt.f32.partialorder %v1003, 20.0
  %vm1421 = vcmp.gt.f32.partialorder %v1044, 20.0
  %vm1422 = vcmp.gt.f32.partialorder %v1085, 20.0
  %vm1423 = vcmp.gt.f32.partialorder %v1126, 20.0
  %vm1424 = vcmp.gt.f32.partialorder %v1167, 20.0
  %vm1425 = vcmp.gt.f32.partialorder %v1208, 20.0
  %vm1426 = vcmp.gt.f32.partialorder %v1249, 20.0
  %vm1427 = vcmp.gt.f32.partialorder %v1290, 20.0
  %vm1428 = vcmp.gt.f32.partialorder %v1331, 20.0
  %v1429 = vmin.f32 %v859, 20.0
  %v1430 = vmin.f32 %v900, 20.0
  %v1431 = vmin.f32 %v941, 20.0
  %v1432 = vmin.f32 %v982, 20.0
  %v1433 = vmin.f32 %v1023, 20.0
  %v1434 = vmin.f32 %v1064, 20.0
  %v1435 = vmin.f32 %v1105, 20.0
  %v1436 = vmin.f32 %v1146, 20.0
  %v1437 = vmin.f32 %v1187, 20.0
  %v1438 = vmin.f32 %v1228, 20.0
  %v1439 = vmin.f32 %v1269, 20.0
  %v1440 = vmin.f32 %v1310, 20.0
  %v1441 = vmin.f32 %v862, 20.0
  %v1442 = vmin.f32 %v903, 20.0
  %v1443 = vmin.f32 %v944, 20.0
  %v1444 = vmin.f32 %v985, 20.0
  %v1445 = vmin.f32 %v1026, 20.0
  %v1446 = vmin.f32 %v1067, 20.0
  %v1447 = vmin.f32 %v1108, 20.0
  %v1448 = vmin.f32 %v1149, 20.0
  %v1449 = vmin.f32 %v1190, 20.0
  %v1450 = vmin.f32 %v1231, 20.0
  %v1451 = vmin.f32 %v1272, 20.0
  %v1452 = vmin.f32 %v1313, 20.0
  %v1453 = vmin.f32 %v865, 20.0
  %v1454 = vmin.f32 %v906, 20.0
  %v1455 = vmin.f32 %v947, 20.0
  %v1456 = vmin.f32 %v988, 20.0
  %v1457 = vmin.f32 %v1029, 20.0
  %v1458 = vmin.f32 %v1070, 20.0
  %v1459 = vmin.f32 %v1111, 20.0
  %v1460 = vmin.f32 %v1152, 20.0
  %v1461 = vmin.f32 %v1193, 20.0
  %v1462 = vmin.f32 %v1234, 20.0
  %v1463 = vmin.f32 %v1275, 20.0
  %v1464 = vmin.f32 %v1316, 20.0
  %v1465 = vmin.f32 %v868, 20.0
  %v1466 = vmin.f32 %v909, 20.0
  %v1467 = vmin.f32 %v950, 20.0
  %v1468 = vmin.f32 %v991, 20.0
  %v1469 = vmin.f32 %v1032, 20.0
  %v1470 = vmin.f32 %v1073, 20.0
  %v1471 = vmin.f32 %v1114, 20.0
  %v1472 = vmin.f32 %v1155, 20.0
  %v1473 = vmin.f32 %v1196, 20.0
  %v1474 = vmin.f32 %v1237, 20.0
  %v1475 = vmin.f32 %v1278, 20.0
  %v1476 = vmin.f32 %v1319, 20.0
  %v1477 = vmin.f32 %v871, 20.0
  %v1478 = vmin.f32 %v912, 20.0
  %v1479 = vmin.f32 %v953, 20.0
  %v1480 = vmin.f32 %v994, 20.0
  %v1481 = vmin.f32 %v1035, 20.0
  %v1482 = vmin.f32 %v1076, 20.0
  %v1483 = vmin.f32 %v1117, 20.0
  %v1484 = vmin.f32 %v1158, 20.0
  %v1485 = vmin.f32 %v1199, 20.0
  %v1486 = vmin.f32 %v1240, 20.0
  %v1487 = vmin.f32 %v1281, 20.0
  %v1488 = vmin.f32 %v1322, 20.0
  %v1489 = vmin.f32 %v874, 20.0
  %v1490 = vmin.f32 %v915, 20.0
  %v1491 = vmin.f32 %v956, 20.0
  %v1492 = vmin.f32 %v997, 20.0
  %v1493 = vmin.f32 %v1038, 20.0
  %v1494 = vmin.f32 %v1079, 20.0
  %v1495 = vmin.f32 %v1120, 20.0
  %v1496 = vmin.f32 %v1161, 20.0
  %v1497 = vmin.f32 %v1202, 20.0
  %v1498 = vmin.f32 %v1243, 20.0
  %v1499 = vmin.f32 %v1284, 20.0
  %v1500 = vmin.f32 %v1325, 20.0
  %v1501 = vmin.f32 %v877, 20.0
  %v1502 = vmin.f32 %v918, 20.0
  %v1503 = vmin.f32 %v959, 20.0
  %v1504 = vmin.f32 %v1000, 20.0
  %v1505 = vmin.f32 %v1041, 20.0
  %v1506 = vmin.f32 %v1082, 20.0
  %v1507 = vmin.f32 %v1123, 20.0
  %v1508 = vmin.f32 %v1164, 20.0
  %v1509 = vmin.f32 %v1205, 20.0
  %v1510 = vmin.f32 %v1246, 20.0
  %v1511 = vmin.f32 %v1287, 20.0
  %v1512 = vmin.f32 %v1328, 20.0
  %v1513 = vmin.f32 %v880, 20.0
  %v1514 = vmin.f32 %v921, 20.0
  %v1515 = vmin.f32 %v962, 20.0
  %v1516 = vmin.f32 %v1003, 20.0
  %v1517 = vmin.f32 %v1044, 20.0
  %v1518 = vmin.f32 %v1085, 20.0
  %v1519 = vmin.f32 %v1126, 20.0
  %v1520 = vmin.f32 %v1167, 20.0
  %v1521 = vmin.f32 %v1208, 20.0
  %v1522 = vmin.f32 %v1249, 20.0
  %v1523 = vmin.f32 %v1290, 20.0
  %v1524 = vmin.f32 %v1331, 20.0
  %v1525 = vmul.f32 %v1429, 1.442695
  %v1526 = vpow.pop %v1525
  %v1527 = vmul.f32 %v1430, 1.442695
  %v1528 = vpow.pop %v1527
  %v1529 = vmul.f32 %v1431, 1.442695
  %v1530 = vpow.pop %v1529
  %v1531 = vmul.f32 %v1432, 1.442695
  %v1532 = vpow.pop %v1531
  %v1533 = vmul.f32 %v1433, 1.442695
  %v1534 = vpow.pop %v1533
  %v1535 = vmul.f32 %v1434, 1.442695
  %v1536 = vpow.pop %v1535
  %v1537 = vmul.f32 %v1435, 1.442695
  %v1538 = vpow.pop %v1537
  %v1539 = vmul.f32 %v1436, 1.442695
  %v1540 = vpow.pop %v1539
  %v1541 = vmul.f32 %v1437, 1.442695
  %v1542 = vpow.pop %v1541
  %v1543 = vmul.f32 %v1438, 1.442695
  %v1544 = vpow.pop %v1543
  %v1545 = vmul.f32 %v1439, 1.442695
  %v1546 = vpow.pop %v1545
  %v1547 = vmul.f32 %v1440, 1.442695
  %v1548 = vpow.pop %v1547
  %v1549 = vmul.f32 %v1441, 1.442695
  %v1550 = vpow.pop %v1549
  %v1551 = vmul.f32 %v1442, 1.442695
  %v1552 = vpow.pop %v1551
  %v1553 = vmul.f32 %v1443, 1.442695
  %v1554 = vpow.pop %v1553
  %v1555 = vmul.f32 %v1444, 1.442695
  %v1556 = vpow.pop %v1555
  %v1557 = vmul.f32 %v1445, 1.442695
  %v1558 = vpow.pop %v1557
  %v1559 = vmul.f32 %v1446, 1.442695
  %v1560 = vpow.pop %v1559
  %v1561 = vmul.f32 %v1447, 1.442695
  %v1562 = vpow.pop %v1561
  %v1563 = vmul.f32 %v1448, 1.442695
  %v1564 = vpow.pop %v1563
  %v1565 = vmul.f32 %v1449, 1.442695
  %v1566 = vpow.pop %v1565
  %v1567 = vmul.f32 %v1450, 1.442695
  %v1568 = vpow.pop %v1567
  %v1569 = vmul.f32 %v1451, 1.442695
  %v1570 = vpow.pop %v1569
  %v1571 = vmul.f32 %v1452, 1.442695
  %v1572 = vpow.pop %v1571
  %v1573 = vmul.f32 %v1453, 1.442695
  %v1574 = vpow.pop %v1573
  %v1575 = vmul.f32 %v1454, 1.442695
  %v1576 = vpow.pop %v1575
  %v1577 = vmul.f32 %v1455, 1.442695
  %v1578 = vpow.pop %v1577
  %v1579 = vmul.f32 %v1456, 1.442695
  %v1580 = vpow.pop %v1579
  %v1581 = vmul.f32 %v1457, 1.442695
  %v1582 = vpow.pop %v1581
  %v1583 = vmul.f32 %v1458, 1.442695
  %v1584 = vpow.pop %v1583
  %v1585 = vmul.f32 %v1459, 1.442695
  %v1586 = vpow.pop %v1585
  %v1587 = vmul.f32 %v1460, 1.442695
  %v1588 = vpow.pop %v1587
  %v1589 = vmul.f32 %v1461, 1.442695
  %v1590 = vpow.pop %v1589
  %v1591 = vmul.f32 %v1462, 1.442695
  %v1592 = vpow.pop %v1591
  %v1593 = vmul.f32 %v1463, 1.442695
  %v1594 = vpow.pop %v1593
  %v1595 = vmul.f32 %v1464, 1.442695
  %v1596 = vpow.pop %v1595
  %v1597 = vmul.f32 %v1465, 1.442695
  %v1598 = vpow.pop %v1597
  %v1599 = vmul.f32 %v1466, 1.442695
  %v1600 = vpow.pop %v1599
  %v1601 = vmul.f32 %v1467, 1.442695
  %v1602 = vpow.pop %v1601
  %v1603 = vmul.f32 %v1468, 1.442695
  %v1604 = vpow.pop %v1603
  %v1605 = vmul.f32 %v1469, 1.442695
  %v1606 = vpow.pop %v1605
  %v1607 = vmul.f32 %v1470, 1.442695
  %v1608 = vpow.pop %v1607
  %v1609 = vmul.f32 %v1471, 1.442695
  %v1610 = vpow.pop %v1609
  %v1611 = vmul.f32 %v1472, 1.442695
  %v1612 = vpow.pop %v1611
  %v1613 = vmul.f32 %v1473, 1.442695
  %v1614 = vpow.pop %v1613
  %v1615 = vmul.f32 %v1474, 1.442695
  %v1616 = vpow.pop %v1615
  %v1617 = vmul.f32 %v1475, 1.442695
  %v1618 = vpow.pop %v1617
  %v1619 = vmul.f32 %v1476, 1.442695
  %v1620 = vpow.pop %v1619
  %v1621 = vmul.f32 %v1477, 1.442695
  %v1622 = vpow.pop %v1621
  %v1623 = vmul.f32 %v1478, 1.442695
  %v1624 = vpow.pop %v1623
  %v1625 = vmul.f32 %v1479, 1.442695
  %v1626 = vpow.pop %v1625
  %v1627 = vmul.f32 %v1480, 1.442695
  %v1628 = vpow.pop %v1627
  %v1629 = vmul.f32 %v1481, 1.442695
  %v1630 = vpow.pop %v1629
  %v1631 = vmul.f32 %v1482, 1.442695
  %v1632 = vpow.pop %v1631
  %v1633 = vmul.f32 %v1483, 1.442695
  %v1634 = vpow.pop %v1633
  %v1635 = vmul.f32 %v1484, 1.442695
  %v1636 = vpow.pop %v1635
  %v1637 = vmul.f32 %v1485, 1.442695
  %v1638 = vpow.pop %v1637
  %v1639 = vmul.f32 %v1486, 1.442695
  %v1640 = vpow.pop %v1639
  %v1641 = vmul.f32 %v1487, 1.442695
  %v1642 = vpow.pop %v1641
  %v1643 = vmul.f32 %v1488, 1.442695
  %v1644 = vpow.pop %v1643
  %v1645 = vmul.f32 %v1489, 1.442695
  %v1646 = vpow.pop %v1645
  %v1647 = vmul.f32 %v1490, 1.442695
  %v1648 = vpow.pop %v1647
  %v1649 = vmul.f32 %v1491, 1.442695
  %v1650 = vpow.pop %v1649
  %v1651 = vmul.f32 %v1492, 1.442695
  %v1652 = vpow.pop %v1651
  %v1653 = vmul.f32 %v1493, 1.442695
  %v1654 = vpow.pop %v1653
  %v1655 = vmul.f32 %v1494, 1.442695
  %v1656 = vpow.pop %v1655
  %v1657 = vmul.f32 %v1495, 1.442695
  %v1658 = vpow.pop %v1657
  %v1659 = vmul.f32 %v1496, 1.442695
  %v1660 = vpow.pop %v1659
  %v1661 = vmul.f32 %v1497, 1.442695
  %v1662 = vpow.pop %v1661
  %v1663 = vmul.f32 %v1498, 1.442695
  %v1664 = vpow.pop %v1663
  %v1665 = vmul.f32 %v1499, 1.442695
  %v1666 = vpow.pop %v1665
  %v1667 = vmul.f32 %v1500, 1.442695
  %v1668 = vpow.pop %v1667
  %v1669 = vmul.f32 %v1501, 1.442695
  %v1670 = vpow.pop %v1669
  %v1671 = vmul.f32 %v1502, 1.442695
  %v1672 = vpow.pop %v1671
  %v1673 = vmul.f32 %v1503, 1.442695
  %v1674 = vpow.pop %v1673
  %v1675 = vmul.f32 %v1504, 1.442695
  %v1676 = vpow.pop %v1675
  %v1677 = vmul.f32 %v1505, 1.442695
  %v1678 = vpow.pop %v1677
  %v1679 = vmul.f32 %v1506, 1.442695
  %v1680 = vpow.pop %v1679
  %v1681 = vmul.f32 %v1507, 1.442695
  %v1682 = vpow.pop %v1681
  %v1683 = vmul.f32 %v1508, 1.442695
  %v1684 = vpow.pop %v1683
  %v1685 = vmul.f32 %v1509, 1.442695
  %v1686 = vpow.pop %v1685
  %v1687 = vmul.f32 %v1510, 1.442695
  %v1688 = vpow.pop %v1687
  %v1689 = vmul.f32 %v1511, 1.442695
  %v1690 = vpow.pop %v1689
  %v1691 = vmul.f32 %v1512, 1.442695
  %v1692 = vpow.pop %v1691
  %v1693 = vmul.f32 %v1513, 1.442695
  %v1694 = vpow.pop %v1693
  %v1695 = vmul.f32 %v1514, 1.442695
  %v1696 = vpow.pop %v1695
  %v1697 = vmul.f32 %v1515, 1.442695
  %v1698 = vpow.pop %v1697
  %v1699 = vmul.f32 %v1516, 1.442695
  %v1700 = vpow.pop %v1699
  %v1701 = vmul.f32 %v1517, 1.442695
  %v1702 = vpow.pop %v1701
  %v1703 = vmul.f32 %v1518, 1.442695
  %v1704 = vpow.pop %v1703
  %v1705 = vmul.f32 %v1519, 1.442695
  %v1706 = vpow.pop %v1705
  %v1707 = vmul.f32 %v1520, 1.442695
  %v1708 = vpow.pop %v1707
  %v1709 = vmul.f32 %v1521, 1.442695
  %v1710 = vpow.pop %v1709
  %v1711 = vmul.f32 %v1522, 1.442695
  %v1712 = vpow.pop %v1711
  %v1713 = vmul.f32 %v1523, 1.442695
  %v1714 = vpow.pop %v1713
  %v1715 = vmul.f32 %v1524, 1.442695
  %v1716 = vpow.pop %v1715
  %v1717 = vadd.f32 %v1526, 1.0
  %v1718 = vlog2.pop %v1717
  %v1719 = vmul.f32 %v1718, 0.6931472
  %v1720 = vmul.f32 -0.5, %v1526
  %v1721 = vadd.f32 %v1720, 1.0
  %v1722 = vmul.f32 %v1721, %v1526
  %v1723 = vand.u32 2147483647, %v1526
  %vm1724 = vcmp.lt.f32.partialorder %v1723, 0.0004427343
  %v1725 = vsel %vm1724, %v1722, %v1719
  %v1726 = vadd.f32 %v1528, 1.0
  %v1727 = vlog2.pop %v1726
  %v1728 = vmul.f32 %v1727, 0.6931472
  %v1729 = vmul.f32 -0.5, %v1528
  %v1730 = vadd.f32 %v1729, 1.0
  %v1731 = vmul.f32 %v1730, %v1528
  %v1732 = vand.u32 2147483647, %v1528
  %vm1733 = vcmp.lt.f32.partialorder %v1732, 0.0004427343
  %v1734 = vsel %vm1733, %v1731, %v1728
  %v1735 = vadd.f32 %v1530, 1.0
  %v1736 = vlog2.pop %v1735
  %v1737 = vmul.f32 %v1736, 0.6931472
  %v1738 = vmul.f32 -0.5, %v1530
  %v1739 = vadd.f32 %v1738, 1.0
  %v1740 = vmul.f32 %v1739, %v1530
  %v1741 = vand.u32 2147483647, %v1530
  %vm1742 = vcmp.lt.f32.partialorder %v1741, 0.0004427343
  %v1743 = vsel %vm1742, %v1740, %v1737
  %v1744 = vadd.f32 %v1532, 1.0
  %v1745 = vlog2.pop %v1744
  %v1746 = vmul.f32 %v1745, 0.6931472
  %v1747 = vmul.f32 -0.5, %v1532
  %v1748 = vadd.f32 %v1747, 1.0
  %v1749 = vmul.f32 %v1748, %v1532
  %v1750 = vand.u32 2147483647, %v1532
  %vm1751 = vcmp.lt.f32.partialorder %v1750, 0.0004427343
  %v1752 = vsel %vm1751, %v1749, %v1746
  %v1753 = vadd.f32 %v1534, 1.0
  %v1754 = vlog2.pop %v1753
  %v1755 = vmul.f32 %v1754, 0.6931472
  %v1756 = vmul.f32 -0.5, %v1534
  %v1757 = vadd.f32 %v1756, 1.0
  %v1758 = vmul.f32 %v1757, %v1534
  %v1759 = vand.u32 2147483647, %v1534
  %vm1760 = vcmp.lt.f32.partialorder %v1759, 0.0004427343
  %v1761 = vsel %vm1760, %v1758, %v1755
  %v1762 = vadd.f32 %v1536, 1.0
  %v1763 = vlog2.pop %v1762
  %v1764 = vmul.f32 %v1763, 0.6931472
  %v1765 = vmul.f32 -0.5, %v1536
  %v1766 = vadd.f32 %v1765, 1.0
  %v1767 = vmul.f32 %v1766, %v1536
  %v1768 = vand.u32 2147483647, %v1536
  %vm1769 = vcmp.lt.f32.partialorder %v1768, 0.0004427343
  %v1770 = vsel %vm1769, %v1767, %v1764
  %v1771 = vadd.f32 %v1538, 1.0
  %v1772 = vlog2.pop %v1771
  %v1773 = vmul.f32 %v1772, 0.6931472
  %v1774 = vmul.f32 -0.5, %v1538
  %v1775 = vadd.f32 %v1774, 1.0
  %v1776 = vmul.f32 %v1775, %v1538
  %v1777 = vand.u32 2147483647, %v1538
  %vm1778 = vcmp.lt.f32.partialorder %v1777, 0.0004427343
  %v1779 = vsel %vm1778, %v1776, %v1773
  %v1780 = vadd.f32 %v1540, 1.0
  %v1781 = vlog2.pop %v1780
  %v1782 = vmul.f32 %v1781, 0.6931472
  %v1783 = vmul.f32 -0.5, %v1540
  %v1784 = vadd.f32 %v1783, 1.0
  %v1785 = vmul.f32 %v1784, %v1540
  %v1786 = vand.u32 2147483647, %v1540
  %vm1787 = vcmp.lt.f32.partialorder %v1786, 0.0004427343
  %v1788 = vsel %vm1787, %v1785, %v1782
  %v1789 = vadd.f32 %v1542, 1.0
  %v1790 = vlog2.pop %v1789
  %v1791 = vmul.f32 %v1790, 0.6931472
  %v1792 = vmul.f32 -0.5, %v1542
  %v1793 = vadd.f32 %v1792, 1.0
  %v1794 = vmul.f32 %v1793, %v1542
  %v1795 = vand.u32 2147483647, %v1542
  %vm1796 = vcmp.lt.f32.partialorder %v1795, 0.0004427343
  %v1797 = vsel %vm1796, %v1794, %v1791
  %v1798 = vadd.f32 %v1544, 1.0
  %v1799 = vlog2.pop %v1798
  %v1800 = vmul.f32 %v1799, 0.6931472
  %v1801 = vmul.f32 -0.5, %v1544
  %v1802 = vadd.f32 %v1801, 1.0
  %v1803 = vmul.f32 %v1802, %v1544
  %v1804 = vand.u32 2147483647, %v1544
  %vm1805 = vcmp.lt.f32.partialorder %v1804, 0.0004427343
  %v1806 = vsel %vm1805, %v1803, %v1800
  %v1807 = vadd.f32 %v1546, 1.0
  %v1808 = vlog2.pop %v1807
  %v1809 = vmul.f32 %v1808, 0.6931472
  %v1810 = vmul.f32 -0.5, %v1546
  %v1811 = vadd.f32 %v1810, 1.0
  %v1812 = vmul.f32 %v1811, %v1546
  %v1813 = vand.u32 2147483647, %v1546
  %vm1814 = vcmp.lt.f32.partialorder %v1813, 0.0004427343
  %v1815 = vsel %vm1814, %v1812, %v1809
  %v1816 = vadd.f32 %v1548, 1.0
  %v1817 = vlog2.pop %v1816
  %v1818 = vmul.f32 %v1817, 0.6931472
  %v1819 = vmul.f32 -0.5, %v1548
  %v1820 = vadd.f32 %v1819, 1.0
  %v1821 = vmul.f32 %v1820, %v1548
  %v1822 = vand.u32 2147483647, %v1548
  %vm1823 = vcmp.lt.f32.partialorder %v1822, 0.0004427343
  %v1824 = vsel %vm1823, %v1821, %v1818
  %v1825 = vadd.f32 %v1550, 1.0
  %v1826 = vlog2.pop %v1825
  %v1827 = vmul.f32 %v1826, 0.6931472
  %v1828 = vmul.f32 -0.5, %v1550
  %v1829 = vadd.f32 %v1828, 1.0
  %v1830 = vmul.f32 %v1829, %v1550
  %v1831 = vand.u32 2147483647, %v1550
  %vm1832 = vcmp.lt.f32.partialorder %v1831, 0.0004427343
  %v1833 = vsel %vm1832, %v1830, %v1827
  %v1834 = vadd.f32 %v1552, 1.0
  %v1835 = vlog2.pop %v1834
  %v1836 = vmul.f32 %v1835, 0.6931472
  %v1837 = vmul.f32 -0.5, %v1552
  %v1838 = vadd.f32 %v1837, 1.0
  %v1839 = vmul.f32 %v1838, %v1552
  %v1840 = vand.u32 2147483647, %v1552
  %vm1841 = vcmp.lt.f32.partialorder %v1840, 0.0004427343
  %v1842 = vsel %vm1841, %v1839, %v1836
  %v1843 = vadd.f32 %v1554, 1.0
  %v1844 = vlog2.pop %v1843
  %v1845 = vmul.f32 %v1844, 0.6931472
  %v1846 = vmul.f32 -0.5, %v1554
  %v1847 = vadd.f32 %v1846, 1.0
  %v1848 = vmul.f32 %v1847, %v1554
  %v1849 = vand.u32 2147483647, %v1554
  %vm1850 = vcmp.lt.f32.partialorder %v1849, 0.0004427343
  %v1851 = vsel %vm1850, %v1848, %v1845
  %v1852 = vadd.f32 %v1556, 1.0
  %v1853 = vlog2.pop %v1852
  %v1854 = vmul.f32 %v1853, 0.6931472
  %v1855 = vmul.f32 -0.5, %v1556
  %v1856 = vadd.f32 %v1855, 1.0
  %v1857 = vmul.f32 %v1856, %v1556
  %v1858 = vand.u32 2147483647, %v1556
  %vm1859 = vcmp.lt.f32.partialorder %v1858, 0.0004427343
  %v1860 = vsel %vm1859, %v1857, %v1854
  %v1861 = vadd.f32 %v1558, 1.0
  %v1862 = vlog2.pop %v1861
  %v1863 = vmul.f32 %v1862, 0.6931472
  %v1864 = vmul.f32 -0.5, %v1558
  %v1865 = vadd.f32 %v1864, 1.0
  %v1866 = vmul.f32 %v1865, %v1558
  %v1867 = vand.u32 2147483647, %v1558
  %vm1868 = vcmp.lt.f32.partialorder %v1867, 0.0004427343
  %v1869 = vsel %vm1868, %v1866, %v1863
  %v1870 = vadd.f32 %v1560, 1.0
  %v1871 = vlog2.pop %v1870
  %v1872 = vmul.f32 %v1871, 0.6931472
  %v1873 = vmul.f32 -0.5, %v1560
  %v1874 = vadd.f32 %v1873, 1.0
  %v1875 = vmul.f32 %v1874, %v1560
  %v1876 = vand.u32 2147483647, %v1560
  %vm1877 = vcmp.lt.f32.partialorder %v1876, 0.0004427343
  %v1878 = vsel %vm1877, %v1875, %v1872
  %v1879 = vadd.f32 %v1562, 1.0
  %v1880 = vlog2.pop %v1879
  %v1881 = vmul.f32 %v1880, 0.6931472
  %v1882 = vmul.f32 -0.5, %v1562
  %v1883 = vadd.f32 %v1882, 1.0
  %v1884 = vmul.f32 %v1883, %v1562
  %v1885 = vand.u32 2147483647, %v1562
  %vm1886 = vcmp.lt.f32.partialorder %v1885, 0.0004427343
  %v1887 = vsel %vm1886, %v1884, %v1881
  %v1888 = vadd.f32 %v1564, 1.0
  %v1889 = vlog2.pop %v1888
  %v1890 = vmul.f32 %v1889, 0.6931472
  %v1891 = vmul.f32 -0.5, %v1564
  %v1892 = vadd.f32 %v1891, 1.0
  %v1893 = vmul.f32 %v1892, %v1564
  %v1894 = vand.u32 2147483647, %v1564
  %vm1895 = vcmp.lt.f32.partialorder %v1894, 0.0004427343
  %v1896 = vsel %vm1895, %v1893, %v1890
  %v1897 = vadd.f32 %v1566, 1.0
  %v1898 = vlog2.pop %v1897
  %v1899 = vmul.f32 %v1898, 0.6931472
  %v1900 = vmul.f32 -0.5, %v1566
  %v1901 = vadd.f32 %v1900, 1.0
  %v1902 = vmul.f32 %v1901, %v1566
  %v1903 = vand.u32 2147483647, %v1566
  %vm1904 = vcmp.lt.f32.partialorder %v1903, 0.0004427343
  %v1905 = vsel %vm1904, %v1902, %v1899
  %v1906 = vadd.f32 %v1568, 1.0
  %v1907 = vlog2.pop %v1906
  %v1908 = vmul.f32 %v1907, 0.6931472
  %v1909 = vmul.f32 -0.5, %v1568
  %v1910 = vadd.f32 %v1909, 1.0
  %v1911 = vmul.f32 %v1910, %v1568
  %v1912 = vand.u32 2147483647, %v1568
  %vm1913 = vcmp.lt.f32.partialorder %v1912, 0.0004427343
  %v1914 = vsel %vm1913, %v1911, %v1908
  %v1915 = vadd.f32 %v1570, 1.0
  %v1916 = vlog2.pop %v1915
  %v1917 = vmul.f32 %v1916, 0.6931472
  %v1918 = vmul.f32 -0.5, %v1570
  %v1919 = vadd.f32 %v1918, 1.0
  %v1920 = vmul.f32 %v1919, %v1570
  %v1921 = vand.u32 2147483647, %v1570
  %vm1922 = vcmp.lt.f32.partialorder %v1921, 0.0004427343
  %v1923 = vsel %vm1922, %v1920, %v1917
  %v1924 = vadd.f32 %v1572, 1.0
  %v1925 = vlog2.pop %v1924
  %v1926 = vmul.f32 %v1925, 0.6931472
  %v1927 = vmul.f32 -0.5, %v1572
  %v1928 = vadd.f32 %v1927, 1.0
  %v1929 = vmul.f32 %v1928, %v1572
  %v1930 = vand.u32 2147483647, %v1572
  %vm1931 = vcmp.lt.f32.partialorder %v1930, 0.0004427343
  %v1932 = vsel %vm1931, %v1929, %v1926
  %v1933 = vadd.f32 %v1574, 1.0
  %v1934 = vlog2.pop %v1933
  %v1935 = vmul.f32 %v1934, 0.6931472
  %v1936 = vmul.f32 -0.5, %v1574
  %v1937 = vadd.f32 %v1936, 1.0
  %v1938 = vmul.f32 %v1937, %v1574
  %v1939 = vand.u32 2147483647, %v1574
  %vm1940 = vcmp.lt.f32.partialorder %v1939, 0.0004427343
  %v1941 = vsel %vm1940, %v1938, %v1935
  %v1942 = vadd.f32 %v1576, 1.0
  %v1943 = vlog2.pop %v1942
  %v1944 = vmul.f32 %v1943, 0.6931472
  %v1945 = vmul.f32 -0.5, %v1576
  %v1946 = vadd.f32 %v1945, 1.0
  %v1947 = vmul.f32 %v1946, %v1576
  %v1948 = vand.u32 2147483647, %v1576
  %vm1949 = vcmp.lt.f32.partialorder %v1948, 0.0004427343
  %v1950 = vsel %vm1949, %v1947, %v1944
  %v1951 = vadd.f32 %v1578, 1.0
  %v1952 = vlog2.pop %v1951
  %v1953 = vmul.f32 %v1952, 0.6931472
  %v1954 = vmul.f32 -0.5, %v1578
  %v1955 = vadd.f32 %v1954, 1.0
  %v1956 = vmul.f32 %v1955, %v1578
  %v1957 = vand.u32 2147483647, %v1578
  %vm1958 = vcmp.lt.f32.partialorder %v1957, 0.0004427343
  %v1959 = vsel %vm1958, %v1956, %v1953
  %v1960 = vadd.f32 %v1580, 1.0
  %v1961 = vlog2.pop %v1960
  %v1962 = vmul.f32 %v1961, 0.6931472
  %v1963 = vmul.f32 -0.5, %v1580
  %v1964 = vadd.f32 %v1963, 1.0
  %v1965 = vmul.f32 %v1964, %v1580
  %v1966 = vand.u32 2147483647, %v1580
  %vm1967 = vcmp.lt.f32.partialorder %v1966, 0.0004427343
  %v1968 = vsel %vm1967, %v1965, %v1962
  %v1969 = vadd.f32 %v1582, 1.0
  %v1970 = vlog2.pop %v1969
  %v1971 = vmul.f32 %v1970, 0.6931472
  %v1972 = vmul.f32 -0.5, %v1582
  %v1973 = vadd.f32 %v1972, 1.0
  %v1974 = vmul.f32 %v1973, %v1582
  %v1975 = vand.u32 2147483647, %v1582
  %vm1976 = vcmp.lt.f32.partialorder %v1975, 0.0004427343
  %v1977 = vsel %vm1976, %v1974, %v1971
  %v1978 = vadd.f32 %v1584, 1.0
  %v1979 = vlog2.pop %v1978
  %v1980 = vmul.f32 %v1979, 0.6931472
  %v1981 = vmul.f32 -0.5, %v1584
  %v1982 = vadd.f32 %v1981, 1.0
  %v1983 = vmul.f32 %v1982, %v1584
  %v1984 = vand.u32 2147483647, %v1584
  %vm1985 = vcmp.lt.f32.partialorder %v1984, 0.0004427343
  %v1986 = vsel %vm1985, %v1983, %v1980
  %v1987 = vadd.f32 %v1586, 1.0
  %v1988 = vlog2.pop %v1987
  %v1989 = vmul.f32 %v1988, 0.6931472
  %v1990 = vmul.f32 -0.5, %v1586
  %v1991 = vadd.f32 %v1990, 1.0
  %v1992 = vmul.f32 %v1991, %v1586
  %v1993 = vand.u32 2147483647, %v1586
  %vm1994 = vcmp.lt.f32.partialorder %v1993, 0.0004427343
  %v1995 = vsel %vm1994, %v1992, %v1989
  %v1996 = vadd.f32 %v1588, 1.0
  %v1997 = vlog2.pop %v1996
  %v1998 = vmul.f32 %v1997, 0.6931472
  %v1999 = vmul.f32 -0.5, %v1588
  %v2000 = vadd.f32 %v1999, 1.0
  %v2001 = vmul.f32 %v2000, %v1588
  %v2002 = vand.u32 2147483647, %v1588
  %vm2003 = vcmp.lt.f32.partialorder %v2002, 0.0004427343
  %v2004 = vsel %vm2003, %v2001, %v1998
  %v2005 = vadd.f32 %v1590, 1.0
  %v2006 = vlog2.pop %v2005
  %v2007 = vmul.f32 %v2006, 0.6931472
  %v2008 = vmul.f32 -0.5, %v1590
  %v2009 = vadd.f32 %v2008, 1.0
  %v2010 = vmul.f32 %v2009, %v1590
  %v2011 = vand.u32 2147483647, %v1590
  %vm2012 = vcmp.lt.f32.partialorder %v2011, 0.0004427343
  %v2013 = vsel %vm2012, %v2010, %v2007
  %v2014 = vadd.f32 %v1592, 1.0
  %v2015 = vlog2.pop %v2014
  %v2016 = vmul.f32 %v2015, 0.6931472
  %v2017 = vmul.f32 -0.5, %v1592
  %v2018 = vadd.f32 %v2017, 1.0
  %v2019 = vmul.f32 %v2018, %v1592
  %v2020 = vand.u32 2147483647, %v1592
  %vm2021 = vcmp.lt.f32.partialorder %v2020, 0.0004427343
  %v2022 = vsel %vm2021, %v2019, %v2016
  %v2023 = vadd.f32 %v1594, 1.0
  %v2024 = vlog2.pop %v2023
  %v2025 = vmul.f32 %v2024, 0.6931472
  %v2026 = vmul.f32 -0.5, %v1594
  %v2027 = vadd.f32 %v2026, 1.0
  %v2028 = vmul.f32 %v2027, %v1594
  %v2029 = vand.u32 2147483647, %v1594
  %vm2030 = vcmp.lt.f32.partialorder %v2029, 0.0004427343
  %v2031 = vsel %vm2030, %v2028, %v2025
  %v2032 = vadd.f32 %v1596, 1.0
  %v2033 = vlog2.pop %v2032
  %v2034 = vmul.f32 %v2033, 0.6931472
  %v2035 = vmul.f32 -0.5, %v1596
  %v2036 = vadd.f32 %v2035, 1.0
  %v2037 = vmul.f32 %v2036, %v1596
  %v2038 = vand.u32 2147483647, %v1596
  %vm2039 = vcmp.lt.f32.partialorder %v2038, 0.0004427343
  %v2040 = vsel %vm2039, %v2037, %v2034
  %v2041 = vadd.f32 %v1598, 1.0
  %v2042 = vlog2.pop %v2041
  %v2043 = vmul.f32 %v2042, 0.6931472
  %v2044 = vmul.f32 -0.5, %v1598
  %v2045 = vadd.f32 %v2044, 1.0
  %v2046 = vmul.f32 %v2045, %v1598
  %v2047 = vand.u32 2147483647, %v1598
  %vm2048 = vcmp.lt.f32.partialorder %v2047, 0.0004427343
  %v2049 = vsel %vm2048, %v2046, %v2043
  %v2050 = vadd.f32 %v1600, 1.0
  %v2051 = vlog2.pop %v2050
  %v2052 = vmul.f32 %v2051, 0.6931472
  %v2053 = vmul.f32 -0.5, %v1600
  %v2054 = vadd.f32 %v2053, 1.0
  %v2055 = vmul.f32 %v2054, %v1600
  %v2056 = vand.u32 2147483647, %v1600
  %vm2057 = vcmp.lt.f32.partialorder %v2056, 0.0004427343
  %v2058 = vsel %vm2057, %v2055, %v2052
  %v2059 = vadd.f32 %v1602, 1.0
  %v2060 = vlog2.pop %v2059
  %v2061 = vmul.f32 %v2060, 0.6931472
  %v2062 = vmul.f32 -0.5, %v1602
  %v2063 = vadd.f32 %v2062, 1.0
  %v2064 = vmul.f32 %v2063, %v1602
  %v2065 = vand.u32 2147483647, %v1602
  %vm2066 = vcmp.lt.f32.partialorder %v2065, 0.0004427343
  %v2067 = vsel %vm2066, %v2064, %v2061
  %v2068 = vadd.f32 %v1604, 1.0
  %v2069 = vlog2.pop %v2068
  %v2070 = vmul.f32 %v2069, 0.6931472
  %v2071 = vmul.f32 -0.5, %v1604
  %v2072 = vadd.f32 %v2071, 1.0
  %v2073 = vmul.f32 %v2072, %v1604
  %v2074 = vand.u32 2147483647, %v1604
  %vm2075 = vcmp.lt.f32.partialorder %v2074, 0.0004427343
  %v2076 = vsel %vm2075, %v2073, %v2070
  %v2077 = vadd.f32 %v1606, 1.0
  %v2078 = vlog2.pop %v2077
  %v2079 = vmul.f32 %v2078, 0.6931472
  %v2080 = vmul.f32 -0.5, %v1606
  %v2081 = vadd.f32 %v2080, 1.0
  %v2082 = vmul.f32 %v2081, %v1606
  %v2083 = vand.u32 2147483647, %v1606
  %vm2084 = vcmp.lt.f32.partialorder %v2083, 0.0004427343
  %v2085 = vsel %vm2084, %v2082, %v2079
  %v2086 = vadd.f32 %v1608, 1.0
  %v2087 = vlog2.pop %v2086
  %v2088 = vmul.f32 %v2087, 0.6931472
  %v2089 = vmul.f32 -0.5, %v1608
  %v2090 = vadd.f32 %v2089, 1.0
  %v2091 = vmul.f32 %v2090, %v1608
  %v2092 = vand.u32 2147483647, %v1608
  %vm2093 = vcmp.lt.f32.partialorder %v2092, 0.0004427343
  %v2094 = vsel %vm2093, %v2091, %v2088
  %v2095 = vadd.f32 %v1610, 1.0
  %v2096 = vlog2.pop %v2095
  %v2097 = vmul.f32 %v2096, 0.6931472
  %v2098 = vmul.f32 -0.5, %v1610
  %v2099 = vadd.f32 %v2098, 1.0
  %v2100 = vmul.f32 %v2099, %v1610
  %v2101 = vand.u32 2147483647, %v1610
  %vm2102 = vcmp.lt.f32.partialorder %v2101, 0.0004427343
  %v2103 = vsel %vm2102, %v2100, %v2097
  %v2104 = vadd.f32 %v1612, 1.0
  %v2105 = vlog2.pop %v2104
  %v2106 = vmul.f32 %v2105, 0.6931472
  %v2107 = vmul.f32 -0.5, %v1612
  %v2108 = vadd.f32 %v2107, 1.0
  %v2109 = vmul.f32 %v2108, %v1612
  %v2110 = vand.u32 2147483647, %v1612
  %vm2111 = vcmp.lt.f32.partialorder %v2110, 0.0004427343
  %v2112 = vsel %vm2111, %v2109, %v2106
  %v2113 = vadd.f32 %v1614, 1.0
  %v2114 = vlog2.pop %v2113
  %v2115 = vmul.f32 %v2114, 0.6931472
  %v2116 = vmul.f32 -0.5, %v1614
  %v2117 = vadd.f32 %v2116, 1.0
  %v2118 = vmul.f32 %v2117, %v1614
  %v2119 = vand.u32 2147483647, %v1614
  %vm2120 = vcmp.lt.f32.partialorder %v2119, 0.0004427343
  %v2121 = vsel %vm2120, %v2118, %v2115
  %v2122 = vadd.f32 %v1616, 1.0
  %v2123 = vlog2.pop %v2122
  %v2124 = vmul.f32 %v2123, 0.6931472
  %v2125 = vmul.f32 -0.5, %v1616
  %v2126 = vadd.f32 %v2125, 1.0
  %v2127 = vmul.f32 %v2126, %v1616
  %v2128 = vand.u32 2147483647, %v1616
  %vm2129 = vcmp.lt.f32.partialorder %v2128, 0.0004427343
  %v2130 = vsel %vm2129, %v2127, %v2124
  %v2131 = vadd.f32 %v1618, 1.0
  %v2132 = vlog2.pop %v2131
  %v2133 = vmul.f32 %v2132, 0.6931472
  %v2134 = vmul.f32 -0.5, %v1618
  %v2135 = vadd.f32 %v2134, 1.0
  %v2136 = vmul.f32 %v2135, %v1618
  %v2137 = vand.u32 2147483647, %v1618
  %vm2138 = vcmp.lt.f32.partialorder %v2137, 0.0004427343
  %v2139 = vsel %vm2138, %v2136, %v2133
  %v2140 = vadd.f32 %v1620, 1.0
  %v2141 = vlog2.pop %v2140
  %v2142 = vmul.f32 %v2141, 0.6931472
  %v2143 = vmul.f32 -0.5, %v1620
  %v2144 = vadd.f32 %v2143, 1.0
  %v2145 = vmul.f32 %v2144, %v1620
  %v2146 = vand.u32 2147483647, %v1620
  %vm2147 = vcmp.lt.f32.partialorder %v2146, 0.0004427343
  %v2148 = vsel %vm2147, %v2145, %v2142
  %v2149 = vadd.f32 %v1622, 1.0
  %v2150 = vlog2.pop %v2149
  %v2151 = vmul.f32 %v2150, 0.6931472
  %v2152 = vmul.f32 -0.5, %v1622
  %v2153 = vadd.f32 %v2152, 1.0
  %v2154 = vmul.f32 %v2153, %v1622
  %v2155 = vand.u32 2147483647, %v1622
  %vm2156 = vcmp.lt.f32.partialorder %v2155, 0.0004427343
  %v2157 = vsel %vm2156, %v2154, %v2151
  %v2158 = vadd.f32 %v1624, 1.0
  %v2159 = vlog2.pop %v2158
  %v2160 = vmul.f32 %v2159, 0.6931472
  %v2161 = vmul.f32 -0.5, %v1624
  %v2162 = vadd.f32 %v2161, 1.0
  %v2163 = vmul.f32 %v2162, %v1624
  %v2164 = vand.u32 2147483647, %v1624
  %vm2165 = vcmp.lt.f32.partialorder %v2164, 0.0004427343
  %v2166 = vsel %vm2165, %v2163, %v2160
  %v2167 = vadd.f32 %v1626, 1.0
  %v2168 = vlog2.pop %v2167
  %v2169 = vmul.f32 %v2168, 0.6931472
  %v2170 = vmul.f32 -0.5, %v1626
  %v2171 = vadd.f32 %v2170, 1.0
  %v2172 = vmul.f32 %v2171, %v1626
  %v2173 = vand.u32 2147483647, %v1626
  %vm2174 = vcmp.lt.f32.partialorder %v2173, 0.0004427343
  %v2175 = vsel %vm2174, %v2172, %v2169
  %v2176 = vadd.f32 %v1628, 1.0
  %v2177 = vlog2.pop %v2176
  %v2178 = vmul.f32 %v2177, 0.6931472
  %v2179 = vmul.f32 -0.5, %v1628
  %v2180 = vadd.f32 %v2179, 1.0
  %v2181 = vmul.f32 %v2180, %v1628
  %v2182 = vand.u32 2147483647, %v1628
  %vm2183 = vcmp.lt.f32.partialorder %v2182, 0.0004427343
  %v2184 = vsel %vm2183, %v2181, %v2178
  %v2185 = vadd.f32 %v1630, 1.0
  %v2186 = vlog2.pop %v2185
  %v2187 = vmul.f32 %v2186, 0.6931472
  %v2188 = vmul.f32 -0.5, %v1630
  %v2189 = vadd.f32 %v2188, 1.0
  %v2190 = vmul.f32 %v2189, %v1630
  %v2191 = vand.u32 2147483647, %v1630
  %vm2192 = vcmp.lt.f32.partialorder %v2191, 0.0004427343
  %v2193 = vsel %vm2192, %v2190, %v2187
  %v2194 = vadd.f32 %v1632, 1.0
  %v2195 = vlog2.pop %v2194
  %v2196 = vmul.f32 %v2195, 0.6931472
  %v2197 = vmul.f32 -0.5, %v1632
  %v2198 = vadd.f32 %v2197, 1.0
  %v2199 = vmul.f32 %v2198, %v1632
  %v2200 = vand.u32 2147483647, %v1632
  %vm2201 = vcmp.lt.f32.partialorder %v2200, 0.0004427343
  %v2202 = vsel %vm2201, %v2199, %v2196
  %v2203 = vadd.f32 %v1634, 1.0
  %v2204 = vlog2.pop %v2203
  %v2205 = vmul.f32 %v2204, 0.6931472
  %v2206 = vmul.f32 -0.5, %v1634
  %v2207 = vadd.f32 %v2206, 1.0
  %v2208 = vmul.f32 %v2207, %v1634
  %v2209 = vand.u32 2147483647, %v1634
  %vm2210 = vcmp.lt.f32.partialorder %v2209, 0.0004427343
  %v2211 = vsel %vm2210, %v2208, %v2205
  %v2212 = vadd.f32 %v1636, 1.0
  %v2213 = vlog2.pop %v2212
  %v2214 = vmul.f32 %v2213, 0.6931472
  %v2215 = vmul.f32 -0.5, %v1636
  %v2216 = vadd.f32 %v2215, 1.0
  %v2217 = vmul.f32 %v2216, %v1636
  %v2218 = vand.u32 2147483647, %v1636
  %vm2219 = vcmp.lt.f32.partialorder %v2218, 0.0004427343
  %v2220 = vsel %vm2219, %v2217, %v2214
  %v2221 = vadd.f32 %v1638, 1.0
  %v2222 = vlog2.pop %v2221
  %v2223 = vmul.f32 %v2222, 0.6931472
  %v2224 = vmul.f32 -0.5, %v1638
  %v2225 = vadd.f32 %v2224, 1.0
  %v2226 = vmul.f32 %v2225, %v1638
  %v2227 = vand.u32 2147483647, %v1638
  %vm2228 = vcmp.lt.f32.partialorder %v2227, 0.0004427343
  %v2229 = vsel %vm2228, %v2226, %v2223
  %v2230 = vadd.f32 %v1640, 1.0
  %v2231 = vlog2.pop %v2230
  %v2232 = vmul.f32 %v2231, 0.6931472
  %v2233 = vmul.f32 -0.5, %v1640
  %v2234 = vadd.f32 %v2233, 1.0
  %v2235 = vmul.f32 %v2234, %v1640
  %v2236 = vand.u32 2147483647, %v1640
  %vm2237 = vcmp.lt.f32.partialorder %v2236, 0.0004427343
  %v2238 = vsel %vm2237, %v2235, %v2232
  %v2239 = vadd.f32 %v1642, 1.0
  %v2240 = vlog2.pop %v2239
  %v2241 = vmul.f32 %v2240, 0.6931472
  %v2242 = vmul.f32 -0.5, %v1642
  %v2243 = vadd.f32 %v2242, 1.0
  %v2244 = vmul.f32 %v2243, %v1642
  %v2245 = vand.u32 2147483647, %v1642
  %vm2246 = vcmp.lt.f32.partialorder %v2245, 0.0004427343
  %v2247 = vsel %vm2246, %v2244, %v2241
  %v2248 = vadd.f32 %v1644, 1.0
  %v2249 = vlog2.pop %v2248
  %v2250 = vmul.f32 %v2249, 0.6931472
  %v2251 = vmul.f32 -0.5, %v1644
  %v2252 = vadd.f32 %v2251, 1.0
  %v2253 = vmul.f32 %v2252, %v1644
  %v2254 = vand.u32 2147483647, %v1644
  %vm2255 = vcmp.lt.f32.partialorder %v2254, 0.0004427343
  %v2256 = vsel %vm2255, %v2253, %v2250
  %v2257 = vadd.f32 %v1646, 1.0
  %v2258 = vlog2.pop %v2257
  %v2259 = vmul.f32 %v2258, 0.6931472
  %v2260 = vmul.f32 -0.5, %v1646
  %v2261 = vadd.f32 %v2260, 1.0
  %v2262 = vmul.f32 %v2261, %v1646
  %v2263 = vand.u32 2147483647, %v1646
  %vm2264 = vcmp.lt.f32.partialorder %v2263, 0.0004427343
  %v2265 = vsel %vm2264, %v2262, %v2259
  %v2266 = vadd.f32 %v1648, 1.0
  %v2267 = vlog2.pop %v2266
  %v2268 = vmul.f32 %v2267, 0.6931472
  %v2269 = vmul.f32 -0.5, %v1648
  %v2270 = vadd.f32 %v2269, 1.0
  %v2271 = vmul.f32 %v2270, %v1648
  %v2272 = vand.u32 2147483647, %v1648
  %vm2273 = vcmp.lt.f32.partialorder %v2272, 0.0004427343
  %v2274 = vsel %vm2273, %v2271, %v2268
  %v2275 = vadd.f32 %v1650, 1.0
  %v2276 = vlog2.pop %v2275
  %v2277 = vmul.f32 %v2276, 0.6931472
  %v2278 = vmul.f32 -0.5, %v1650
  %v2279 = vadd.f32 %v2278, 1.0
  %v2280 = vmul.f32 %v2279, %v1650
  %v2281 = vand.u32 2147483647, %v1650
  %vm2282 = vcmp.lt.f32.partialorder %v2281, 0.0004427343
  %v2283 = vsel %vm2282, %v2280, %v2277
  %v2284 = vadd.f32 %v1652, 1.0
  %v2285 = vlog2.pop %v2284
  %v2286 = vmul.f32 %v2285, 0.6931472
  %v2287 = vmul.f32 -0.5, %v1652
  %v2288 = vadd.f32 %v2287, 1.0
  %v2289 = vmul.f32 %v2288, %v1652
  %v2290 = vand.u32 2147483647, %v1652
  %vm2291 = vcmp.lt.f32.partialorder %v2290, 0.0004427343
  %v2292 = vsel %vm2291, %v2289, %v2286
  %v2293 = vadd.f32 %v1654, 1.0
  %v2294 = vlog2.pop %v2293
  %v2295 = vmul.f32 %v2294, 0.6931472
  %v2296 = vmul.f32 -0.5, %v1654
  %v2297 = vadd.f32 %v2296, 1.0
  %v2298 = vmul.f32 %v2297, %v1654
  %v2299 = vand.u32 2147483647, %v1654
  %vm2300 = vcmp.lt.f32.partialorder %v2299, 0.0004427343
  %v2301 = vsel %vm2300, %v2298, %v2295
  %v2302 = vadd.f32 %v1656, 1.0
  %v2303 = vlog2.pop %v2302
  %v2304 = vmul.f32 %v2303, 0.6931472
  %v2305 = vmul.f32 -0.5, %v1656
  %v2306 = vadd.f32 %v2305, 1.0
  %v2307 = vmul.f32 %v2306, %v1656
  %v2308 = vand.u32 2147483647, %v1656
  %vm2309 = vcmp.lt.f32.partialorder %v2308, 0.0004427343
  %v2310 = vsel %vm2309, %v2307, %v2304
  %v2311 = vadd.f32 %v1658, 1.0
  %v2312 = vlog2.pop %v2311
  %v2313 = vmul.f32 %v2312, 0.6931472
  %v2314 = vmul.f32 -0.5, %v1658
  %v2315 = vadd.f32 %v2314, 1.0
  %v2316 = vmul.f32 %v2315, %v1658
  %v2317 = vand.u32 2147483647, %v1658
  %vm2318 = vcmp.lt.f32.partialorder %v2317, 0.0004427343
  %v2319 = vsel %vm2318, %v2316, %v2313
  %v2320 = vadd.f32 %v1660, 1.0
  %v2321 = vlog2.pop %v2320
  %v2322 = vmul.f32 %v2321, 0.6931472
  %v2323 = vmul.f32 -0.5, %v1660
  %v2324 = vadd.f32 %v2323, 1.0
  %v2325 = vmul.f32 %v2324, %v1660
  %v2326 = vand.u32 2147483647, %v1660
  %vm2327 = vcmp.lt.f32.partialorder %v2326, 0.0004427343
  %v2328 = vsel %vm2327, %v2325, %v2322
  %v2329 = vadd.f32 %v1662, 1.0
  %v2330 = vlog2.pop %v2329
  %v2331 = vmul.f32 %v2330, 0.6931472
  %v2332 = vmul.f32 -0.5, %v1662
  %v2333 = vadd.f32 %v2332, 1.0
  %v2334 = vmul.f32 %v2333, %v1662
  %v2335 = vand.u32 2147483647, %v1662
  %vm2336 = vcmp.lt.f32.partialorder %v2335, 0.0004427343
  %v2337 = vsel %vm2336, %v2334, %v2331
  %v2338 = vadd.f32 %v1664, 1.0
  %v2339 = vlog2.pop %v2338
  %v2340 = vmul.f32 %v2339, 0.6931472
  %v2341 = vmul.f32 -0.5, %v1664
  %v2342 = vadd.f32 %v2341, 1.0
  %v2343 = vmul.f32 %v2342, %v1664
  %v2344 = vand.u32 2147483647, %v1664
  %vm2345 = vcmp.lt.f32.partialorder %v2344, 0.0004427343
  %v2346 = vsel %vm2345, %v2343, %v2340
  %v2347 = vadd.f32 %v1666, 1.0
  %v2348 = vlog2.pop %v2347
  %v2349 = vmul.f32 %v2348, 0.6931472
  %v2350 = vmul.f32 -0.5, %v1666
  %v2351 = vadd.f32 %v2350, 1.0
  %v2352 = vmul.f32 %v2351, %v1666
  %v2353 = vand.u32 2147483647, %v1666
  %vm2354 = vcmp.lt.f32.partialorder %v2353, 0.0004427343
  %v2355 = vsel %vm2354, %v2352, %v2349
  %v2356 = vadd.f32 %v1668, 1.0
  %v2357 = vlog2.pop %v2356
  %v2358 = vmul.f32 %v2357, 0.6931472
  %v2359 = vmul.f32 -0.5, %v1668
  %v2360 = vadd.f32 %v2359, 1.0
  %v2361 = vmul.f32 %v2360, %v1668
  %v2362 = vand.u32 2147483647, %v1668
  %vm2363 = vcmp.lt.f32.partialorder %v2362, 0.0004427343
  %v2364 = vsel %vm2363, %v2361, %v2358
  %v2365 = vadd.f32 %v1670, 1.0
  %v2366 = vlog2.pop %v2365
  %v2367 = vmul.f32 %v2366, 0.6931472
  %v2368 = vmul.f32 -0.5, %v1670
  %v2369 = vadd.f32 %v2368, 1.0
  %v2370 = vmul.f32 %v2369, %v1670
  %v2371 = vand.u32 2147483647, %v1670
  %vm2372 = vcmp.lt.f32.partialorder %v2371, 0.0004427343
  %v2373 = vsel %vm2372, %v2370, %v2367
  %v2374 = vadd.f32 %v1672, 1.0
  %v2375 = vlog2.pop %v2374
  %v2376 = vmul.f32 %v2375, 0.6931472
  %v2377 = vmul.f32 -0.5, %v1672
  %v2378 = vadd.f32 %v2377, 1.0
  %v2379 = vmul.f32 %v2378, %v1672
  %v2380 = vand.u32 2147483647, %v1672
  %vm2381 = vcmp.lt.f32.partialorder %v2380, 0.0004427343
  %v2382 = vsel %vm2381, %v2379, %v2376
  %v2383 = vadd.f32 %v1674, 1.0
  %v2384 = vlog2.pop %v2383
  %v2385 = vmul.f32 %v2384, 0.6931472
  %v2386 = vmul.f32 -0.5, %v1674
  %v2387 = vadd.f32 %v2386, 1.0
  %v2388 = vmul.f32 %v2387, %v1674
  %v2389 = vand.u32 2147483647, %v1674
  %vm2390 = vcmp.lt.f32.partialorder %v2389, 0.0004427343
  %v2391 = vsel %vm2390, %v2388, %v2385
  %v2392 = vadd.f32 %v1676, 1.0
  %v2393 = vlog2.pop %v2392
  %v2394 = vmul.f32 %v2393, 0.6931472
  %v2395 = vmul.f32 -0.5, %v1676
  %v2396 = vadd.f32 %v2395, 1.0
  %v2397 = vmul.f32 %v2396, %v1676
  %v2398 = vand.u32 2147483647, %v1676
  %vm2399 = vcmp.lt.f32.partialorder %v2398, 0.0004427343
  %v2400 = vsel %vm2399, %v2397, %v2394
  %v2401 = vadd.f32 %v1678, 1.0
  %v2402 = vlog2.pop %v2401
  %v2403 = vmul.f32 %v2402, 0.6931472
  %v2404 = vmul.f32 -0.5, %v1678
  %v2405 = vadd.f32 %v2404, 1.0
  %v2406 = vmul.f32 %v2405, %v1678
  %v2407 = vand.u32 2147483647, %v1678
  %vm2408 = vcmp.lt.f32.partialorder %v2407, 0.0004427343
  %v2409 = vsel %vm2408, %v2406, %v2403
  %v2410 = vadd.f32 %v1680, 1.0
  %v2411 = vlog2.pop %v2410
  %v2412 = vmul.f32 %v2411, 0.6931472
  %v2413 = vmul.f32 -0.5, %v1680
  %v2414 = vadd.f32 %v2413, 1.0
  %v2415 = vmul.f32 %v2414, %v1680
  %v2416 = vand.u32 2147483647, %v1680
  %vm2417 = vcmp.lt.f32.partialorder %v2416, 0.0004427343
  %v2418 = vsel %vm2417, %v2415, %v2412
  %v2419 = vadd.f32 %v1682, 1.0
  %v2420 = vlog2.pop %v2419
  %v2421 = vmul.f32 %v2420, 0.6931472
  %v2422 = vmul.f32 -0.5, %v1682
  %v2423 = vadd.f32 %v2422, 1.0
  %v2424 = vmul.f32 %v2423, %v1682
  %v2425 = vand.u32 2147483647, %v1682
  %vm2426 = vcmp.lt.f32.partialorder %v2425, 0.0004427343
  %v2427 = vsel %vm2426, %v2424, %v2421
  %v2428 = vadd.f32 %v1684, 1.0
  %v2429 = vlog2.pop %v2428
  %v2430 = vmul.f32 %v2429, 0.6931472
  %v2431 = vmul.f32 -0.5, %v1684
  %v2432 = vadd.f32 %v2431, 1.0
  %v2433 = vmul.f32 %v2432, %v1684
  %v2434 = vand.u32 2147483647, %v1684
  %vm2435 = vcmp.lt.f32.partialorder %v2434, 0.0004427343
  %v2436 = vsel %vm2435, %v2433, %v2430
  %v2437 = vadd.f32 %v1686, 1.0
  %v2438 = vlog2.pop %v2437
  %v2439 = vmul.f32 %v2438, 0.6931472
  %v2440 = vmul.f32 -0.5, %v1686
  %v2441 = vadd.f32 %v2440, 1.0
  %v2442 = vmul.f32 %v2441, %v1686
  %v2443 = vand.u32 2147483647, %v1686
  %vm2444 = vcmp.lt.f32.partialorder %v2443, 0.0004427343
  %v2445 = vsel %vm2444, %v2442, %v2439
  %v2446 = vadd.f32 %v1688, 1.0
  %v2447 = vlog2.pop %v2446
  %v2448 = vmul.f32 %v2447, 0.6931472
  %v2449 = vmul.f32 -0.5, %v1688
  %v2450 = vadd.f32 %v2449, 1.0
  %v2451 = vmul.f32 %v2450, %v1688
  %v2452 = vand.u32 2147483647, %v1688
  %vm2453 = vcmp.lt.f32.partialorder %v2452, 0.0004427343
  %v2454 = vsel %vm2453, %v2451, %v2448
  %v2455 = vadd.f32 %v1690, 1.0
  %v2456 = vlog2.pop %v2455
  %v2457 = vmul.f32 %v2456, 0.6931472
  %v2458 = vmul.f32 -0.5, %v1690
  %v2459 = vadd.f32 %v2458, 1.0
  %v2460 = vmul.f32 %v2459, %v1690
  %v2461 = vand.u32 2147483647, %v1690
  %vm2462 = vcmp.lt.f32.partialorder %v2461, 0.0004427343
  %v2463 = vsel %vm2462, %v2460, %v2457
  %v2464 = vadd.f32 %v1692, 1.0
  %v2465 = vlog2.pop %v2464
  %v2466 = vmul.f32 %v2465, 0.6931472
  %v2467 = vmul.f32 -0.5, %v1692
  %v2468 = vadd.f32 %v2467, 1.0
  %v2469 = vmul.f32 %v2468, %v1692
  %v2470 = vand.u32 2147483647, %v1692
  %vm2471 = vcmp.lt.f32.partialorder %v2470, 0.0004427343
  %v2472 = vsel %vm2471, %v2469, %v2466
  %v2473 = vadd.f32 %v1694, 1.0
  %v2474 = vlog2.pop %v2473
  %v2475 = vmul.f32 %v2474, 0.6931472
  %v2476 = vmul.f32 -0.5, %v1694
  %v2477 = vadd.f32 %v2476, 1.0
  %v2478 = vmul.f32 %v2477, %v1694
  %v2479 = vand.u32 2147483647, %v1694
  %vm2480 = vcmp.lt.f32.partialorder %v2479, 0.0004427343
  %v2481 = vsel %vm2480, %v2478, %v2475
  %v2482 = vadd.f32 %v1696, 1.0
  %v2483 = vlog2.pop %v2482
  %v2484 = vmul.f32 %v2483, 0.6931472
  %v2485 = vmul.f32 -0.5, %v1696
  %v2486 = vadd.f32 %v2485, 1.0
  %v2487 = vmul.f32 %v2486, %v1696
  %v2488 = vand.u32 2147483647, %v1696
  %vm2489 = vcmp.lt.f32.partialorder %v2488, 0.0004427343
  %v2490 = vsel %vm2489, %v2487, %v2484
  %v2491 = vadd.f32 %v1698, 1.0
  %v2492 = vlog2.pop %v2491
  %v2493 = vmul.f32 %v2492, 0.6931472
  %v2494 = vmul.f32 -0.5, %v1698
  %v2495 = vadd.f32 %v2494, 1.0
  %v2496 = vmul.f32 %v2495, %v1698
  %v2497 = vand.u32 2147483647, %v1698
  %vm2498 = vcmp.lt.f32.partialorder %v2497, 0.0004427343
  %v2499 = vsel %vm2498, %v2496, %v2493
  %v2500 = vadd.f32 %v1700, 1.0
  %v2501 = vlog2.pop %v2500
  %v2502 = vmul.f32 %v2501, 0.6931472
  %v2503 = vmul.f32 -0.5, %v1700
  %v2504 = vadd.f32 %v2503, 1.0
  %v2505 = vmul.f32 %v2504, %v1700
  %v2506 = vand.u32 2147483647, %v1700
  %vm2507 = vcmp.lt.f32.partialorder %v2506, 0.0004427343
  %v2508 = vsel %vm2507, %v2505, %v2502
  %v2509 = vadd.f32 %v1702, 1.0
  %v2510 = vlog2.pop %v2509
  %v2511 = vmul.f32 %v2510, 0.6931472
  %v2512 = vmul.f32 -0.5, %v1702
  %v2513 = vadd.f32 %v2512, 1.0
  %v2514 = vmul.f32 %v2513, %v1702
  %v2515 = vand.u32 2147483647, %v1702
  %vm2516 = vcmp.lt.f32.partialorder %v2515, 0.0004427343
  %v2517 = vsel %vm2516, %v2514, %v2511
  %v2518 = vadd.f32 %v1704, 1.0
  %v2519 = vlog2.pop %v2518
  %v2520 = vmul.f32 %v2519, 0.6931472
  %v2521 = vmul.f32 -0.5, %v1704
  %v2522 = vadd.f32 %v2521, 1.0
  %v2523 = vmul.f32 %v2522, %v1704
  %v2524 = vand.u32 2147483647, %v1704
  %vm2525 = vcmp.lt.f32.partialorder %v2524, 0.0004427343
  %v2526 = vsel %vm2525, %v2523, %v2520
  %v2527 = vadd.f32 %v1706, 1.0
  %v2528 = vlog2.pop %v2527
  %v2529 = vmul.f32 %v2528, 0.6931472
  %v2530 = vmul.f32 -0.5, %v1706
  %v2531 = vadd.f32 %v2530, 1.0
  %v2532 = vmul.f32 %v2531, %v1706
  %v2533 = vand.u32 2147483647, %v1706
  %vm2534 = vcmp.lt.f32.partialorder %v2533, 0.0004427343
  %v2535 = vsel %vm2534, %v2532, %v2529
  %v2536 = vadd.f32 %v1708, 1.0
  %v2537 = vlog2.pop %v2536
  %v2538 = vmul.f32 %v2537, 0.6931472
  %v2539 = vmul.f32 -0.5, %v1708
  %v2540 = vadd.f32 %v2539, 1.0
  %v2541 = vmul.f32 %v2540, %v1708
  %v2542 = vand.u32 2147483647, %v1708
  %vm2543 = vcmp.lt.f32.partialorder %v2542, 0.0004427343
  %v2544 = vsel %vm2543, %v2541, %v2538
  %v2545 = vadd.f32 %v1710, 1.0
  %v2546 = vlog2.pop %v2545
  %v2547 = vmul.f32 %v2546, 0.6931472
  %v2548 = vmul.f32 -0.5, %v1710
  %v2549 = vadd.f32 %v2548, 1.0
  %v2550 = vmul.f32 %v2549, %v1710
  %v2551 = vand.u32 2147483647, %v1710
  %vm2552 = vcmp.lt.f32.partialorder %v2551, 0.0004427343
  %v2553 = vsel %vm2552, %v2550, %v2547
  %v2554 = vadd.f32 %v1712, 1.0
  %v2555 = vlog2.pop %v2554
  %v2556 = vmul.f32 %v2555, 0.6931472
  %v2557 = vmul.f32 -0.5, %v1712
  %v2558 = vadd.f32 %v2557, 1.0
  %v2559 = vmul.f32 %v2558, %v1712
  %v2560 = vand.u32 2147483647, %v1712
  %vm2561 = vcmp.lt.f32.partialorder %v2560, 0.0004427343
  %v2562 = vsel %vm2561, %v2559, %v2556
  %v2563 = vadd.f32 %v1714, 1.0
  %v2564 = vlog2.pop %v2563
  %v2565 = vmul.f32 %v2564, 0.6931472
  %v2566 = vmul.f32 -0.5, %v1714
  %v2567 = vadd.f32 %v2566, 1.0
  %v2568 = vmul.f32 %v2567, %v1714
  %v2569 = vand.u32 2147483647, %v1714
  %vm2570 = vcmp.lt.f32.partialorder %v2569, 0.0004427343
  %v2571 = vsel %vm2570, %v2568, %v2565
  %v2572 = vadd.f32 %v1716, 1.0
  %v2573 = vlog2.pop %v2572
  %v2574 = vmul.f32 %v2573, 0.6931472
  %v2575 = vmul.f32 -0.5, %v1716
  %v2576 = vadd.f32 %v2575, 1.0
  %v2577 = vmul.f32 %v2576, %v1716
  %v2578 = vand.u32 2147483647, %v1716
  %vm2579 = vcmp.lt.f32.partialorder %v2578, 0.0004427343
  %v2580 = vsel %vm2579, %v2577, %v2574
  %v2581 = vsel %vm1333, %v859, %v1725
  %v2582 = vsel %vm1334, %v900, %v1734
  %v2583 = vsel %vm1335, %v941, %v1743
  %v2584 = vsel %vm1336, %v982, %v1752
  %v2585 = vsel %vm1337, %v1023, %v1761
  %v2586 = vsel %vm1338, %v1064, %v1770
  %v2587 = vsel %vm1339, %v1105, %v1779
  %v2588 = vsel %vm1340, %v1146, %v1788
  %v2589 = vsel %vm1341, %v1187, %v1797
  %v2590 = vsel %vm1342, %v1228, %v1806
  %v2591 = vsel %vm1343, %v1269, %v1815
  %v2592 = vsel %vm1344, %v1310, %v1824
  %v2593 = vsel %vm1345, %v862, %v1833
  %v2594 = vsel %vm1346, %v903, %v1842
  %v2595 = vsel %vm1347, %v944, %v1851
  %v2596 = vsel %vm1348, %v985, %v1860
  %v2597 = vsel %vm1349, %v1026, %v1869
  %v2598 = vsel %vm1350, %v1067, %v1878
  %v2599 = vsel %vm1351, %v1108, %v1887
  %v2600 = vsel %vm1352, %v1149, %v1896
  %v2601 = vsel %vm1353, %v1190, %v1905
  %v2602 = vsel %vm1354, %v1231, %v1914
  %v2603 = vsel %vm1355, %v1272, %v1923
  %v2604 = vsel %vm1356, %v1313, %v1932
  %v2605 = vsel %vm1357, %v865, %v1941
  %v2606 = vsel %vm1358, %v906, %v1950
  %v2607 = vsel %vm1359, %v947, %v1959
  %v2608 = vsel %vm1360, %v988, %v1968
  %v2609 = vsel %vm1361, %v1029, %v1977
  %v2610 = vsel %vm1362, %v1070, %v1986
  %v2611 = vsel %vm1363, %v1111, %v1995
  %v2612 = vsel %vm1364, %v1152, %v2004
  %v2613 = vsel %vm1365, %v1193, %v2013
  %v2614 = vsel %vm1366, %v1234, %v2022
  %v2615 = vsel %vm1367, %v1275, %v2031
  %v2616 = vsel %vm1368, %v1316, %v2040
  %v2617 = vsel %vm1369, %v868, %v2049
  %v2618 = vsel %vm1370, %v909, %v2058
  %v2619 = vsel %vm1371, %v950, %v2067
  %v2620 = vsel %vm1372, %v991, %v2076
  %v2621 = vsel %vm1373, %v1032, %v2085
  %v2622 = vsel %vm1374, %v1073, %v2094
  %v2623 = vsel %vm1375, %v1114, %v2103
  %v2624 = vsel %vm1376, %v1155, %v2112
  %v2625 = vsel %vm1377, %v1196, %v2121
  %v2626 = vsel %vm1378, %v1237, %v2130
  %v2627 = vsel %vm1379, %v1278, %v2139
  %v2628 = vsel %vm1380, %v1319, %v2148
  %v2629 = vsel %vm1381, %v871, %v2157
  %v2630 = vsel %vm1382, %v912, %v2166
  %v2631 = vsel %vm1383, %v953, %v2175
  %v2632 = vsel %vm1384, %v994, %v2184
  %v2633 = vsel %vm1385, %v1035, %v2193
  %v2634 = vsel %vm1386, %v1076, %v2202
  %v2635 = vsel %vm1387, %v1117, %v2211
  %v2636 = vsel %vm1388, %v1158, %v2220
  %v2637 = vsel %vm1389, %v1199, %v2229
  %v2638 = vsel %vm1390, %v1240, %v2238
  %v2639 = vsel %vm1391, %v1281, %v2247
  %v2640 = vsel %vm1392, %v1322, %v2256
  %v2641 = vsel %vm1393, %v874, %v2265
  %v2642 = vsel %vm1394, %v915, %v2274
  %v2643 = vsel %vm1395, %v956, %v2283
  %v2644 = vsel %vm1396, %v997, %v2292
  %v2645 = vsel %vm1397, %v1038, %v2301
  %v2646 = vsel %vm1398, %v1079, %v2310
  %v2647 = vsel %vm1399, %v1120, %v2319
  %v2648 = vsel %vm1400, %v1161, %v2328
  %v2649 = vsel %vm1401, %v1202, %v2337
  %v2650 = vsel %vm1402, %v1243, %v2346
  %v2651 = vsel %vm1403, %v1284, %v2355
  %v2652 = vsel %vm1404, %v1325, %v2364
  %v2653 = vsel %vm1405, %v877, %v2373
  %v2654 = vsel %vm1406, %v918, %v2382
  %v2655 = vsel %vm1407, %v959, %v2391
  %v2656 = vsel %vm1408, %v1000, %v2400
  %v2657 = vsel %vm1409, %v1041, %v2409
  %v2658 = vsel %vm1410, %v1082, %v2418
  %v2659 = vsel %vm1411, %v1123, %v2427
  %v2660 = vsel %vm1412, %v1164, %v2436
  %v2661 = vsel %vm1413, %v1205, %v2445
  %v2662 = vsel %vm1414, %v1246, %v2454
  %v2663 = vsel %vm1415, %v1287, %v2463
  %v2664 = vsel %vm1416, %v1328, %v2472
  %v2665 = vsel %vm1417, %v880, %v2481
  %v2666 = vsel %vm1418, %v921, %v2490
  %v2667 = vsel %vm1419, %v962, %v2499
  %v2668 = vsel %vm1420, %v1003, %v2508
  %v2669 = vsel %vm1421, %v1044, %v2517
  %v2670 = vsel %vm1422, %v1085, %v2526
  %v2671 = vsel %vm1423, %v1126, %v2535
  %v2672 = vsel %vm1424, %v1167, %v2544
  %v2673 = vsel %vm1425, %v1208, %v2553
  %v2674 = vsel %vm1426, %v1249, %v2562
  %v2675 = vsel %vm1427, %v1290, %v2571
  %v2676 = vsel %vm1428, %v1331, %v2580
  %v2677 = vld [vmem:[%s4] sm:$0xf]
  %v2678 = vld [vmem:[%s5] sm:$0xf]
  %2680 = vset.pattern.permute.xlu0 0
  %2681 = vperm.xlu0 %2680, %v2678
  %v2682 = vpop.permute.xlu0 %2681
  %vm2684 = vcmask 523264
  %v2686 = vsel %vm2684, %v2677, 0
  %2688 = vmatpush.msra.mxu0 0.0
  %2689 = vmatpush.msra.mxu0 0.0
  %2690 = vmatpush.msra.mxu0 0.0
  %2691 = vmatpush.msra.mxu0 0.0
  %2692 = vmatpush.msra.mxu0 0.0
  %2693 = vmatpush.msra.mxu0 0.0
  %2694 = vmatpush.msra.mxu0 0.0
  %2695 = vmatpush.msra.mxu0 0.0
  %2696 = vmatpush.msra.mxu0 %v2665
  %2697 = vmatpush.msra.mxu0 %v2653
  %2698 = vmatpush.msra.mxu0 %v2641
  %2699 = vmatpush.msra.mxu0 %v2629
  %2700 = vmatpush.msra.mxu0 %v2617
  %2701 = vmatpush.msra.mxu0 %v2605
  %2702 = vmatpush.msra.mxu0 %v2593
  %2703 = vmatpush.msra.mxu0 %v2581
  %2704 = vmatmul.f32.gmra.mxu0 %v2686
  %v2705 = vpop.f32.mrf.mxu0
  %v2706 = vadd.f32 %v2682, %v2705
  %2707 = vdwg.mxu0
  %2708 = vmatpush.msra.mxu0 0.0
  %2709 = vmatpush.msra.mxu0 0.0
  %2710 = vmatpush.msra.mxu0 0.0
  %2711 = vmatpush.msra.mxu0 0.0
  %2712 = vmatpush.msra.mxu0 0.0
  %2713 = vmatpush.msra.mxu0 0.0
  %2714 = vmatpush.msra.mxu0 0.0
  %2715 = vmatpush.msra.mxu0 0.0
  %2716 = vmatpush.msra.mxu0 %v2666
  %2717 = vmatpush.msra.mxu0 %v2654
  %2718 = vmatpush.msra.mxu0 %v2642
  %2719 = vmatpush.msra.mxu0 %v2630
  %2720 = vmatpush.msra.mxu0 %v2618
  %2721 = vmatpush.msra.mxu0 %v2606
  %2722 = vmatpush.msra.mxu0 %v2594
  %2723 = vmatpush.msra.mxu0 %v2582
  %2724 = vmatmul.f32.gmra.mxu0 %v2686
  %v2725 = vpop.f32.mrf.mxu0
  %v2726 = vadd.f32 %v2682, %v2725
  %2727 = vdwg.mxu0
  %2728 = vmatpush.msra.mxu0 0.0
  %2729 = vmatpush.msra.mxu0 0.0
  %2730 = vmatpush.msra.mxu0 0.0
  %2731 = vmatpush.msra.mxu0 0.0
  %2732 = vmatpush.msra.mxu0 0.0
  %2733 = vmatpush.msra.mxu0 0.0
  %2734 = vmatpush.msra.mxu0 0.0
  %2735 = vmatpush.msra.mxu0 0.0
  %2736 = vmatpush.msra.mxu0 %v2667
  %2737 = vmatpush.msra.mxu0 %v2655
  %2738 = vmatpush.msra.mxu0 %v2643
  %2739 = vmatpush.msra.mxu0 %v2631
  %2740 = vmatpush.msra.mxu0 %v2619
  %2741 = vmatpush.msra.mxu0 %v2607
  %2742 = vmatpush.msra.mxu0 %v2595
  %2743 = vmatpush.msra.mxu0 %v2583
  %2744 = vmatmul.f32.gmra.mxu0 %v2686
  %v2745 = vpop.f32.mrf.mxu0
  %v2746 = vadd.f32 %v2682, %v2745
  %2747 = vdwg.mxu0
  %2748 = vmatpush.msra.mxu0 0.0
  %2749 = vmatpush.msra.mxu0 0.0
  %2750 = vmatpush.msra.mxu0 0.0
  %2751 = vmatpush.msra.mxu0 0.0
  %2752 = vmatpush.msra.mxu0 0.0
  %2753 = vmatpush.msra.mxu0 0.0
  %2754 = vmatpush.msra.mxu0 0.0
  %2755 = vmatpush.msra.mxu0 0.0
  %2756 = vmatpush.msra.mxu0 %v2668
  %2757 = vmatpush.msra.mxu0 %v2656
  %2758 = vmatpush.msra.mxu0 %v2644
  %2759 = vmatpush.msra.mxu0 %v2632
  %2760 = vmatpush.msra.mxu0 %v2620
  %2761 = vmatpush.msra.mxu0 %v2608
  %2762 = vmatpush.msra.mxu0 %v2596
  %2763 = vmatpush.msra.mxu0 %v2584
  %2764 = vmatmul.f32.gmra.mxu0 %v2686
  %v2765 = vpop.f32.mrf.mxu0
  %v2766 = vadd.f32 %v2682, %v2765
  %2767 = vdwg.mxu0
  %2768 = vmatpush.msra.mxu0 0.0
  %2769 = vmatpush.msra.mxu0 0.0
  %2770 = vmatpush.msra.mxu0 0.0
  %2771 = vmatpush.msra.mxu0 0.0
  %2772 = vmatpush.msra.mxu0 0.0
  %2773 = vmatpush.msra.mxu0 0.0
  %2774 = vmatpush.msra.mxu0 0.0
  %2775 = vmatpush.msra.mxu0 0.0
  %2776 = vmatpush.msra.mxu0 %v2669
  %2777 = vmatpush.msra.mxu0 %v2657
  %2778 = vmatpush.msra.mxu0 %v2645
  %2779 = vmatpush.msra.mxu0 %v2633
  %2780 = vmatpush.msra.mxu0 %v2621
  %2781 = vmatpush.msra.mxu0 %v2609
  %2782 = vmatpush.msra.mxu0 %v2597
  %2783 = vmatpush.msra.mxu0 %v2585
  %2784 = vmatmul.f32.gmra.mxu0 %v2686
  %v2785 = vpop.f32.mrf.mxu0
  %v2786 = vadd.f32 %v2682, %v2785
  %2787 = vdwg.mxu0
  %2788 = vmatpush.msra.mxu0 0.0
  %2789 = vmatpush.msra.mxu0 0.0
  %2790 = vmatpush.msra.mxu0 0.0
  %2791 = vmatpush.msra.mxu0 0.0
  %2792 = vmatpush.msra.mxu0 0.0
  %2793 = vmatpush.msra.mxu0 0.0
  %2794 = vmatpush.msra.mxu0 0.0
  %2795 = vmatpush.msra.mxu0 0.0
  %2796 = vmatpush.msra.mxu0 %v2670
  %2797 = vmatpush.msra.mxu0 %v2658
  %2798 = vmatpush.msra.mxu0 %v2646
  %2799 = vmatpush.msra.mxu0 %v2634
  %2800 = vmatpush.msra.mxu0 %v2622
  %2801 = vmatpush.msra.mxu0 %v2610
  %2802 = vmatpush.msra.mxu0 %v2598
  %2803 = vmatpush.msra.mxu0 %v2586
  %2804 = vmatmul.f32.gmra.mxu0 %v2686
  %v2805 = vpop.f32.mrf.mxu0
  %v2806 = vadd.f32 %v2682, %v2805
  %2807 = vdwg.mxu0
  %2808 = vmatpush.msra.mxu0 0.0
  %2809 = vmatpush.msra.mxu0 0.0
  %2810 = vmatpush.msra.mxu0 0.0
  %2811 = vmatpush.msra.mxu0 0.0
  %2812 = vmatpush.msra.mxu0 0.0
  %2813 = vmatpush.msra.mxu0 0.0
  %2814 = vmatpush.msra.mxu0 0.0
  %2815 = vmatpush.msra.mxu0 0.0
  %2816 = vmatpush.msra.mxu0 %v2671
  %2817 = vmatpush.msra.mxu0 %v2659
  %2818 = vmatpush.msra.mxu0 %v2647
  %2819 = vmatpush.msra.mxu0 %v2635
  %2820 = vmatpush.msra.mxu0 %v2623
  %2821 = vmatpush.msra.mxu0 %v2611
  %2822 = vmatpush.msra.mxu0 %v2599
  %2823 = vmatpush.msra.mxu0 %v2587
  %2824 = vmatmul.f32.gmra.mxu0 %v2686
  %v2825 = vpop.f32.mrf.mxu0
  %v2826 = vadd.f32 %v2682, %v2825
  %2827 = vdwg.mxu0
  %2828 = vmatpush.msra.mxu0 0.0
  %2829 = vmatpush.msra.mxu0 0.0
  %2830 = vmatpush.msra.mxu0 0.0
  %2831 = vmatpush.msra.mxu0 0.0
  %2832 = vmatpush.msra.mxu0 0.0
  %2833 = vmatpush.msra.mxu0 0.0
  %2834 = vmatpush.msra.mxu0 0.0
  %2835 = vmatpush.msra.mxu0 0.0
  %2836 = vmatpush.msra.mxu0 %v2672
  %2837 = vmatpush.msra.mxu0 %v2660
  %2838 = vmatpush.msra.mxu0 %v2648
  %2839 = vmatpush.msra.mxu0 %v2636
  %2840 = vmatpush.msra.mxu0 %v2624
  %2841 = vmatpush.msra.mxu0 %v2612
  %2842 = vmatpush.msra.mxu0 %v2600
  %2843 = vmatpush.msra.mxu0 %v2588
  %2844 = vmatmul.f32.gmra.mxu0 %v2686
  %v2845 = vpop.f32.mrf.mxu0
  %v2846 = vadd.f32 %v2682, %v2845
  %2847 = vdwg.mxu0
  %2848 = vmatpush.msra.mxu0 0.0
  %2849 = vmatpush.msra.mxu0 0.0
  %2850 = vmatpush.msra.mxu0 0.0
  %2851 = vmatpush.msra.mxu0 0.0
  %2852 = vmatpush.msra.mxu0 0.0
  %2853 = vmatpush.msra.mxu0 0.0
  %2854 = vmatpush.msra.mxu0 0.0
  %2855 = vmatpush.msra.mxu0 0.0
  %2856 = vmatpush.msra.mxu0 %v2673
  %2857 = vmatpush.msra.mxu0 %v2661
  %2858 = vmatpush.msra.mxu0 %v2649
  %2859 = vmatpush.msra.mxu0 %v2637
  %2860 = vmatpush.msra.mxu0 %v2625
  %2861 = vmatpush.msra.mxu0 %v2613
  %2862 = vmatpush.msra.mxu0 %v2601
  %2863 = vmatpush.msra.mxu0 %v2589
  %2864 = vmatmul.f32.gmra.mxu0 %v2686
  %v2865 = vpop.f32.mrf.mxu0
  %v2866 = vadd.f32 %v2682, %v2865
  %2867 = vdwg.mxu0
  %2868 = vmatpush.msra.mxu0 0.0
  %2869 = vmatpush.msra.mxu0 0.0
  %2870 = vmatpush.msra.mxu0 0.0
  %2871 = vmatpush.msra.mxu0 0.0
  %2872 = vmatpush.msra.mxu0 0.0
  %2873 = vmatpush.msra.mxu0 0.0
  %2874 = vmatpush.msra.mxu0 0.0
  %2875 = vmatpush.msra.mxu0 0.0
  %2876 = vmatpush.msra.mxu0 %v2674
  %2877 = vmatpush.msra.mxu0 %v2662
  %2878 = vmatpush.msra.mxu0 %v2650
  %2879 = vmatpush.msra.mxu0 %v2638
  %2880 = vmatpush.msra.mxu0 %v2626
  %2881 = vmatpush.msra.mxu0 %v2614
  %2882 = vmatpush.msra.mxu0 %v2602
  %2883 = vmatpush.msra.mxu0 %v2590
  %2884 = vmatmul.f32.gmra.mxu0 %v2686
  %v2885 = vpop.f32.mrf.mxu0
  %v2886 = vadd.f32 %v2682, %v2885
  %2887 = vdwg.mxu0
  %2888 = vmatpush.msra.mxu0 0.0
  %2889 = vmatpush.msra.mxu0 0.0
  %2890 = vmatpush.msra.mxu0 0.0
  %2891 = vmatpush.msra.mxu0 0.0
  %2892 = vmatpush.msra.mxu0 0.0
  %2893 = vmatpush.msra.mxu0 0.0
  %2894 = vmatpush.msra.mxu0 0.0
  %2895 = vmatpush.msra.mxu0 0.0
  %2896 = vmatpush.msra.mxu0 %v2675
  %2897 = vmatpush.msra.mxu0 %v2663
  %2898 = vmatpush.msra.mxu0 %v2651
  %2899 = vmatpush.msra.mxu0 %v2639
  %2900 = vmatpush.msra.mxu0 %v2627
  %2901 = vmatpush.msra.mxu0 %v2615
  %2902 = vmatpush.msra.mxu0 %v2603
  %2903 = vmatpush.msra.mxu0 %v2591
  %2904 = vmatmul.f32.gmra.mxu0 %v2686
  %v2905 = vpop.f32.mrf.mxu0
  %v2906 = vadd.f32 %v2682, %v2905
  %2907 = vdwg.mxu0
  %2908 = vmatpush.msra.mxu0 0.0
  %2909 = vmatpush.msra.mxu0 0.0
  %2910 = vmatpush.msra.mxu0 0.0
  %2911 = vmatpush.msra.mxu0 0.0
  %2912 = vmatpush.msra.mxu0 0.0
  %2913 = vmatpush.msra.mxu0 0.0
  %2914 = vmatpush.msra.mxu0 0.0
  %2915 = vmatpush.msra.mxu0 0.0
  %2916 = vmatpush.msra.mxu0 %v2676
  %2917 = vmatpush.msra.mxu0 %v2664
  %2918 = vmatpush.msra.mxu0 %v2652
  %2919 = vmatpush.msra.mxu0 %v2640
  %2920 = vmatpush.msra.mxu0 %v2628
  %2921 = vmatpush.msra.mxu0 %v2616
  %2922 = vmatpush.msra.mxu0 %v2604
  %2923 = vmatpush.msra.mxu0 %v2592
  %2924 = vmatmul.f32.gmra.mxu0 %v2686
  %v2925 = vpop.f32.mrf.mxu0
  %v2926 = vadd.f32 %v2682, %v2925
  %2927 = vdwg.mxu0
  %v2928 = vrot.slane %v2746, 4
  %v2929 = vsel %vm88, %v2928, %v2706
  %v2931 = vunpack.c.l.s4 1983009808
  %v2932 = vunpack.c.0.s8 %v2931
  %v2933 = vperm.slane %v2929, %v2932
  %v2934 = vrot.slane %v2766, 4
  %v2935 = vsel %vm88, %v2934, %v2726
  %v2937 = vunpack.c.l.s4 1983009808
  %v2938 = vunpack.c.0.s8 %v2937
  %v2939 = vperm.slane %v2935, %v2938
  %v2940 = vrot.slane %v2826, 4
  %v2941 = vsel %vm88, %v2940, %v2786
  %v2943 = vunpack.c.l.s4 1983009808
  %v2944 = vunpack.c.0.s8 %v2943
  %v2945 = vperm.slane %v2941, %v2944
  %v2946 = vrot.slane %v2846, 4
  %v2947 = vsel %vm88, %v2946, %v2806
  %v2949 = vunpack.c.l.s4 1983009808
  %v2950 = vunpack.c.0.s8 %v2949
  %v2951 = vperm.slane %v2947, %v2950
  %v2952 = vrot.slane %v2939, 4
  %v2953 = vsel %vm88, %v2952, %v2933
  %v2954 = vrot.slane %v2933, 4
  %v2955 = vsel %vm88, %v2939, %v2954
  %v2957 = vunpack.c.l.s4 1934713408
  %v2958 = vunpack.c.0.s8 %v2957
  %v2959 = vperm.slane %v2953, %v2958
  %v2961 = vunpack.c.l.s4 1934713408
  %v2962 = vunpack.c.0.s8 %v2961
  %v2963 = vperm.slane %v2955, %v2962
  %v2964 = vrot.slane %v2951, 4
  %v2965 = vsel %vm88, %v2964, %v2945
  %v2966 = vrot.slane %v2945, 4
  %v2967 = vsel %vm88, %v2951, %v2966
  %v2969 = vunpack.c.l.s4 1934713408
  %v2970 = vunpack.c.0.s8 %v2969
  %v2971 = vperm.slane %v2965, %v2970
  %v2973 = vunpack.c.l.s4 1934713408
  %v2974 = vunpack.c.0.s8 %v2973
  %v2975 = vperm.slane %v2967, %v2974
  %v2976 = vrot.slane %v2971, 4
  %v2977 = vsel %vm88, %v2976, %v2959
  %v2978 = vrot.slane %v2959, 4
  %v2979 = vsel %vm88, %v2971, %v2978
  %v2980 = vrot.slane %v2975, 4
  %v2981 = vsel %vm88, %v2980, %v2963
  %v2982 = vrot.slane %v2963, 4
  %v2983 = vsel %vm88, %v2975, %v2982
  %v2984 = vrot.slane %v2906, 4
  %v2985 = vsel %vm88, %v2984, %v2866
  %v2987 = vunpack.c.l.s4 1983009808
  %v2988 = vunpack.c.0.s8 %v2987
  %v2989 = vperm.slane %v2985, %v2988
  %v2990 = vrot.slane %v2926, 4
  %v2991 = vsel %vm88, %v2990, %v2886
  %v2993 = vunpack.c.l.s4 1983009808
  %v2994 = vunpack.c.0.s8 %v2993
  %v2995 = vperm.slane %v2991, %v2994
  %v2996 = vrot.slane %v2995, 4
  %v2997 = vsel %vm88, %v2996, %v2989
  %v2998 = vrot.slane %v2989, 4
  %v2999 = vsel %vm88, %v2995, %v2998
  %v3001 = vunpack.c.l.s4 1934713408
  %v3002 = vunpack.c.0.s8 %v3001
  %v3003 = vperm.slane %v2997, %v3002
  %v3005 = vunpack.c.l.s4 1934713408
  %v3006 = vunpack.c.0.s8 %v3005
  %v3007 = vperm.slane %v2999, %v3006
  %v3008 = vrot.slane %v3003, 4
  %v3009 = vsel %vm88, 0.0, %v3008
  %v3010 = vrot.slane %v3007, 4
  %v3011 = vsel %vm88, 0.0, %v3010
  %v3012 = vmul.f32 %v2979, 0.5
  %v3013 = vmul.f32 %v3009, 0.5
  %v3014 = vmul.f32 %v2981, 0.5
  %v3015 = vmul.f32 %v3007, 0.5
  %v3016 = vmul.f32 %v2983, 0.5
  %v3017 = vmul.f32 %v3011, 0.5
  %v3018 = vtanh.pop %v3012
  %v3019 = vtanh.pop %v3013
  %v3020 = vtanh.pop %v3014
  %v3021 = vtanh.pop %v3015
  %v3022 = vtanh.pop %v3016
  %v3023 = vtanh.pop %v3017
  %v3024 = vmul.f32 %v3018, 0.5
  %v3025 = vmul.f32 %v3019, 0.5
  %v3026 = vmul.f32 %v3020, 0.5
  %v3027 = vmul.f32 %v3021, 0.5
  %v3028 = vmul.f32 %v3022, 0.5
  %v3029 = vmul.f32 %v3023, 0.5
  %v3030 = vadd.f32 %v3024, 0.5
  %v3031 = vadd.f32 %v3025, 0.5
  %v3032 = vadd.f32 %v3026, 0.5
  %v3033 = vadd.f32 %v3027, 0.5
  %v3034 = vadd.f32 %v3028, 0.5
  %v3035 = vadd.f32 %v3029, 0.5
  %v3036 = vmul.f32 %v3030, 1.002
  %v3037 = vmul.f32 %v3031, 1.002
  %v3038 = vmul.f32 %v3032, 1.002
  %v3039 = vmul.f32 %v3033, 1.002
  %v3040 = vmul.f32 %v3034, 1.002
  %v3041 = vmul.f32 %v3035, 1.002
  %v3042 = vsub.f32 %v3036, 0.001
  %v3043 = vsub.f32 %v3037, 0.001
  %v3044 = vsub.f32 %v3038, 0.001
  %v3045 = vsub.f32 %v3039, 0.001
  %v3046 = vsub.f32 %v3040, 0.001
  %v3047 = vsub.f32 %v3041, 0.001
  %v3048 = vld [vmem:[%s0] sm:$0xff]
  %v3049 = vld [vmem:[%s0 + $0x8] sm:$0xf]
  %vm3052 = vcmask 1040384
  %v3053 = vrot.slane %v3048, 7
  %v3054 = vrot.slane %v3049, 7
  %v3055 = vsel %vm3052, %v3053, %v3054
  %v3058 = vsub.f32 %v3048, %v3053
  %v3059 = vsub.f32 %v3049, %v3055
  %vm3060 = vcmask 1046528
  %v3061 = vrot.slane %v3048, 1
  %v3062 = vrot.slane %v3049, 1
  %v3063 = vsel %vm3060, %v3061, %v3062
  %v3066 = vadd.f32 %v3048, %v3063
  %v3067 = vadd.f32 %v3049, %v3062
  %v3068 = vmul.f32 %v3066, 0.5
  %v3069 = vmul.f32 %v3067, 0.5
  %v3072 = vrot.slane %v2977, 1
  %v3073 = vrot.slane %v3003, 1
  %v3074 = vsel %vm3060, %v3072, %v3073
  %v3077 = vadd.f32 %v2977, %v3074
  %v3078 = vadd.f32 %v3003, %v3073
  %v3079 = vmul.f32 %v3077, 0.5
  %v3080 = vmul.f32 %v3078, 0.5
  %v3087 = vrot.slane %v3042, 1
  %v3088 = vrot.slane %v3043, 1
  %v3089 = vsel %vm3060, %v3087, %v3088
  %v3090 = vrot.slane %v3044, 1
  %v3091 = vrot.slane %v3045, 1
  %v3092 = vsel %vm3060, %v3090, %v3091
  %v3093 = vrot.slane %v3046, 1
  %v3094 = vrot.slane %v3047, 1
  %v3095 = vsel %vm3060, %v3093, %v3094
  %v3102 = vadd.f32 %v3042, %v3089
  %v3103 = vadd.f32 %v3043, %v3088
  %v3104 = vadd.f32 %v3044, %v3092
  %v3105 = vadd.f32 %v3045, %v3091
  %v3106 = vadd.f32 %v3046, %v3095
  %v3107 = vadd.f32 %v3047, %v3094
  %v3108 = vmul.f32 %v3102, 0.5
  %v3109 = vmul.f32 %v3103, 0.5
  %v3110 = vmul.f32 %v3104, 0.5
  %v3111 = vmul.f32 %v3105, 0.5
  %v3112 = vmul.f32 %v3106, 0.5
  %v3113 = vmul.f32 %v3107, 0.5
  %v3114 = vsub.f32 %v3079, 1.0
  %v3115 = vsub.f32 %v3080, 1.0
  %vm3116 = vcmp.gt.f32.partialorder %v3114, 20.0
  %vm3117 = vcmp.gt.f32.partialorder %v3115, 20.0
  %v3118 = vmin.f32 %v3114, 20.0
  %v3119 = vmin.f32 %v3115, 20.0
  %v3120 = vmul.f32 %v3118, 1.442695
  %v3121 = vpow.pop %v3120
  %v3122 = vmul.f32 %v3119, 1.442695
  %v3123 = vpow.pop %v3122
  %v3124 = vadd.f32 %v3121, 1.0
  %v3125 = vlog2.pop %v3124
  %v3126 = vmul.f32 %v3125, 0.6931472
  %v3127 = vmul.f32 -0.5, %v3121
  %v3128 = vadd.f32 %v3127, 1.0
  %v3129 = vmul.f32 %v3128, %v3121
  %v3130 = vand.u32 2147483647, %v3121
  %vm3131 = vcmp.lt.f32.partialorder %v3130, 0.0004427343
  %v3132 = vsel %vm3131, %v3129, %v3126
  %v3133 = vadd.f32 %v3123, 1.0
  %v3134 = vlog2.pop %v3133
  %v3135 = vmul.f32 %v3134, 0.6931472
  %v3136 = vmul.f32 -0.5, %v3123
  %v3137 = vadd.f32 %v3136, 1.0
  %v3138 = vmul.f32 %v3137, %v3123
  %v3139 = vand.u32 2147483647, %v3123
  %vm3140 = vcmp.lt.f32.partialorder %v3139, 0.0004427343
  %v3141 = vsel %vm3140, %v3138, %v3135
  %v3142 = vsel %vm3116, %v3114, %v3132
  %v3143 = vsel %vm3117, %v3115, %v3141
  %v3144 = vsub.f32 0.0, %v3142
  %v3145 = vsub.f32 0.0, %v3143
  %3147 = vset.pattern.permute.xlu0 0
  %3148 = vperm.xlu0 %3147, %v3058
  %v3149 = vpop.permute.xlu0 %3148
  %3151 = vset.pattern.permute.xlu0 0
  %3152 = vperm.xlu0 %3151, %v3059
  %v3153 = vpop.permute.xlu0 %3152
  %v3154 = vrot.slane %v3149, 1
  %v3155 = vrot.slane %v3153, 1
  %v3156 = vsel %vm3060, %v3154, %v3155
  %v3159 = vmul.f32 %v3144, %v3156
  %v3160 = vmul.f32 %v3145, %v3155
  %v3161 = vmul.f32 %v3159, 1.442695
  %v3162 = vpow.pop %v3161
  %v3163 = vmul.f32 %v3160, 1.442695
  %v3164 = vpow.pop %v3163
  %v3165 = vsub.f32 1.0, %v3162
  %v3166 = vsub.f32 1.0, %v3164
  %v3167 = vsub.f32 1.0, %v3165
  %v3168 = vadd.f32 %v3167, 1e-10
  %v3170 = vrot.slane %v3168, 7
  %v3172 = vmul.f32 %v3165, %v3170
  %v3173 = vrot.slane %v3168, 1
  %v3175 = vmul.f32 %v3168, %v3173
  %v3177 = vrot.slane %v3175, 6
  %v3179 = vmul.f32 %v3165, %v3177
  %v3180 = vrot.slane %v3168, 2
  %v3182 = vmul.f32 %v3175, %v3180
  %v3184 = vrot.slane %v3182, 5
  %v3186 = vmul.f32 %v3165, %v3184
  %v3187 = vrot.slane %v3168, 3
  %v3189 = vmul.f32 %v3182, %v3187
  %v3191 = vrot.slane %v3189, 4
  %v3193 = vmul.f32 %v3165, %v3191
  %v3194 = vrot.slane %v3168, 4
  %v3196 = vmul.f32 %v3189, %v3194
  %v3198 = vrot.slane %v3196, 3
  %v3200 = vmul.f32 %v3165, %v3198
  %v3201 = vrot.slane %v3168, 5
  %v3203 = vmul.f32 %v3196, %v3201
  %v3205 = vrot.slane %v3203, 2
  %v3207 = vmul.f32 %v3165, %v3205
  %v3208 = vrot.slane %v3168, 6
  %v3210 = vmul.f32 %v3203, %v3208
  %v3212 = vrot.slane %v3210, 1
  %v3214 = vmul.f32 %v3165, %v3212
  %v3215 = vmul.f32 %v3210, %v3170
  %v3216 = vmul.f32 %v3166, %v3215
  %v3217 = vsub.f32 1.0, %v3166
  %v3218 = vadd.f32 %v3217, 1e-10
  %v3219 = vmul.f32 %v3215, %v3218
  %v3221 = vrot.slane %v3219, 7
  %v3223 = vmul.f32 %v3166, %v3221
  %v3225 = vrot.slane %v3218, 1
  %v3227 = vmul.f32 %v3219, %v3225
  %v3229 = vrot.slane %v3227, 6
  %v3231 = vmul.f32 %v3166, %v3229
  %v3232 = vrot.slane %v3218, 2
  %v3234 = vmul.f32 %v3227, %v3232
  %v3235 = vsel %vm3052, %v3165, %v3172
  %vm3236 = vcmask 1041408
  %v3237 = vsel %vm3236, %v3235, %v3179
  %vm3238 = vcmask 1042432
  %v3239 = vsel %vm3238, %v3237, %v3186
  %vm3240 = vcmask 1043456
  %v3241 = vsel %vm3240, %v3239, %v3193
  %vm3242 = vcmask 1044480
  %v3243 = vsel %vm3242, %v3241, %v3200
  %vm3244 = vcmask 1045504
  %v3245 = vsel %vm3244, %v3243, %v3207
  %v3246 = vsel %vm3060, %v3245, %v3214
  %v3247 = vsel %vm3052, %v3216, %v3223
  %v3248 = vsel %vm3236, %v3247, %v3231
  %v3249 = vmul.f32 %v3108, %v3246
  %v3250 = vmul.f32 %v3109, %v3248
  %v3251 = vmul.f32 %v3110, %v3246
  %v3252 = vmul.f32 %v3111, %v3248
  %v3253 = vmul.f32 %v3112, %v3246
  %v3254 = vmul.f32 %v3113, %v3248
  %v3255 = vsel %vm3238, %v3250, 0.0
  %v3256 = vadd.f32 %v3249, %v3255
  %v3257 = vrot.slane %v3256, 4
  %v3258 = vadd.f32 %v3256, %v3257
  %v3259 = vrot.slane %v3258, 2
  %v3260 = vadd.f32 %v3258, %v3259
  %v3261 = vrot.slane %v3260, 1
  %v3262 = vadd.f32 %v3260, %v3261
  %v3263 = vsel %vm3238, %v3252, 0.0
  %v3264 = vadd.f32 %v3251, %v3263
  %v3265 = vrot.slane %v3264, 4
  %v3266 = vadd.f32 %v3264, %v3265
  %v3267 = vrot.slane %v3266, 2
  %v3268 = vadd.f32 %v3266, %v3267
  %v3269 = vrot.slane %v3268, 1
  %v3270 = vadd.f32 %v3268, %v3269
  %v3271 = vsel %vm3238, %v3254, 0.0
  %v3272 = vadd.f32 %v3253, %v3271
  %v3273 = vrot.slane %v3272, 4
  %v3274 = vadd.f32 %v3272, %v3273
  %v3275 = vrot.slane %v3274, 2
  %v3276 = vadd.f32 %v3274, %v3275
  %v3277 = vrot.slane %v3276, 1
  %v3278 = vadd.f32 %v3276, %v3277
  %3280 = vset.pattern.permute.xlu0 0
  %3281 = vperm.xlu0 %3280, %v3068
  %v3282 = vpop.permute.xlu0 %3281
  %3285 = vset.pattern.permute.xlu0 0
  %3286 = vperm.xlu0 %3285, %v3069
  %v3287 = vpop.permute.xlu0 %3286
  %v3289 = vmul.f32 %v3246, %v3282
  %v3290 = vmul.f32 %v3248, %v3287
  %v3291 = vsel %vm3238, %v3290, 0.0
  %v3292 = vadd.f32 %v3289, %v3291
  %v3293 = vrot.slane %v3292, 4
  %v3294 = vadd.f32 %v3292, %v3293
  %v3295 = vrot.slane %v3294, 2
  %v3296 = vadd.f32 %v3294, %v3295
  %v3297 = vrot.slane %v3296, 1
  %v3298 = vadd.f32 %v3296, %v3297
  %vm3302 = vcmask 1041409
  %v3303 = vsel %vm3302, %v3270, %v3262
  %vm3304 = vcmask 1042434
  %v3305 = vsel %vm3304, %v3278, %v3303
  %v3308 = vrot.slane %v3234, 4
  %v3312 = vrot.slane %v3246, 3
  %v3313 = vrot.slane %v3248, 3
  %v3314 = vsel %vm3242, %v3312, %v3313
  %v3317 = vsel %vm3238, %v3305, %v3298
  %v3318 = vsel %vm3240, %v3317, %v3308
  %v3319 = vsel %vm3242, %v3318, %v3312
  %3320 = vst [vmem:[%s6] sm:$0xff] %v3319
  %3321 = vst [vmem:[%s6 + $0x8] sm:$0xff] %v3314
  // Predicated region
  $region26: #{forward.5} parent=0 // pred_check
    _
  $region27: #{forward.5} parent=0 // pred_check_branch
    %3323 = sbr.rel (0) target = $region29
  $region28: #{forward.5} parent=0 // pred_region
    _
  $region29: #{forward.5} parent=0 // pred_fallthru
    _
  // Predicated region
  $region30: #{forward.5} parent=0 // pred_check
    _
  $region31: #{forward.5} parent=0 // pred_check_branch
    %3325 = sbr.rel (0) target = $region33
  $region32: #{forward.5} parent=0 // pred_region
    _
  $region33: #{forward.5} parent=0 // pred_fallthru
    _

</llo_original>
